<compile_context>
chip_gen: v7x
topology: tpu7x:2x2x1
jax: 0.10.0
libtpu: 0.0.40
codegen_flags: <defaults>
</compile_context>

<pallas_src>
import functools

import jax
import jax.numpy as jnp
from jax.experimental import pallas as pl
from jax.experimental.pallas import tpu as pltpu

_LANES = 128


def _round_up(x: int, m: int) -> int:
    return (x + m - 1) // m * m


# ----------------------------------------------------------------------------
# Fused kernel: packed Linear+ReLU ("image") and packed LayerNorm ("points")
# in one grid step.  All refs are 2-D VMEM tiles.
# ----------------------------------------------------------------------------
def _fused_kernel(x_img_ref, w_ref, b_ref,
                  x_pts_ref, seg_ref, segt_ref, g_ref, beta_ref,
                  o_img_ref, o_pts_ref, *, eps, inv_d):
    f32 = jnp.float32
    hi = jax.lax.Precision.HIGHEST

    # ---- "image": packed tokens x block-diagonal W (MXU) + bias + ReLU ------
    # x_img_ref: [tile_img, 128] holds (128 // D_in) tokens per 128-lane row;
    # w_ref is block-diagonal (128, P*D_out), so one matmul yields a fully
    # lane-dense output row per packed input row (no zero-padded head lanes,
    # no masked stores, no post-kernel slice).
    y = jax.lax.dot(x_img_ref[...].astype(f32), w_ref[...],
                    precision=hi, preferred_element_type=f32)
    o_img_ref[...] = jnp.maximum(y + b_ref[...], 0.0).astype(o_img_ref.dtype)

    # ---- "points": token-packed LayerNorm, two-pass moments on the MXU ------
    # seg is a 0/1 [128, P] matrix: x @ seg gives per-token lane sums on the
    # MXU (no XLU cross-lane reductions); seg^T broadcasts per-token stats
    # back to lanes exactly (0/1 selection at HIGHEST precision).
    x = x_pts_ref[...].astype(f32)
    seg = seg_ref[...]
    segt = segt_ref[...]
    mean = jax.lax.dot(x, seg, precision=hi, preferred_element_type=f32) * inv_d
    mean_b = jax.lax.dot(mean, segt, precision=hi, preferred_element_type=f32)
    xc = x - mean_b
    var = jax.lax.dot(xc * xc, seg, precision=hi,
                      preferred_element_type=f32) * inv_d
    inv = jax.lax.rsqrt(var + eps)                               # EUP
    inv_b = jax.lax.dot(inv, segt, precision=hi, preferred_element_type=f32)
    # hoisted scale: (inv * gamma) combined into one multiply
    o_pts_ref[...] = (xc * (inv_b * g_ref[...])
                      + beta_ref[...]).astype(o_pts_ref.dtype)


# ----------------------------------------------------------------------------
# Wrapper: layout plumbing in plain JAX, ONE pallas_call for both pipelines.
# ----------------------------------------------------------------------------
@functools.partial(jax.jit, static_argnames=("eps", "tile_rows"))
def fused_parallel_pipelines(x_img, w, b, x_pts, gamma, beta,
                             *, eps=1e-5, tile_rows=1024):
    B_i, S_i, D_in = x_img.shape
    D_out = w.shape[1]
    B_p, S_p, D_pts = x_pts.shape
    assert _LANES % D_in == 0, "image feature dim must divide 128"
    assert _LANES % D_pts == 0, "points feature dim must divide 128"
    p_img = _LANES // D_in
    p_pts = _LANES // D_pts
    f32 = jnp.float32

    # ----- "image": pack p_img tokens per 128-lane row; block-diagonal W -----
    tok_img = B_i * S_i
    tok_img_pad = _round_up(tok_img, p_img)
    x_img2 = x_img.reshape(tok_img, D_in)
    if tok_img_pad != tok_img:                       # <= p_img-1 token rows
        x_img2 = jnp.pad(x_img2, ((0, tok_img_pad - tok_img), (0, 0)))
    rows_img = tok_img_pad // p_img
    x_img_packed = x_img2.reshape(rows_img, _LANES)

    n_img = p_img * D_out                            # lane-dense output width
    w_bd = jnp.kron(jnp.eye(p_img, dtype=f32), w.astype(f32))    # (128, n_img)
    b_bd = jnp.tile(b.astype(f32), p_img).reshape(1, n_img)

    # ----- "points": pack p_pts tokens per 128-lane row; seg matrices --------
    tok_pts = B_p * S_p
    tok_pts_pad = _round_up(tok_pts, p_pts)
    x_pts2 = x_pts.reshape(tok_pts, D_pts)
    if tok_pts_pad != tok_pts:
        x_pts2 = jnp.pad(x_pts2, ((0, tok_pts_pad - tok_pts), (0, 0)))
    rows_pts = tok_pts_pad // p_pts
    x_pts_packed = x_pts2.reshape(rows_pts, _LANES)

    g_pack = jnp.tile(gamma.astype(f32), p_pts).reshape(1, _LANES)
    beta_pack = jnp.tile(beta.astype(f32), p_pts).reshape(1, _LANES)
    seg_id = jnp.arange(_LANES) // D_pts
    seg = (seg_id[:, None] == jnp.arange(p_pts)[None, :]).astype(f32)
    seg_t = jnp.transpose(seg)                       # (p_pts, 128)

    # ----- shared grid, decoupled per-pipeline tiles --------------------------
    max_rows = max(rows_img, rows_pts)
    n_tiles = max(pl.cdiv(max_rows, int(tile_rows)), 1)
    if n_tiles < 4 and max_rows >= 4 * 8:
        n_tiles = 4          # >= 4 steps: double-buffering x 2 TC on v7x

    def _tile(rows):
        if rows < 8:
            return rows       # full-extent block (legal: equals array dim)
        return _round_up(pl.cdiv(rows, n_tiles), 8)

    tile_img = _tile(rows_img)
    tile_pts = _tile(rows_pts)

    def _row_map(rows, tile):
        # If this pipeline needs fewer blocks than the grid has steps (strong
        # row imbalance), clamp to its last block: extra steps revisit a
        # resident block (no extra DMA) instead of going out of bounds.
        n_valid = pl.cdiv(rows, tile)
        if n_valid >= n_tiles:
            return lambda i: (i, 0)
        last = n_valid - 1
        return lambda i: (jnp.minimum(i, last), 0)

    img_map = _row_map(rows_img, tile_img)
    pts_map = _row_map(rows_pts, tile_pts)
    balanced = (pl.cdiv(rows_img, tile_img) >= n_tiles
                and pl.cdiv(rows_pts, tile_pts) >= n_tiles)
    # "parallel" wants an injective per-step output map; fall back to
    # "arbitrary" when a clamped (revisiting) map is in play.
    dim_sem = ("parallel",) if balanced else ("arbitrary",)

    out_img, out_pts = pl.pallas_call(
        functools.partial(_fused_kernel, eps=float(eps), inv_d=1.0 / D_pts),
        out_shape=(
            jax.ShapeDtypeStruct((rows_img, n_img), x_img.dtype),
            jax.ShapeDtypeStruct((rows_pts, _LANES), x_pts.dtype),
        ),
        grid=(n_tiles,),
        in_specs=[
            pl.BlockSpec((tile_img, _LANES), img_map),        # packed image
            pl.BlockSpec((_LANES, n_img), lambda i: (0, 0)),  # W_bd (resident)
            pl.BlockSpec((1, n_img), lambda i: (0, 0)),       # b (resident)
            pl.BlockSpec((tile_pts, _LANES), pts_map),        # packed points
            pl.BlockSpec((_LANES, p_pts), lambda i: (0, 0)),  # seg (resident)
            pl.BlockSpec((p_pts, _LANES), lambda i: (0, 0)),  # seg^T (resident)
            pl.BlockSpec((1, _LANES), lambda i: (0, 0)),      # gamma (resident)
            pl.BlockSpec((1, _LANES), lambda i: (0, 0)),      # beta (resident)
        ],
        out_specs=(
            pl.BlockSpec((tile_img, n_img), img_map),         # lane-dense
            pl.BlockSpec((tile_pts, _LANES), pts_map),        # lane-dense
        ),
        compiler_params=pltpu.CompilerParams(
            dimension_semantics=dim_sem,
            vmem_limit_bytes=32 * 1024 * 1024,   # safe on v7x's 64 MiB VMEM
        ),
    )(x_img_packed, w_bd, b_bd, x_pts_packed, seg, seg_t, g_pack, beta_pack)

    # ----- unpack: contiguous reshapes (no padded-slab slices) ---------------
    y_img = out_img.reshape(tok_img_pad, D_out)
    if tok_img_pad != tok_img:
        y_img = y_img[:tok_img]
    y_img = y_img.reshape(B_i, S_i, D_out)

    y_pts = out_pts.reshape(tok_pts_pad, D_pts)
    if tok_pts_pad != tok_pts:
        y_pts = y_pts[:tok_pts]
    y_pts = y_pts.reshape(B_p, S_p, D_pts)
    return {"image": y_img, "points": y_pts}


# ----------------------------------------------------------------------------
# ParallelPipelines: dict-of-pipelines container (forward semantics preserved)
# ----------------------------------------------------------------------------
class ParallelPipelines:
    """JAX/Pallas port of the torch ParallelPipelines container.

    Semantics: forward(data) == {k: transforms[k].batch(data[k])}.
    For this concrete instantiation ("image": Linear+ReLU, "points":
    LayerNorm) the two independent per-key pipelines are fused into a single
    pallas_call so the whole container is one TPU dispatch.
    """
    # TODO(synk): a fully generic container over arbitrary nn.Module pipelines
    # would dispatch one kernel per key; fusion here is specific to the two
    # known Pallas sub-pipelines.

    def __init__(self, *, w, b, gamma, beta, eps=1e-5, tile_rows=1024):
        self.params = dict(w=w, b=b, gamma=gamma, beta=beta)
        self.eps = float(eps)
        self.tile_rows = int(tile_rows)
        # kept for API parity with the torch container
        self.transforms = {"image": "linear_relu (pallas, fused)",
                           "points": "layernorm (pallas, fused)"}

    def forward(self, data):
        return fused_parallel_pipelines(
            data["image"], self.params["w"], self.params["b"],
            data["points"], self.params["gamma"], self.params["beta"],
            eps=self.eps, tile_rows=self.tile_rows)

    def batch(self, data):
        return self.forward(data)

    __call__ = forward


if __name__ == "__main__":
    key = jax.random.PRNGKey(0)
    k_img, k_pts, k_w, k_b, k_g, k_beta = jax.random.split(key, 6)

    # Small shapes: batch=2, seq=8/16, hidden=32, out=64.
    B, S_img, D_in, D_out = 2, 8, 32, 64
    S_pts, D_pts = 16, 32

    w = jax.random.normal(k_w, (D_in, D_out), jnp.float32) * 0.05   # [in, out]
    b = jax.random.normal(k_b, (D_out,), jnp.float32) * 0.01
    gamma = 1.0 + 0.1 * jax.random.normal(k_g, (D_pts,), jnp.float32)
    beta = 0.1 * jax.random.normal(k_beta, (D_pts,), jnp.float32)

    def reference(data):
        hi = jax.lax.Precision.HIGHEST
        ref_img = jnp.maximum(
            jnp.matmul(data["image"], w, precision=hi) + b, 0.0)
        xm = data["points"] - jnp.mean(data["points"], axis=-1, keepdims=True)
        ref_pts = xm * jax.lax.rsqrt(
            jnp.mean(xm * xm, axis=-1, keepdims=True) + 1e-5) * gamma + beta
        return {"image": ref_img, "points": ref_pts}

    # --- primary demo (small shapes, single grid step) ----------------------
    pipelines = ParallelPipelines(w=w, b=b, gamma=gamma, beta=beta)
    data = {
        "image": jax.random.normal(k_img, (B, S_img, D_in), jnp.float32),
        "points": jax.random.normal(k_pts, (B, S_pts, D_pts), jnp.float32),
    }
    out = pipelines.batch(data)
    out = jax.tree_util.tree_map(jax.block_until_ready, out)
    ref = reference(data)
    assert out["image"].shape == (B, S_img, D_out)
    assert out["points"].shape == (B, S_pts, D_pts)
    assert jnp.allclose(out["image"], ref["image"], atol=1e-5, rtol=1e-5)
    assert jnp.allclose(out["points"], ref["points"], atol=1e-5, rtol=1e-5)

    # --- imbalanced row counts + small tile: exercises the multi-step grid,
    #     decoupled per-pipeline tiles, ragged last blocks, and the clamped
    #     index map for the smaller pipeline ---------------------------------
    pipelines2 = ParallelPipelines(w=w, b=b, gamma=gamma, beta=beta,
                                   tile_rows=16)
    data2 = {
        "image": jax.random.normal(k_img, (2, 300, D_in), jnp.float32),
        "points": jax.random.normal(k_pts, (2, 51, D_pts), jnp.float32),
    }
    out2 = pipelines2.batch(data2)
    out2 = jax.tree_util.tree_map(jax.block_until_ready, out2)
    ref2 = reference(data2)
    assert jnp.allclose(out2["image"], ref2["image"], atol=1e-5, rtol=1e-5)
    assert jnp.allclose(out2["points"], ref2["points"], atol=1e-5, rtol=1e-5)

    print("KERNEL_OK")
</pallas_src>

<mosaic_0001>
module attributes {stable_mosaic.version = 11 : i64} {
  func.func @_fused_kernel(%arg0: i32, %arg1: memref<4x128xf32, #tpu.memory_space<vmem>>, %arg2: memref<128x256xf32, #tpu.memory_space<vmem>>, %arg3: memref<1x256xf32, #tpu.memory_space<vmem>>, %arg4: memref<8x128xf32, #tpu.memory_space<vmem>>, %arg5: memref<128x4xf32, #tpu.memory_space<vmem>>, %arg6: memref<4x128xf32, #tpu.memory_space<vmem>>, %arg7: memref<1x128xf32, #tpu.memory_space<vmem>>, %arg8: memref<1x128xf32, #tpu.memory_space<vmem>>, %arg9: memref<4x256xf32, #tpu.memory_space<vmem>>, %arg10: memref<8x128xf32, #tpu.memory_space<vmem>>) attributes {dimension_semantics = [#tpu.dimension_semantics<parallel>], iteration_bounds = array<i64: 1>, scalar_prefetch = 0 : i64, scratch_operands = 0 : i64, tpu.core_type = #tpu.core_type<tc>, window_params = [{transform_indices = @transform_0, window_bounds = array<i64: 4, 128>}, {pipeline_mode = #tpu.pipeline_mode<synchronous>, transform_indices = @transform_1, window_bounds = array<i64: 128, 256>}, {pipeline_mode = #tpu.pipeline_mode<synchronous>, transform_indices = @transform_2, window_bounds = array<i64: 1, 256>}, {transform_indices = @transform_3, window_bounds = array<i64: 8, 128>}, {pipeline_mode = #tpu.pipeline_mode<synchronous>, transform_indices = @transform_4, window_bounds = array<i64: 128, 4>}, {pipeline_mode = #tpu.pipeline_mode<synchronous>, transform_indices = @transform_5, window_bounds = array<i64: 4, 128>}, {pipeline_mode = #tpu.pipeline_mode<synchronous>, transform_indices = @transform_6, window_bounds = array<i64: 1, 128>}, {pipeline_mode = #tpu.pipeline_mode<synchronous>, transform_indices = @transform_7, window_bounds = array<i64: 1, 128>}, {transform_indices = @transform_8, window_bounds = array<i64: 4, 256>}, {transform_indices = @transform_9, window_bounds = array<i64: 8, 128>}]} {
    %c0 = arith.constant 0 : index
    %c0_0 = arith.constant 0 : index
    %0 = vector.load %arg1[%c0, %c0_0] : memref<4x128xf32, #tpu.memory_space<vmem>>, vector<4x128xf32>
    %c0_1 = arith.constant 0 : index
    %c0_2 = arith.constant 0 : index
    %1 = vector.load %arg2[%c0_1, %c0_2] : memref<128x256xf32, #tpu.memory_space<vmem>>, vector<128x256xf32>
    %cst = arith.constant dense<0.000000e+00> : vector<4x256xf32>
    %2 = tpu.matmul %0, %1, %cst {dimension_numbers = #tpu.dot_dimension_numbers<[1], [0], [0], [1], [0, 0, 1, 1], [], []>, precision = #tpu.contract_precision<fp32>} : vector<4x128xf32>, vector<128x256xf32>, vector<4x256xf32> -> vector<4x256xf32>
    %c0_3 = arith.constant 0 : index
    %c0_4 = arith.constant 0 : index
    %3 = vector.load %arg3[%c0_3, %c0_4] : memref<1x256xf32, #tpu.memory_space<vmem>>, vector<1x256xf32>
    %4 = vector.broadcast %3 : vector<1x256xf32> to vector<4x256xf32>
    %5 = arith.addf %2, %4 : vector<4x256xf32>
    %cst_5 = arith.constant 0.000000e+00 : f32
    %6 = vector.broadcast %cst_5 : f32 to vector<4x256xf32>
    %7 = arith.maximumf %5, %6 : vector<4x256xf32>
    %c0_6 = arith.constant 0 : index
    %c0_7 = arith.constant 0 : index
    %8 = vector.load %arg9[%c0_6, %c0_7] : memref<4x256xf32, #tpu.memory_space<vmem>>, vector<4x256xf32>
    tpu.vector_store %arg9[%c0_6, %c0_7], %7 {strides = array<i32>} : memref<4x256xf32, #tpu.memory_space<vmem>>, vector<4x256xf32>,
    %c0_8 = arith.constant 0 : index
    %c0_9 = arith.constant 0 : index
    %9 = vector.load %arg4[%c0_8, %c0_9] : memref<8x128xf32, #tpu.memory_space<vmem>>, vector<8x128xf32>
    %c0_10 = arith.constant 0 : index
    %c0_11 = arith.constant 0 : index
    %10 = vector.load %arg5[%c0_10, %c0_11] : memref<128x4xf32, #tpu.memory_space<vmem>>, vector<128x4xf32>
    %c0_12 = arith.constant 0 : index
    %c0_13 = arith.constant 0 : index
    %11 = vector.load %arg6[%c0_12, %c0_13] : memref<4x128xf32, #tpu.memory_space<vmem>>, vector<4x128xf32>
    %cst_14 = arith.constant dense<0.000000e+00> : vector<8x4xf32>
    %12 = tpu.matmul %9, %10, %cst_14 {dimension_numbers = #tpu.dot_dimension_numbers<[1], [0], [0], [1], [0, 0, 1, 1], [], []>, precision = #tpu.contract_precision<fp32>} : vector<8x128xf32>, vector<128x4xf32>, vector<8x4xf32> -> vector<8x4xf32>
    %cst_15 = arith.constant 3.125000e-02 : f32
    %13 = vector.broadcast %cst_15 : f32 to vector<8x4xf32>
    %14 = arith.mulf %12, %13 : vector<8x4xf32>
    %cst_16 = arith.constant dense<0.000000e+00> : vector<8x128xf32>
    %15 = tpu.matmul %14, %11, %cst_16 {dimension_numbers = #tpu.dot_dimension_numbers<[1], [0], [0], [1], [0, 0, 1, 1], [], []>, precision = #tpu.contract_precision<fp32>} : vector<8x4xf32>, vector<4x128xf32>, vector<8x128xf32> -> vector<8x128xf32>
    %16 = arith.subf %9, %15 : vector<8x128xf32>
    %17 = arith.mulf %16, %16 : vector<8x128xf32>
    %cst_17 = arith.constant dense<0.000000e+00> : vector<8x4xf32>
    %18 = tpu.matmul %17, %10, %cst_17 {dimension_numbers = #tpu.dot_dimension_numbers<[1], [0], [0], [1], [0, 0, 1, 1], [], []>, precision = #tpu.contract_precision<fp32>} : vector<8x128xf32>, vector<128x4xf32>, vector<8x4xf32> -> vector<8x4xf32>
    %cst_18 = arith.constant 3.125000e-02 : f32
    %19 = vector.broadcast %cst_18 : f32 to vector<8x4xf32>
    %20 = arith.mulf %18, %19 : vector<8x4xf32>
    %cst_19 = arith.constant 9.99999974E-6 : f32
    %21 = vector.broadcast %cst_19 : f32 to vector<8x4xf32>
    %22 = arith.addf %20, %21 : vector<8x4xf32>
    %23 = math.rsqrt %22 : vector<8x4xf32>
    %cst_20 = arith.constant dense<0.000000e+00> : vector<8x128xf32>
    %24 = tpu.matmul %23, %11, %cst_20 {dimension_numbers = #tpu.dot_dimension_numbers<[1], [0], [0], [1], [0, 0, 1, 1], [], []>, precision = #tpu.contract_precision<fp32>} : vector<8x4xf32>, vector<4x128xf32>, vector<8x128xf32> -> vector<8x128xf32>
    %c0_21 = arith.constant 0 : index
    %c0_22 = arith.constant 0 : index
    %25 = vector.load %arg7[%c0_21, %c0_22] : memref<1x128xf32, #tpu.memory_space<vmem>>, vector<1x128xf32>
    %26 = vector.broadcast %25 : vector<1x128xf32> to vector<8x128xf32>
    %27 = arith.mulf %24, %26 : vector<8x128xf32>
    %28 = arith.mulf %16, %27 : vector<8x128xf32>
    %c0_23 = arith.constant 0 : index
    %c0_24 = arith.constant 0 : index
    %29 = vector.load %arg8[%c0_23, %c0_24] : memref<1x128xf32, #tpu.memory_space<vmem>>, vector<1x128xf32>
    %30 = vector.broadcast %29 : vector<1x128xf32> to vector<8x128xf32>
    %31 = arith.addf %28, %30 : vector<8x128xf32>
    %c0_25 = arith.constant 0 : index
    %c0_26 = arith.constant 0 : index
    %32 = vector.load %arg10[%c0_25, %c0_26] : memref<8x128xf32, #tpu.memory_space<vmem>>, vector<8x128xf32>
    tpu.vector_store %arg10[%c0_25, %c0_26], %31 {strides = array<i32>} : memref<8x128xf32, #tpu.memory_space<vmem>>, vector<8x128xf32>,
    return
  }
  func.func @transform_0(%arg0: i32) -> (i32, i32) {
    %c0_i32 = arith.constant 0 : i32
    %c0_i32_0 = arith.constant 0 : i32
    return %arg0, %c0_i32 : i32, i32
  }
  func.func @transform_1(%arg0: i32) -> (i32, i32) {
    %c0_i32 = arith.constant 0 : i32
    %c0_i32_0 = arith.constant 0 : i32
    %c0_i32_1 = arith.constant 0 : i32
    return %c0_i32, %c0_i32_0 : i32, i32
  }
  func.func @transform_2(%arg0: i32) -> (i32, i32) {
    %c0_i32 = arith.constant 0 : i32
    %c0_i32_0 = arith.constant 0 : i32
    %c0_i32_1 = arith.constant 0 : i32
    return %c0_i32, %c0_i32_0 : i32, i32
  }
  func.func @transform_3(%arg0: i32) -> (i32, i32) {
    %c0_i32 = arith.constant 0 : i32
    %c0_i32_0 = arith.constant 0 : i32
    return %arg0, %c0_i32 : i32, i32
  }
  func.func @transform_4(%arg0: i32) -> (i32, i32) {
    %c0_i32 = arith.constant 0 : i32
    %c0_i32_0 = arith.constant 0 : i32
    %c0_i32_1 = arith.constant 0 : i32
    return %c0_i32, %c0_i32_0 : i32, i32
  }
  func.func @transform_5(%arg0: i32) -> (i32, i32) {
    %c0_i32 = arith.constant 0 : i32
    %c0_i32_0 = arith.constant 0 : i32
    %c0_i32_1 = arith.constant 0 : i32
    return %c0_i32, %c0_i32_0 : i32, i32
  }
  func.func @transform_6(%arg0: i32) -> (i32, i32) {
    %c0_i32 = arith.constant 0 : i32
    %c0_i32_0 = arith.constant 0 : i32
    %c0_i32_1 = arith.constant 0 : i32
    return %c0_i32, %c0_i32_0 : i32, i32
  }
  func.func @transform_7(%arg0: i32) -> (i32, i32) {
    %c0_i32 = arith.constant 0 : i32
    %c0_i32_0 = arith.constant 0 : i32
    %c0_i32_1 = arith.constant 0 : i32
    return %c0_i32, %c0_i32_0 : i32, i32
  }
  func.func @transform_8(%arg0: i32) -> (i32, i32) {
    %c0_i32 = arith.constant 0 : i32
    %c0_i32_0 = arith.constant 0 : i32
    return %arg0, %c0_i32 : i32, i32
  }
  func.func @transform_9(%arg0: i32) -> (i32, i32) {
    %c0_i32 = arith.constant 0 : i32
    %c0_i32_0 = arith.constant 0 : i32
    return %arg0, %c0_i32 : i32, i32
  }
}

</mosaic_0001>

<llo_original>
// kernel: tile.18
$region0: #{tile.18}
  #allocation0 [shape = 's32[1]{0}', space=sflag, size = 0x4, scoped, tag = 'scoped memory for tile.18']
  %s0 = inlined_call_operand.vmem [shape: f32[64], index: 0, kind: input, shape index: {}]
  %s1 = inlined_call_operand.vmem [shape: f32[4,64], index: 1, kind: output, shape index: {}]
  // Predicated region
  $region2: #{tile.18} parent=0 // pred_check
    _
  $region3: #{tile.18} parent=0 // pred_check_branch
    %3 = sbr.rel (0) target = $region5
  $region4: #{tile.18} parent=0 // pred_region
    _
  $region5: #{tile.18} parent=0 // pred_fallthru
    _
  %v4 = vld [vmem:[%s0] ss:$0 sm:$0xff]
  %5 = vst [vmem:[%s1] sm:$0xf] %v4

// kernel: tile.19
$region0: #{tile.19}
  %s0 = inlined_call_operand.vmem [shape: f32[4,64], index: 0, kind: input, shape index: {}]
  %s1 = inlined_call_operand.vmem [shape: f32[1,256], index: 1, kind: output, shape index: {}]
  $region1: #{tile.19} parent=0
    #allocation0 [shape = 'u8[8192]{0}', space=vmem, size = 0x2000, scoped, tag = 'scoped mem for output reshape']
    #allocation1 [shape = 'u8[4096]{0}', space=vmem, size = 0x1000, scoped, tag = 'scoped mem for input reshape']
    %s3 = sshllo.u32 0, 4
    %v4 = vld [vmem:[%s0] sm:%s3]
    %5 = vst [vmem:[#allocation1] sm:%s3] %v4
    %s6 = smov 3
    %v7 = vld [vmem:[#allocation1] ss:$2 sm:%s6]
    %vm8 = vcmask 523264
    %9 = vst.msk [vmem:[#allocation0] ss:$8 sm:$0x3] %vm8, %v7
    %s10 = scalar_lea.vmem [#allocation1], 1
    %s11 = smov 3
    %v12 = vld [vmem:[%s10] ss:$2 sm:%s11]
    %13 = vrot.lane.b32.xlu0 %v12, 64
    %v14 = vpop.permute.xlu0 %13
    %vm15 = vcmask 1048064
    %16 = vst.msk [vmem:[#allocation0] ss:$8 sm:$0x3] %vm15, %v14
    %s18 = sshllo.u32 0, 1
    %v20 = vld [vmem:[#allocation0] sm:%s18]
    %s21 = sshllo.u32 0, 1
    %22 = vst [vmem:[%s1] sm:%s21] %v20
    %s23 = scalar_lea.vmem [#allocation0], 8
    %v24 = vld [vmem:[%s23] sm:%s18]
    %s25 = sshllo.u32 0, 1
    %s26 = scalar_lea.vmem %s1, 1
    %27 = vst [vmem:[%s26] sm:%s25] %v24

// kernel: tile.23
$region0: #{tile.23}
  #allocation0 [shape = 's32[1]{0}', space=sflag, size = 0x4, scoped, tag = 'scoped memory for tile.23']
  %s0 = inlined_call_operand.vmem [shape: f32[32], index: 0, kind: input, shape index: {}]
  %s1 = inlined_call_operand.vmem [shape: f32[4,32], index: 1, kind: output, shape index: {}]
  // Predicated region
  $region2: #{tile.23} parent=0 // pred_check
    _
  $region3: #{tile.23} parent=0 // pred_check_branch
    %3 = sbr.rel (0) target = $region5
  $region4: #{tile.23} parent=0 // pred_region
    _
  $region5: #{tile.23} parent=0 // pred_fallthru
    _
  %v4 = vld [vmem:[%s0] ss:$0 sm:$0xff]
  %5 = vst [vmem:[%s1] sm:$0xf] %v4

// kernel: tile.24
$region0: #{tile.24}
  %s0 = inlined_call_operand.vmem [shape: f32[4,32], index: 0, kind: input, shape index: {}]
  %s1 = inlined_call_operand.vmem [shape: f32[1,128], index: 1, kind: output, shape index: {}]
  $region1: #{tile.24} parent=0
    #allocation0 [shape = 'u8[4096]{0}', space=vmem, size = 0x1000, scoped, tag = 'scoped mem for output reshape']
    #allocation1 [shape = 'u8[4096]{0}', space=vmem, size = 0x1000, scoped, tag = 'scoped mem for input reshape']
    %s3 = sshllo.u32 0, 4
    %v4 = vld [vmem:[%s0] sm:%s3]
    %5 = vst [vmem:[#allocation1] sm:%s3] %v4
    %v6 = vld [vmem:[#allocation1] sm:$0x1]
    %vm7 = vcmask 261120
    %8 = vst.msk [vmem:[#allocation0] sm:$0x1] %vm7, %v6
    %s9 = scalar_lea.vmem [#allocation1], 3
    %v10 = vld [vmem:[%s9] sm:$0x1]
    %11 = vrot.lane.b32.xlu0 %v10, 96
    %v12 = vpop.permute.xlu0 %11
    %vm13 = vcmask 1048320
    %14 = vst.msk [vmem:[#allocation0] sm:$0x1] %vm13, %v12
    %s15 = scalar_lea.vmem [#allocation1], 2
    %v16 = vld [vmem:[%s15] sm:$0x1]
    %17 = vrot.lane.b32.xlu0 %v16, 64
    %v18 = vpop.permute.xlu0 %17
    %vm19 = vcmask 785920
    %20 = vst.msk [vmem:[#allocation0] sm:$0x1] %vm19, %v18
    %s21 = scalar_lea.vmem [#allocation1], 1
    %v22 = vld [vmem:[%s21] sm:$0x1]
    %23 = vrot.lane.b32.xlu0 %v22, 32
    %v24 = vpop.permute.xlu0 %23
    %vm25 = vcmask 523520
    %26 = vst.msk [vmem:[#allocation0] sm:$0x1] %vm25, %v24
    %s28 = sshllo.u32 0, 1
    %v30 = vld [vmem:[#allocation0] sm:%s28]
    %s31 = sshllo.u32 0, 1
    %32 = vst [vmem:[%s1] sm:%s31] %v30

// kernel: fused_parallel_pipelines.1
$region0: #{fused_parallel_pipelines.1}
  #allocation0 [shape = 'u32[]', space=smem, size = 0x4, offset = 0x4, fixed_abs, tag = 'smem constant byte address 0x4 - core index']
  #allocation1 [shape = 'u32[144,128]{1,0:T(1,128)}', space=vmem, size = 0x12000, scoped, tag = 'internal scratch']
  %s0 = inlined_call_operand.vmem [shape: f32[4,128], index: 0, kind: input, shape index: {}]
  %s1 = inlined_call_operand.vmem [shape: f32[128,256], index: 1, kind: input, shape index: {}]
  %s2 = inlined_call_operand.vmem [shape: f32[1,256], index: 2, kind: input, shape index: {}]
  %s3 = inlined_call_operand.vmem [shape: f32[8,128], index: 3, kind: input, shape index: {}]
  %s4 = inlined_call_operand.vmem [shape: f32[128,4], index: 4, kind: input, shape index: {}]
  %s5 = inlined_call_operand.vmem [shape: f32[4,128], index: 5, kind: input, shape index: {}]
  %s6 = inlined_call_operand.vmem [shape: f32[1,128], index: 6, kind: input, shape index: {}]
  %s7 = inlined_call_operand.vmem [shape: f32[1,128], index: 7, kind: input, shape index: {}]
  %s8 = inlined_call_operand.vmem [shape: f32[4,256], index: 8, kind: output, shape index: {0}]
  %s9 = inlined_call_operand.vmem [shape: f32[8,128], index: 9, kind: output, shape index: {1}]
  %10 = xla_tuple %s8, %s9
  %s11 = sld [smem:[#allocation0]]
  $region50: #{fused_parallel_pipelines.1} parent=0
    _
  %s13 = ssub.s32 1, %s11
  %s14 = scalar_select 0, %s13, %s11
  // Predicated region
  $region2: #{fused_parallel_pipelines.1} parent=0 // pred_check
    _
  $region3: #{fused_parallel_pipelines.1} parent=0 // pred_check_branch
    %16 = sbr.rel (0) target = $region5
  $region4: #{fused_parallel_pipelines.1} parent=0 // pred_region
    _
  $region5: #{fused_parallel_pipelines.1} parent=0 // pred_fallthru
    _
  // Predicated region
  $region6: #{fused_parallel_pipelines.1} parent=0 // pred_check
    _
  $region7: #{fused_parallel_pipelines.1} parent=0 // pred_check_branch
    %18 = sbr.rel (0) target = $region9
  $region8: #{fused_parallel_pipelines.1} parent=0 // pred_region
    _
  $region9: #{fused_parallel_pipelines.1} parent=0 // pred_fallthru
    _
  // Predicated region
  $region10: #{fused_parallel_pipelines.1} parent=0 // pred_check
    _
  $region11: #{fused_parallel_pipelines.1} parent=0 // pred_check_branch
    %20 = sbr.rel (0) target = $region13
  $region12: #{fused_parallel_pipelines.1} parent=0 // pred_region
    _
  $region13: #{fused_parallel_pipelines.1} parent=0 // pred_fallthru
    _
  // Predicated region
  $region14: #{fused_parallel_pipelines.1} parent=0 // pred_check
    _
  $region15: #{fused_parallel_pipelines.1} parent=0 // pred_check_branch
    %22 = sbr.rel (0) target = $region17
  $region16: #{fused_parallel_pipelines.1} parent=0 // pred_region
    _
  $region17: #{fused_parallel_pipelines.1} parent=0 // pred_fallthru
    _
  // Predicated region
  $region18: #{fused_parallel_pipelines.1} parent=0 // pred_check
    _
  $region19: #{fused_parallel_pipelines.1} parent=0 // pred_check_branch
    %24 = sbr.rel (0) target = $region21
  $region20: #{fused_parallel_pipelines.1} parent=0 // pred_region
    _
  $region21: #{fused_parallel_pipelines.1} parent=0 // pred_fallthru
    _
  // Predicated region
  $region22: #{fused_parallel_pipelines.1} parent=0 // pred_check
    _
  $region23: #{fused_parallel_pipelines.1} parent=0 // pred_check_branch
    %26 = sbr.rel (0) target = $region25
  $region24: #{fused_parallel_pipelines.1} parent=0 // pred_region
    _
  $region25: #{fused_parallel_pipelines.1} parent=0 // pred_fallthru
    _
  // Predicated region
  $region26: #{fused_parallel_pipelines.1} parent=0 // pred_check
    _
  $region27: #{fused_parallel_pipelines.1} parent=0 // pred_check_branch
    %28 = sbr.rel (0) target = $region29
  $region28: #{fused_parallel_pipelines.1} parent=0 // pred_region
    _
  $region29: #{fused_parallel_pipelines.1} parent=0 // pred_fallthru
    _
  // Predicated region
  $region30: #{fused_parallel_pipelines.1} parent=0 // pred_check
    _
  $region31: #{fused_parallel_pipelines.1} parent=0 // pred_check_branch
    %30 = sbr.rel (0) target = $region33
  $region32: #{fused_parallel_pipelines.1} parent=0 // pred_region
    _
  $region33: #{fused_parallel_pipelines.1} parent=0 // pred_fallthru
    _
  %v31 = vld [vmem:[%s0] sm:$0xf]
  %v32 = vld [vmem:[%s1] sm:$0xff]
  %v33 = vld [vmem:[%s1 + $0x8] sm:$0xff]
  %v34 = vld [vmem:[%s1 + $0x10] sm:$0xff]
  %v35 = vld [vmem:[%s1 + $0x18] sm:$0xff]
  %v36 = vld [vmem:[%s1 + $0x20] sm:$0xff]
  %v37 = vld [vmem:[%s1 + $0x28] sm:$0xff]
  %v38 = vld [vmem:[%s1 + $0x30] sm:$0xff]
  %v39 = vld [vmem:[%s1 + $0x38] sm:$0xff]
  %v40 = vld [vmem:[%s1 + $0x40] sm:$0xff]
  %v41 = vld [vmem:[%s1 + $0x48] sm:$0xff]
  %v42 = vld [vmem:[%s1 + $0x50] sm:$0xff]
  %v43 = vld [vmem:[%s1 + $0x58] sm:$0xff]
  %v44 = vld [vmem:[%s1 + $0x60] sm:$0xff]
  %v45 = vld [vmem:[%s1 + $0x68] sm:$0xff]
  %v46 = vld [vmem:[%s1 + $0x70] sm:$0xff]
  %v47 = vld [vmem:[%s1 + $0x78] sm:$0xff]
  %v48 = vld [vmem:[%s1 + $0x80] sm:$0xff]
  %v49 = vld [vmem:[%s1 + $0x88] sm:$0xff]
  %v50 = vld [vmem:[%s1 + $0x90] sm:$0xff]
  %v51 = vld [vmem:[%s1 + $0x98] sm:$0xff]
  %v52 = vld [vmem:[%s1 + $0xa0] sm:$0xff]
  %v53 = vld [vmem:[%s1 + $0xa8] sm:$0xff]
  %v54 = vld [vmem:[%s1 + $0xb0] sm:$0xff]
  %v55 = vld [vmem:[%s1 + $0xb8] sm:$0xff]
  %v56 = vld [vmem:[%s1 + $0xc0] sm:$0xff]
  %v57 = vld [vmem:[%s1 + $0xc8] sm:$0xff]
  %v58 = vld [vmem:[%s1 + $0xd0] sm:$0xff]
  %v59 = vld [vmem:[%s1 + $0xd8] sm:$0xff]
  %v60 = vld [vmem:[%s1 + $0xe0] sm:$0xff]
  %v61 = vld [vmem:[%s1 + $0xe8] sm:$0xff]
  %v62 = vld [vmem:[%s1 + $0xf0] sm:$0xff]
  %v63 = vld [vmem:[%s1 + $0xf8] sm:$0xff]
  %v64 = vld [vmem:[%s2] sm:$0x3]
  %v66 = vlaneseq
  %v67 = vshrl.u32 %v66, 7
  %v68 = vsub.s32 0, %v67
  %v69 = vrot.slane %v64, %v68
  %v70 = vlaneseq
  %v71 = vshrl.u32 %v70, 7
  %v72 = vsub.s32 1, %v71
  %v73 = vrot.slane %v64, %v72
  %v76 = vand.u32 %v33, 4294901760
  %77 = vmatprep.subr.mxu0 %v76
  %v78 = vand.u32 %v32, 4294901760
  %79 = vmatpush1.msra.mxu0 %v78
  %v80 = vand.u32 %v35, 4294901760
  %81 = vmatprep.subr.mxu0 %v80
  %v82 = vand.u32 %v34, 4294901760
  %83 = vmatpush1.msra.mxu0 %v82
  %v84 = vand.u32 %v37, 4294901760
  %85 = vmatprep.subr.mxu0 %v84
  %v86 = vand.u32 %v36, 4294901760
  %87 = vmatpush1.msra.mxu0 %v86
  %v88 = vand.u32 %v39, 4294901760
  %89 = vmatprep.subr.mxu0 %v88
  %v90 = vand.u32 %v38, 4294901760
  %91 = vmatpush1.msra.mxu0 %v90
  %v92 = vand.u32 %v41, 4294901760
  %93 = vmatprep.subr.mxu0 %v92
  %v94 = vand.u32 %v40, 4294901760
  %95 = vmatpush1.msra.mxu0 %v94
  %v96 = vand.u32 %v43, 4294901760
  %97 = vmatprep.subr.mxu0 %v96
  %v98 = vand.u32 %v42, 4294901760
  %99 = vmatpush1.msra.mxu0 %v98
  %v100 = vand.u32 %v45, 4294901760
  %101 = vmatprep.subr.mxu0 %v100
  %v102 = vand.u32 %v44, 4294901760
  %103 = vmatpush1.msra.mxu0 %v102
  %v104 = vand.u32 %v47, 4294901760
  %105 = vmatprep.subr.mxu0 %v104
  %v106 = vand.u32 %v46, 4294901760
  %107 = vmatpush1.msra.mxu0 %v106
  %v108 = vand.u32 %v49, 4294901760
  %109 = vmatprep.subr.mxu0 %v108
  %v110 = vand.u32 %v48, 4294901760
  %111 = vmatpush1.msra.mxu0 %v110
  %v112 = vand.u32 %v51, 4294901760
  %113 = vmatprep.subr.mxu0 %v112
  %v114 = vand.u32 %v50, 4294901760
  %115 = vmatpush1.msra.mxu0 %v114
  %v116 = vand.u32 %v53, 4294901760
  %117 = vmatprep.subr.mxu0 %v116
  %v118 = vand.u32 %v52, 4294901760
  %119 = vmatpush1.msra.mxu0 %v118
  %v120 = vand.u32 %v55, 4294901760
  %121 = vmatprep.subr.mxu0 %v120
  %v122 = vand.u32 %v54, 4294901760
  %123 = vmatpush1.msra.mxu0 %v122
  %v124 = vand.u32 %v57, 4294901760
  %125 = vmatprep.subr.mxu0 %v124
  %v126 = vand.u32 %v56, 4294901760
  %127 = vmatpush1.msra.mxu0 %v126
  %v128 = vand.u32 %v59, 4294901760
  %129 = vmatprep.subr.mxu0 %v128
  %v130 = vand.u32 %v58, 4294901760
  %131 = vmatpush1.msra.mxu0 %v130
  %v132 = vand.u32 %v61, 4294901760
  %133 = vmatprep.subr.mxu0 %v132
  %v134 = vand.u32 %v60, 4294901760
  %135 = vmatpush1.msra.mxu0 %v134
  %v136 = vand.u32 %v63, 4294901760
  %137 = vmatprep.subr.mxu0 %v136
  %v138 = vand.u32 %v62, 4294901760
  %139 = vmatpush1.msra.mxu0 %v138
  %140 = vmatprep.subr.mxu0 0.0
  %141 = vmatpush1.msra.mxu0 0.0
  %142 = vmatprep.subr.mxu0 0.0
  %143 = vmatpush1.msra.mxu0 0.0
  %144 = vmatprep.subr.mxu0 0.0
  %145 = vmatpush1.msra.mxu0 0.0
  %146 = vmatprep.subr.mxu0 0.0
  %147 = vmatpush1.msra.mxu0 0.0
  %148 = vmatprep.subr.mxu0 0.0
  %149 = vmatpush1.msra.mxu0 0.0
  %150 = vmatprep.subr.mxu0 0.0
  %151 = vmatpush1.msra.mxu0 0.0
  %152 = vmatprep.subr.mxu0 0.0
  %153 = vmatpush1.msra.mxu0 0.0
  %154 = vmatprep.subr.mxu0 0.0
  %155 = vmatpush1.msra.mxu0 0.0
  %156 = vmatprep.subr.mxu0 0.0
  %157 = vmatpush1.msra.mxu0 0.0
  %158 = vmatprep.subr.mxu0 0.0
  %159 = vmatpush1.msra.mxu0 0.0
  %160 = vmatprep.subr.mxu0 0.0
  %161 = vmatpush1.msra.mxu0 0.0
  %162 = vmatprep.subr.mxu0 0.0
  %163 = vmatpush1.msra.mxu0 0.0
  %164 = vmatprep.subr.mxu0 0.0
  %165 = vmatpush1.msra.mxu0 0.0
  %166 = vmatprep.subr.mxu0 0.0
  %167 = vmatpush1.msra.mxu0 0.0
  %168 = vmatprep.subr.mxu0 0.0
  %169 = vmatpush1.msra.mxu0 0.0
  %170 = vmatprep.subr.mxu0 0.0
  %171 = vmatpush1.msra.mxu0 0.0
  %172 = vmatprep.mubr.f32.mxu0 0.0
  %v173 = vand.u32 %v31, 4294901760
  %v174 = vsub.f32 %v31, %v173
  %v175 = vand.u32 %v174, 4294901760
  %v176 = vsub.f32 %v174, %v175
  %v177 = vand.u32 %v176, 4294901760
  %178 = vmatmul.mubr.f32.gmra.mrb[0].mxu0 %v177
  %v179 = vpop.f32.mrb[0].mxu0
  %v180 = vadd.f32 %v69, %v179
  %v181 = vpop.f32.mrb[0].mxu0
  %v182 = vadd.f32 %v73, %v181
  %183 = vdwg.mxu0
  %v184 = vand.u32 %v33, 4294901760
  %v185 = vsub.f32 %v33, %v184
  %v186 = vand.u32 %v185, 4294901760
  %v187 = vsub.f32 %v185, %v186
  %v188 = vand.u32 %v187, 4294901760
  %189 = vmatprep.subr.mxu0 %v188
  %v190 = vand.u32 %v32, 4294901760
  %v191 = vsub.f32 %v32, %v190
  %v192 = vand.u32 %v191, 4294901760
  %v193 = vsub.f32 %v191, %v192
  %v194 = vand.u32 %v193, 4294901760
  %195 = vmatpush1.msra.mxu0 %v194
  %v196 = vand.u32 %v35, 4294901760
  %v197 = vsub.f32 %v35, %v196
  %v198 = vand.u32 %v197, 4294901760
  %v199 = vsub.f32 %v197, %v198
  %v200 = vand.u32 %v199, 4294901760
  %201 = vmatprep.subr.mxu0 %v200
  %v202 = vand.u32 %v34, 4294901760
  %v203 = vsub.f32 %v34, %v202
  %v204 = vand.u32 %v203, 4294901760
  %v205 = vsub.f32 %v203, %v204
  %v206 = vand.u32 %v205, 4294901760
  %207 = vmatpush1.msra.mxu0 %v206
  %v208 = vand.u32 %v37, 4294901760
  %v209 = vsub.f32 %v37, %v208
  %v210 = vand.u32 %v209, 4294901760
  %v211 = vsub.f32 %v209, %v210
  %v212 = vand.u32 %v211, 4294901760
  %213 = vmatprep.subr.mxu0 %v212
  %v214 = vand.u32 %v36, 4294901760
  %v215 = vsub.f32 %v36, %v214
  %v216 = vand.u32 %v215, 4294901760
  %v217 = vsub.f32 %v215, %v216
  %v218 = vand.u32 %v217, 4294901760
  %219 = vmatpush1.msra.mxu0 %v218
  %v220 = vand.u32 %v39, 4294901760
  %v221 = vsub.f32 %v39, %v220
  %v222 = vand.u32 %v221, 4294901760
  %v223 = vsub.f32 %v221, %v222
  %v224 = vand.u32 %v223, 4294901760
  %225 = vmatprep.subr.mxu0 %v224
  %v226 = vand.u32 %v38, 4294901760
  %v227 = vsub.f32 %v38, %v226
  %v228 = vand.u32 %v227, 4294901760
  %v229 = vsub.f32 %v227, %v228
  %v230 = vand.u32 %v229, 4294901760
  %231 = vmatpush1.msra.mxu0 %v230
  %v232 = vand.u32 %v41, 4294901760
  %v233 = vsub.f32 %v41, %v232
  %v234 = vand.u32 %v233, 4294901760
  %v235 = vsub.f32 %v233, %v234
  %v236 = vand.u32 %v235, 4294901760
  %237 = vmatprep.subr.mxu0 %v236
  %v238 = vand.u32 %v40, 4294901760
  %v239 = vsub.f32 %v40, %v238
  %v240 = vand.u32 %v239, 4294901760
  %v241 = vsub.f32 %v239, %v240
  %v242 = vand.u32 %v241, 4294901760
  %243 = vmatpush1.msra.mxu0 %v242
  %v244 = vand.u32 %v43, 4294901760
  %v245 = vsub.f32 %v43, %v244
  %v246 = vand.u32 %v245, 4294901760
  %v247 = vsub.f32 %v245, %v246
  %v248 = vand.u32 %v247, 4294901760
  %249 = vmatprep.subr.mxu0 %v248
  %v250 = vand.u32 %v42, 4294901760
  %v251 = vsub.f32 %v42, %v250
  %v252 = vand.u32 %v251, 4294901760
  %v253 = vsub.f32 %v251, %v252
  %v254 = vand.u32 %v253, 4294901760
  %255 = vmatpush1.msra.mxu0 %v254
  %v256 = vand.u32 %v45, 4294901760
  %v257 = vsub.f32 %v45, %v256
  %v258 = vand.u32 %v257, 4294901760
  %v259 = vsub.f32 %v257, %v258
  %v260 = vand.u32 %v259, 4294901760
  %261 = vmatprep.subr.mxu0 %v260
  %v262 = vand.u32 %v44, 4294901760
  %v263 = vsub.f32 %v44, %v262
  %v264 = vand.u32 %v263, 4294901760
  %v265 = vsub.f32 %v263, %v264
  %v266 = vand.u32 %v265, 4294901760
  %267 = vmatpush1.msra.mxu0 %v266
  %v268 = vand.u32 %v47, 4294901760
  %v269 = vsub.f32 %v47, %v268
  %v270 = vand.u32 %v269, 4294901760
  %v271 = vsub.f32 %v269, %v270
  %v272 = vand.u32 %v271, 4294901760
  %273 = vmatprep.subr.mxu0 %v272
  %v274 = vand.u32 %v46, 4294901760
  %v275 = vsub.f32 %v46, %v274
  %v276 = vand.u32 %v275, 4294901760
  %v277 = vsub.f32 %v275, %v276
  %v278 = vand.u32 %v277, 4294901760
  %279 = vmatpush1.msra.mxu0 %v278
  %v280 = vand.u32 %v49, 4294901760
  %v281 = vsub.f32 %v49, %v280
  %v282 = vand.u32 %v281, 4294901760
  %v283 = vsub.f32 %v281, %v282
  %v284 = vand.u32 %v283, 4294901760
  %285 = vmatprep.subr.mxu0 %v284
  %v286 = vand.u32 %v48, 4294901760
  %v287 = vsub.f32 %v48, %v286
  %v288 = vand.u32 %v287, 4294901760
  %v289 = vsub.f32 %v287, %v288
  %v290 = vand.u32 %v289, 4294901760
  %291 = vmatpush1.msra.mxu0 %v290
  %v292 = vand.u32 %v51, 4294901760
  %v293 = vsub.f32 %v51, %v292
  %v294 = vand.u32 %v293, 4294901760
  %v295 = vsub.f32 %v293, %v294
  %v296 = vand.u32 %v295, 4294901760
  %297 = vmatprep.subr.mxu0 %v296
  %v298 = vand.u32 %v50, 4294901760
  %v299 = vsub.f32 %v50, %v298
  %v300 = vand.u32 %v299, 4294901760
  %v301 = vsub.f32 %v299, %v300
  %v302 = vand.u32 %v301, 4294901760
  %303 = vmatpush1.msra.mxu0 %v302
  %v304 = vand.u32 %v53, 4294901760
  %v305 = vsub.f32 %v53, %v304
  %v306 = vand.u32 %v305, 4294901760
  %v307 = vsub.f32 %v305, %v306
  %v308 = vand.u32 %v307, 4294901760
  %309 = vmatprep.subr.mxu0 %v308
  %v310 = vand.u32 %v52, 4294901760
  %v311 = vsub.f32 %v52, %v310
  %v312 = vand.u32 %v311, 4294901760
  %v313 = vsub.f32 %v311, %v312
  %v314 = vand.u32 %v313, 4294901760
  %315 = vmatpush1.msra.mxu0 %v314
  %v316 = vand.u32 %v55, 4294901760
  %v317 = vsub.f32 %v55, %v316
  %v318 = vand.u32 %v317, 4294901760
  %v319 = vsub.f32 %v317, %v318
  %v320 = vand.u32 %v319, 4294901760
  %321 = vmatprep.subr.mxu0 %v320
  %v322 = vand.u32 %v54, 4294901760
  %v323 = vsub.f32 %v54, %v322
  %v324 = vand.u32 %v323, 4294901760
  %v325 = vsub.f32 %v323, %v324
  %v326 = vand.u32 %v325, 4294901760
  %327 = vmatpush1.msra.mxu0 %v326
  %v328 = vand.u32 %v57, 4294901760
  %v329 = vsub.f32 %v57, %v328
  %v330 = vand.u32 %v329, 4294901760
  %v331 = vsub.f32 %v329, %v330
  %v332 = vand.u32 %v331, 4294901760
  %333 = vmatprep.subr.mxu0 %v332
  %v334 = vand.u32 %v56, 4294901760
  %v335 = vsub.f32 %v56, %v334
  %v336 = vand.u32 %v335, 4294901760
  %v337 = vsub.f32 %v335, %v336
  %v338 = vand.u32 %v337, 4294901760
  %339 = vmatpush1.msra.mxu0 %v338
  %v340 = vand.u32 %v59, 4294901760
  %v341 = vsub.f32 %v59, %v340
  %v342 = vand.u32 %v341, 4294901760
  %v343 = vsub.f32 %v341, %v342
  %v344 = vand.u32 %v343, 4294901760
  %345 = vmatprep.subr.mxu0 %v344
  %v346 = vand.u32 %v58, 4294901760
  %v347 = vsub.f32 %v58, %v346
  %v348 = vand.u32 %v347, 4294901760
  %v349 = vsub.f32 %v347, %v348
  %v350 = vand.u32 %v349, 4294901760
  %351 = vmatpush1.msra.mxu0 %v350
  %v352 = vand.u32 %v61, 4294901760
  %v353 = vsub.f32 %v61, %v352
  %v354 = vand.u32 %v353, 4294901760
  %v355 = vsub.f32 %v353, %v354
  %v356 = vand.u32 %v355, 4294901760
  %357 = vmatprep.subr.mxu0 %v356
  %v358 = vand.u32 %v60, 4294901760
  %v359 = vsub.f32 %v60, %v358
  %v360 = vand.u32 %v359, 4294901760
  %v361 = vsub.f32 %v359, %v360
  %v362 = vand.u32 %v361, 4294901760
  %363 = vmatpush1.msra.mxu0 %v362
  %v364 = vand.u32 %v63, 4294901760
  %v365 = vsub.f32 %v63, %v364
  %v366 = vand.u32 %v365, 4294901760
  %v367 = vsub.f32 %v365, %v366
  %v368 = vand.u32 %v367, 4294901760
  %369 = vmatprep.subr.mxu0 %v368
  %v370 = vand.u32 %v62, 4294901760
  %v371 = vsub.f32 %v62, %v370
  %v372 = vand.u32 %v371, 4294901760
  %v373 = vsub.f32 %v371, %v372
  %v374 = vand.u32 %v373, 4294901760
  %375 = vmatpush1.msra.mxu0 %v374
  %376 = vmatprep.subr.mxu0 0.0
  %377 = vmatpush1.msra.mxu0 0.0
  %378 = vmatprep.subr.mxu0 0.0
  %379 = vmatpush1.msra.mxu0 0.0
  %380 = vmatprep.subr.mxu0 0.0
  %381 = vmatpush1.msra.mxu0 0.0
  %382 = vmatprep.subr.mxu0 0.0
  %383 = vmatpush1.msra.mxu0 0.0
  %384 = vmatprep.subr.mxu0 0.0
  %385 = vmatpush1.msra.mxu0 0.0
  %386 = vmatprep.subr.mxu0 0.0
  %387 = vmatpush1.msra.mxu0 0.0
  %388 = vmatprep.subr.mxu0 0.0
  %389 = vmatpush1.msra.mxu0 0.0
  %390 = vmatprep.subr.mxu0 0.0
  %391 = vmatpush1.msra.mxu0 0.0
  %392 = vmatprep.subr.mxu0 0.0
  %393 = vmatpush1.msra.mxu0 0.0
  %394 = vmatprep.subr.mxu0 0.0
  %395 = vmatpush1.msra.mxu0 0.0
  %396 = vmatprep.subr.mxu0 0.0
  %397 = vmatpush1.msra.mxu0 0.0
  %398 = vmatprep.subr.mxu0 0.0
  %399 = vmatpush1.msra.mxu0 0.0
  %400 = vmatprep.subr.mxu0 0.0
  %401 = vmatpush1.msra.mxu0 0.0
  %402 = vmatprep.subr.mxu0 0.0
  %403 = vmatpush1.msra.mxu0 0.0
  %404 = vmatprep.subr.mxu0 0.0
  %405 = vmatpush1.msra.mxu0 0.0
  %406 = vmatprep.subr.mxu0 0.0
  %407 = vmatpush1.msra.mxu0 0.0
  %408 = vmatprep.mubr.f32.mxu0 0.0
  %v409 = vand.u32 %v31, 4294901760
  %410 = vmatmul.mubr.f32.gmra.mrb[0].mxu0 %v409
  %v411 = vpop.f32.mrb[0].mxu0
  %v412 = vadd.f32 %v180, %v411
  %v413 = vpop.f32.mrb[0].mxu0
  %v414 = vadd.f32 %v182, %v413
  %415 = vdwg.mxu0
  %v416 = vand.u32 %v33, 4294901760
  %v417 = vsub.f32 %v33, %v416
  %418 = vmatprep.subr.mxu0 %v417
  %v419 = vand.u32 %v32, 4294901760
  %v420 = vsub.f32 %v32, %v419
  %421 = vmatpush1.msra.mxu0 %v420
  %v422 = vand.u32 %v35, 4294901760
  %v423 = vsub.f32 %v35, %v422
  %424 = vmatprep.subr.mxu0 %v423
  %v425 = vand.u32 %v34, 4294901760
  %v426 = vsub.f32 %v34, %v425
  %427 = vmatpush1.msra.mxu0 %v426
  %v428 = vand.u32 %v37, 4294901760
  %v429 = vsub.f32 %v37, %v428
  %430 = vmatprep.subr.mxu0 %v429
  %v431 = vand.u32 %v36, 4294901760
  %v432 = vsub.f32 %v36, %v431
  %433 = vmatpush1.msra.mxu0 %v432
  %v434 = vand.u32 %v39, 4294901760
  %v435 = vsub.f32 %v39, %v434
  %436 = vmatprep.subr.mxu0 %v435
  %v437 = vand.u32 %v38, 4294901760
  %v438 = vsub.f32 %v38, %v437
  %439 = vmatpush1.msra.mxu0 %v438
  %v440 = vand.u32 %v41, 4294901760
  %v441 = vsub.f32 %v41, %v440
  %442 = vmatprep.subr.mxu0 %v441
  %v443 = vand.u32 %v40, 4294901760
  %v444 = vsub.f32 %v40, %v443
  %445 = vmatpush1.msra.mxu0 %v444
  %v446 = vand.u32 %v43, 4294901760
  %v447 = vsub.f32 %v43, %v446
  %448 = vmatprep.subr.mxu0 %v447
  %v449 = vand.u32 %v42, 4294901760
  %v450 = vsub.f32 %v42, %v449
  %451 = vmatpush1.msra.mxu0 %v450
  %v452 = vand.u32 %v45, 4294901760
  %v453 = vsub.f32 %v45, %v452
  %454 = vmatprep.subr.mxu0 %v453
  %v455 = vand.u32 %v44, 4294901760
  %v456 = vsub.f32 %v44, %v455
  %457 = vmatpush1.msra.mxu0 %v456
  %v458 = vand.u32 %v47, 4294901760
  %v459 = vsub.f32 %v47, %v458
  %460 = vmatprep.subr.mxu0 %v459
  %v461 = vand.u32 %v46, 4294901760
  %v462 = vsub.f32 %v46, %v461
  %463 = vmatpush1.msra.mxu0 %v462
  %v464 = vand.u32 %v49, 4294901760
  %v465 = vsub.f32 %v49, %v464
  %466 = vmatprep.subr.mxu0 %v465
  %v467 = vand.u32 %v48, 4294901760
  %v468 = vsub.f32 %v48, %v467
  %469 = vmatpush1.msra.mxu0 %v468
  %v470 = vand.u32 %v51, 4294901760
  %v471 = vsub.f32 %v51, %v470
  %472 = vmatprep.subr.mxu0 %v471
  %v473 = vand.u32 %v50, 4294901760
  %v474 = vsub.f32 %v50, %v473
  %475 = vmatpush1.msra.mxu0 %v474
  %v476 = vand.u32 %v53, 4294901760
  %v477 = vsub.f32 %v53, %v476
  %478 = vmatprep.subr.mxu0 %v477
  %v479 = vand.u32 %v52, 4294901760
  %v480 = vsub.f32 %v52, %v479
  %481 = vmatpush1.msra.mxu0 %v480
  %v482 = vand.u32 %v55, 4294901760
  %v483 = vsub.f32 %v55, %v482
  %484 = vmatprep.subr.mxu0 %v483
  %v485 = vand.u32 %v54, 4294901760
  %v486 = vsub.f32 %v54, %v485
  %487 = vmatpush1.msra.mxu0 %v486
  %v488 = vand.u32 %v57, 4294901760
  %v489 = vsub.f32 %v57, %v488
  %490 = vmatprep.subr.mxu0 %v489
  %v491 = vand.u32 %v56, 4294901760
  %v492 = vsub.f32 %v56, %v491
  %493 = vmatpush1.msra.mxu0 %v492
  %v494 = vand.u32 %v59, 4294901760
  %v495 = vsub.f32 %v59, %v494
  %496 = vmatprep.subr.mxu0 %v495
  %v497 = vand.u32 %v58, 4294901760
  %v498 = vsub.f32 %v58, %v497
  %499 = vmatpush1.msra.mxu0 %v498
  %v500 = vand.u32 %v61, 4294901760
  %v501 = vsub.f32 %v61, %v500
  %502 = vmatprep.subr.mxu0 %v501
  %v503 = vand.u32 %v60, 4294901760
  %v504 = vsub.f32 %v60, %v503
  %505 = vmatpush1.msra.mxu0 %v504
  %v506 = vand.u32 %v63, 4294901760
  %v507 = vsub.f32 %v63, %v506
  %508 = vmatprep.subr.mxu0 %v507
  %v509 = vand.u32 %v62, 4294901760
  %v510 = vsub.f32 %v62, %v509
  %511 = vmatpush1.msra.mxu0 %v510
  %512 = vmatprep.subr.mxu0 0.0
  %513 = vmatpush1.msra.mxu0 0.0
  %514 = vmatprep.subr.mxu0 0.0
  %515 = vmatpush1.msra.mxu0 0.0
  %516 = vmatprep.subr.mxu0 0.0
  %517 = vmatpush1.msra.mxu0 0.0
  %518 = vmatprep.subr.mxu0 0.0
  %519 = vmatpush1.msra.mxu0 0.0
  %520 = vmatprep.subr.mxu0 0.0
  %521 = vmatpush1.msra.mxu0 0.0
  %522 = vmatprep.subr.mxu0 0.0
  %523 = vmatpush1.msra.mxu0 0.0
  %524 = vmatprep.subr.mxu0 0.0
  %525 = vmatpush1.msra.mxu0 0.0
  %526 = vmatprep.subr.mxu0 0.0
  %527 = vmatpush1.msra.mxu0 0.0
  %528 = vmatprep.subr.mxu0 0.0
  %529 = vmatpush1.msra.mxu0 0.0
  %530 = vmatprep.subr.mxu0 0.0
  %531 = vmatpush1.msra.mxu0 0.0
  %532 = vmatprep.subr.mxu0 0.0
  %533 = vmatpush1.msra.mxu0 0.0
  %534 = vmatprep.subr.mxu0 0.0
  %535 = vmatpush1.msra.mxu0 0.0
  %536 = vmatprep.subr.mxu0 0.0
  %537 = vmatpush1.msra.mxu0 0.0
  %538 = vmatprep.subr.mxu0 0.0
  %539 = vmatpush1.msra.mxu0 0.0
  %540 = vmatprep.subr.mxu0 0.0
  %541 = vmatpush1.msra.mxu0 0.0
  %542 = vmatprep.subr.mxu0 0.0
  %543 = vmatpush1.msra.mxu0 0.0
  %544 = vmatprep.mubr.f32.mxu0 0.0
  %v545 = vand.u32 %v31, 4294901760
  %v546 = vsub.f32 %v31, %v545
  %547 = vmatmul.mubr.f32.gmra.mrb[0].mxu0 %v546
  %v548 = vpop.f32.mrb[0].mxu0
  %v549 = vadd.f32 %v412, %v548
  %v550 = vpop.f32.mrb[0].mxu0
  %v551 = vadd.f32 %v414, %v550
  %552 = vdwg.mxu0
  %v553 = vand.u32 %v33, 4294901760
  %554 = vmatprep.subr.mxu0 %v553
  %v555 = vand.u32 %v32, 4294901760
  %556 = vmatpush1.msra.mxu0 %v555
  %v557 = vand.u32 %v35, 4294901760
  %558 = vmatprep.subr.mxu0 %v557
  %v559 = vand.u32 %v34, 4294901760
  %560 = vmatpush1.msra.mxu0 %v559
  %v561 = vand.u32 %v37, 4294901760
  %562 = vmatprep.subr.mxu0 %v561
  %v563 = vand.u32 %v36, 4294901760
  %564 = vmatpush1.msra.mxu0 %v563
  %v565 = vand.u32 %v39, 4294901760
  %566 = vmatprep.subr.mxu0 %v565
  %v567 = vand.u32 %v38, 4294901760
  %568 = vmatpush1.msra.mxu0 %v567
  %v569 = vand.u32 %v41, 4294901760
  %570 = vmatprep.subr.mxu0 %v569
  %v571 = vand.u32 %v40, 4294901760
  %572 = vmatpush1.msra.mxu0 %v571
  %v573 = vand.u32 %v43, 4294901760
  %574 = vmatprep.subr.mxu0 %v573
  %v575 = vand.u32 %v42, 4294901760
  %576 = vmatpush1.msra.mxu0 %v575
  %v577 = vand.u32 %v45, 4294901760
  %578 = vmatprep.subr.mxu0 %v577
  %v579 = vand.u32 %v44, 4294901760
  %580 = vmatpush1.msra.mxu0 %v579
  %v581 = vand.u32 %v47, 4294901760
  %582 = vmatprep.subr.mxu0 %v581
  %v583 = vand.u32 %v46, 4294901760
  %584 = vmatpush1.msra.mxu0 %v583
  %v585 = vand.u32 %v49, 4294901760
  %586 = vmatprep.subr.mxu0 %v585
  %v587 = vand.u32 %v48, 4294901760
  %588 = vmatpush1.msra.mxu0 %v587
  %v589 = vand.u32 %v51, 4294901760
  %590 = vmatprep.subr.mxu0 %v589
  %v591 = vand.u32 %v50, 4294901760
  %592 = vmatpush1.msra.mxu0 %v591
  %v593 = vand.u32 %v53, 4294901760
  %594 = vmatprep.subr.mxu0 %v593
  %v595 = vand.u32 %v52, 4294901760
  %596 = vmatpush1.msra.mxu0 %v595
  %v597 = vand.u32 %v55, 4294901760
  %598 = vmatprep.subr.mxu0 %v597
  %v599 = vand.u32 %v54, 4294901760
  %600 = vmatpush1.msra.mxu0 %v599
  %v601 = vand.u32 %v57, 4294901760
  %602 = vmatprep.subr.mxu0 %v601
  %v603 = vand.u32 %v56, 4294901760
  %604 = vmatpush1.msra.mxu0 %v603
  %v605 = vand.u32 %v59, 4294901760
  %606 = vmatprep.subr.mxu0 %v605
  %v607 = vand.u32 %v58, 4294901760
  %608 = vmatpush1.msra.mxu0 %v607
  %v609 = vand.u32 %v61, 4294901760
  %610 = vmatprep.subr.mxu0 %v609
  %v611 = vand.u32 %v60, 4294901760
  %612 = vmatpush1.msra.mxu0 %v611
  %v613 = vand.u32 %v63, 4294901760
  %614 = vmatprep.subr.mxu0 %v613
  %v615 = vand.u32 %v62, 4294901760
  %616 = vmatpush1.msra.mxu0 %v615
  %617 = vmatprep.subr.mxu0 0.0
  %618 = vmatpush1.msra.mxu0 0.0
  %619 = vmatprep.subr.mxu0 0.0
  %620 = vmatpush1.msra.mxu0 0.0
  %621 = vmatprep.subr.mxu0 0.0
  %622 = vmatpush1.msra.mxu0 0.0
  %623 = vmatprep.subr.mxu0 0.0
  %624 = vmatpush1.msra.mxu0 0.0
  %625 = vmatprep.subr.mxu0 0.0
  %626 = vmatpush1.msra.mxu0 0.0
  %627 = vmatprep.subr.mxu0 0.0
  %628 = vmatpush1.msra.mxu0 0.0
  %629 = vmatprep.subr.mxu0 0.0
  %630 = vmatpush1.msra.mxu0 0.0
  %631 = vmatprep.subr.mxu0 0.0
  %632 = vmatpush1.msra.mxu0 0.0
  %633 = vmatprep.subr.mxu0 0.0
  %634 = vmatpush1.msra.mxu0 0.0
  %635 = vmatprep.subr.mxu0 0.0
  %636 = vmatpush1.msra.mxu0 0.0
  %637 = vmatprep.subr.mxu0 0.0
  %638 = vmatpush1.msra.mxu0 0.0
  %639 = vmatprep.subr.mxu0 0.0
  %640 = vmatpush1.msra.mxu0 0.0
  %641 = vmatprep.subr.mxu0 0.0
  %642 = vmatpush1.msra.mxu0 0.0
  %643 = vmatprep.subr.mxu0 0.0
  %644 = vmatpush1.msra.mxu0 0.0
  %645 = vmatprep.subr.mxu0 0.0
  %646 = vmatpush1.msra.mxu0 0.0
  %647 = vmatprep.subr.mxu0 0.0
  %648 = vmatpush1.msra.mxu0 0.0
  %649 = vmatprep.mubr.f32.mxu0 0.0
  %v650 = vand.u32 %v31, 4294901760
  %v651 = vsub.f32 %v31, %v650
  %v652 = vand.u32 %v651, 4294901760
  %653 = vmatmul.mubr.f32.gmra.mrb[0].mxu0 %v652
  %v654 = vpop.f32.mrb[0].mxu0
  %v655 = vadd.f32 %v549, %v654
  %v656 = vpop.f32.mrb[0].mxu0
  %v657 = vadd.f32 %v551, %v656
  %658 = vdwg.mxu0
  %v659 = vand.u32 %v33, 4294901760
  %v660 = vsub.f32 %v33, %v659
  %v661 = vand.u32 %v660, 4294901760
  %662 = vmatprep.subr.mxu0 %v661
  %v663 = vand.u32 %v32, 4294901760
  %v664 = vsub.f32 %v32, %v663
  %v665 = vand.u32 %v664, 4294901760
  %666 = vmatpush1.msra.mxu0 %v665
  %v667 = vand.u32 %v35, 4294901760
  %v668 = vsub.f32 %v35, %v667
  %v669 = vand.u32 %v668, 4294901760
  %670 = vmatprep.subr.mxu0 %v669
  %v671 = vand.u32 %v34, 4294901760
  %v672 = vsub.f32 %v34, %v671
  %v673 = vand.u32 %v672, 4294901760
  %674 = vmatpush1.msra.mxu0 %v673
  %v675 = vand.u32 %v37, 4294901760
  %v676 = vsub.f32 %v37, %v675
  %v677 = vand.u32 %v676, 4294901760
  %678 = vmatprep.subr.mxu0 %v677
  %v679 = vand.u32 %v36, 4294901760
  %v680 = vsub.f32 %v36, %v679
  %v681 = vand.u32 %v680, 4294901760
  %682 = vmatpush1.msra.mxu0 %v681
  %v683 = vand.u32 %v39, 4294901760
  %v684 = vsub.f32 %v39, %v683
  %v685 = vand.u32 %v684, 4294901760
  %686 = vmatprep.subr.mxu0 %v685
  %v687 = vand.u32 %v38, 4294901760
  %v688 = vsub.f32 %v38, %v687
  %v689 = vand.u32 %v688, 4294901760
  %690 = vmatpush1.msra.mxu0 %v689
  %v691 = vand.u32 %v41, 4294901760
  %v692 = vsub.f32 %v41, %v691
  %v693 = vand.u32 %v692, 4294901760
  %694 = vmatprep.subr.mxu0 %v693
  %v695 = vand.u32 %v40, 4294901760
  %v696 = vsub.f32 %v40, %v695
  %v697 = vand.u32 %v696, 4294901760
  %698 = vmatpush1.msra.mxu0 %v697
  %v699 = vand.u32 %v43, 4294901760
  %v700 = vsub.f32 %v43, %v699
  %v701 = vand.u32 %v700, 4294901760
  %702 = vmatprep.subr.mxu0 %v701
  %v703 = vand.u32 %v42, 4294901760
  %v704 = vsub.f32 %v42, %v703
  %v705 = vand.u32 %v704, 4294901760
  %706 = vmatpush1.msra.mxu0 %v705
  %v707 = vand.u32 %v45, 4294901760
  %v708 = vsub.f32 %v45, %v707
  %v709 = vand.u32 %v708, 4294901760
  %710 = vmatprep.subr.mxu0 %v709
  %v711 = vand.u32 %v44, 4294901760
  %v712 = vsub.f32 %v44, %v711
  %v713 = vand.u32 %v712, 4294901760
  %714 = vmatpush1.msra.mxu0 %v713
  %v715 = vand.u32 %v47, 4294901760
  %v716 = vsub.f32 %v47, %v715
  %v717 = vand.u32 %v716, 4294901760
  %718 = vmatprep.subr.mxu0 %v717
  %v719 = vand.u32 %v46, 4294901760
  %v720 = vsub.f32 %v46, %v719
  %v721 = vand.u32 %v720, 4294901760
  %722 = vmatpush1.msra.mxu0 %v721
  %v723 = vand.u32 %v49, 4294901760
  %v724 = vsub.f32 %v49, %v723
  %v725 = vand.u32 %v724, 4294901760
  %726 = vmatprep.subr.mxu0 %v725
  %v727 = vand.u32 %v48, 4294901760
  %v728 = vsub.f32 %v48, %v727
  %v729 = vand.u32 %v728, 4294901760
  %730 = vmatpush1.msra.mxu0 %v729
  %v731 = vand.u32 %v51, 4294901760
  %v732 = vsub.f32 %v51, %v731
  %v733 = vand.u32 %v732, 4294901760
  %734 = vmatprep.subr.mxu0 %v733
  %v735 = vand.u32 %v50, 4294901760
  %v736 = vsub.f32 %v50, %v735
  %v737 = vand.u32 %v736, 4294901760
  %738 = vmatpush1.msra.mxu0 %v737
  %v739 = vand.u32 %v53, 4294901760
  %v740 = vsub.f32 %v53, %v739
  %v741 = vand.u32 %v740, 4294901760
  %742 = vmatprep.subr.mxu0 %v741
  %v743 = vand.u32 %v52, 4294901760
  %v744 = vsub.f32 %v52, %v743
  %v745 = vand.u32 %v744, 4294901760
  %746 = vmatpush1.msra.mxu0 %v745
  %v747 = vand.u32 %v55, 4294901760
  %v748 = vsub.f32 %v55, %v747
  %v749 = vand.u32 %v748, 4294901760
  %750 = vmatprep.subr.mxu0 %v749
  %v751 = vand.u32 %v54, 4294901760
  %v752 = vsub.f32 %v54, %v751
  %v753 = vand.u32 %v752, 4294901760
  %754 = vmatpush1.msra.mxu0 %v753
  %v755 = vand.u32 %v57, 4294901760
  %v756 = vsub.f32 %v57, %v755
  %v757 = vand.u32 %v756, 4294901760
  %758 = vmatprep.subr.mxu0 %v757
  %v759 = vand.u32 %v56, 4294901760
  %v760 = vsub.f32 %v56, %v759
  %v761 = vand.u32 %v760, 4294901760
  %762 = vmatpush1.msra.mxu0 %v761
  %v763 = vand.u32 %v59, 4294901760
  %v764 = vsub.f32 %v59, %v763
  %v765 = vand.u32 %v764, 4294901760
  %766 = vmatprep.subr.mxu0 %v765
  %v767 = vand.u32 %v58, 4294901760
  %v768 = vsub.f32 %v58, %v767
  %v769 = vand.u32 %v768, 4294901760
  %770 = vmatpush1.msra.mxu0 %v769
  %v771 = vand.u32 %v61, 4294901760
  %v772 = vsub.f32 %v61, %v771
  %v773 = vand.u32 %v772, 4294901760
  %774 = vmatprep.subr.mxu0 %v773
  %v775 = vand.u32 %v60, 4294901760
  %v776 = vsub.f32 %v60, %v775
  %v777 = vand.u32 %v776, 4294901760
  %778 = vmatpush1.msra.mxu0 %v777
  %v779 = vand.u32 %v63, 4294901760
  %v780 = vsub.f32 %v63, %v779
  %v781 = vand.u32 %v780, 4294901760
  %782 = vmatprep.subr.mxu0 %v781
  %v783 = vand.u32 %v62, 4294901760
  %v784 = vsub.f32 %v62, %v783
  %v785 = vand.u32 %v784, 4294901760
  %786 = vmatpush1.msra.mxu0 %v785
  %787 = vmatprep.subr.mxu0 0.0
  %788 = vmatpush1.msra.mxu0 0.0
  %789 = vmatprep.subr.mxu0 0.0
  %790 = vmatpush1.msra.mxu0 0.0
  %791 = vmatprep.subr.mxu0 0.0
  %792 = vmatpush1.msra.mxu0 0.0
  %793 = vmatprep.subr.mxu0 0.0
  %794 = vmatpush1.msra.mxu0 0.0
  %795 = vmatprep.subr.mxu0 0.0
  %796 = vmatpush1.msra.mxu0 0.0
  %797 = vmatprep.subr.mxu0 0.0
  %798 = vmatpush1.msra.mxu0 0.0
  %799 = vmatprep.subr.mxu0 0.0
  %800 = vmatpush1.msra.mxu0 0.0
  %801 = vmatprep.subr.mxu0 0.0
  %802 = vmatpush1.msra.mxu0 0.0
  %803 = vmatprep.subr.mxu0 0.0
  %804 = vmatpush1.msra.mxu0 0.0
  %805 = vmatprep.subr.mxu0 0.0
  %806 = vmatpush1.msra.mxu0 0.0
  %807 = vmatprep.subr.mxu0 0.0
  %808 = vmatpush1.msra.mxu0 0.0
  %809 = vmatprep.subr.mxu0 0.0
  %810 = vmatpush1.msra.mxu0 0.0
  %811 = vmatprep.subr.mxu0 0.0
  %812 = vmatpush1.msra.mxu0 0.0
  %813 = vmatprep.subr.mxu0 0.0
  %814 = vmatpush1.msra.mxu0 0.0
  %815 = vmatprep.subr.mxu0 0.0
  %816 = vmatpush1.msra.mxu0 0.0
  %817 = vmatprep.subr.mxu0 0.0
  %818 = vmatpush1.msra.mxu0 0.0
  %819 = vmatprep.mubr.f32.mxu0 0.0
  %v820 = vand.u32 %v31, 4294901760
  %821 = vmatmul.mubr.f32.gmra.mrb[0].mxu0 %v820
  %v822 = vpop.f32.mrb[0].mxu0
  %v823 = vadd.f32 %v655, %v822
  %v824 = vpop.f32.mrb[0].mxu0
  %v825 = vadd.f32 %v657, %v824
  %826 = vdwg.mxu0
  %v827 = vand.u32 %v33, 4294901760
  %828 = vmatprep.subr.mxu0 %v827
  %v829 = vand.u32 %v32, 4294901760
  %830 = vmatpush1.msra.mxu0 %v829
  %v831 = vand.u32 %v35, 4294901760
  %832 = vmatprep.subr.mxu0 %v831
  %v833 = vand.u32 %v34, 4294901760
  %834 = vmatpush1.msra.mxu0 %v833
  %v835 = vand.u32 %v37, 4294901760
  %836 = vmatprep.subr.mxu0 %v835
  %v837 = vand.u32 %v36, 4294901760
  %838 = vmatpush1.msra.mxu0 %v837
  %v839 = vand.u32 %v39, 4294901760
  %840 = vmatprep.subr.mxu0 %v839
  %v841 = vand.u32 %v38, 4294901760
  %842 = vmatpush1.msra.mxu0 %v841
  %v843 = vand.u32 %v41, 4294901760
  %844 = vmatprep.subr.mxu0 %v843
  %v845 = vand.u32 %v40, 4294901760
  %846 = vmatpush1.msra.mxu0 %v845
  %v847 = vand.u32 %v43, 4294901760
  %848 = vmatprep.subr.mxu0 %v847
  %v849 = vand.u32 %v42, 4294901760
  %850 = vmatpush1.msra.mxu0 %v849
  %v851 = vand.u32 %v45, 4294901760
  %852 = vmatprep.subr.mxu0 %v851
  %v853 = vand.u32 %v44, 4294901760
  %854 = vmatpush1.msra.mxu0 %v853
  %v855 = vand.u32 %v47, 4294901760
  %856 = vmatprep.subr.mxu0 %v855
  %v857 = vand.u32 %v46, 4294901760
  %858 = vmatpush1.msra.mxu0 %v857
  %v859 = vand.u32 %v49, 4294901760
  %860 = vmatprep.subr.mxu0 %v859
  %v861 = vand.u32 %v48, 4294901760
  %862 = vmatpush1.msra.mxu0 %v861
  %v863 = vand.u32 %v51, 4294901760
  %864 = vmatprep.subr.mxu0 %v863
  %v865 = vand.u32 %v50, 4294901760
  %866 = vmatpush1.msra.mxu0 %v865
  %v867 = vand.u32 %v53, 4294901760
  %868 = vmatprep.subr.mxu0 %v867
  %v869 = vand.u32 %v52, 4294901760
  %870 = vmatpush1.msra.mxu0 %v869
  %v871 = vand.u32 %v55, 4294901760
  %872 = vmatprep.subr.mxu0 %v871
  %v873 = vand.u32 %v54, 4294901760
  %874 = vmatpush1.msra.mxu0 %v873
  %v875 = vand.u32 %v57, 4294901760
  %876 = vmatprep.subr.mxu0 %v875
  %v877 = vand.u32 %v56, 4294901760
  %878 = vmatpush1.msra.mxu0 %v877
  %v879 = vand.u32 %v59, 4294901760
  %880 = vmatprep.subr.mxu0 %v879
  %v881 = vand.u32 %v58, 4294901760
  %882 = vmatpush1.msra.mxu0 %v881
  %v883 = vand.u32 %v61, 4294901760
  %884 = vmatprep.subr.mxu0 %v883
  %v885 = vand.u32 %v60, 4294901760
  %886 = vmatpush1.msra.mxu0 %v885
  %v887 = vand.u32 %v63, 4294901760
  %888 = vmatprep.subr.mxu0 %v887
  %v889 = vand.u32 %v62, 4294901760
  %890 = vmatpush1.msra.mxu0 %v889
  %891 = vmatprep.subr.mxu0 0.0
  %892 = vmatpush1.msra.mxu0 0.0
  %893 = vmatprep.subr.mxu0 0.0
  %894 = vmatpush1.msra.mxu0 0.0
  %895 = vmatprep.subr.mxu0 0.0
  %896 = vmatpush1.msra.mxu0 0.0
  %897 = vmatprep.subr.mxu0 0.0
  %898 = vmatpush1.msra.mxu0 0.0
  %899 = vmatprep.subr.mxu0 0.0
  %900 = vmatpush1.msra.mxu0 0.0
  %901 = vmatprep.subr.mxu0 0.0
  %902 = vmatpush1.msra.mxu0 0.0
  %903 = vmatprep.subr.mxu0 0.0
  %904 = vmatpush1.msra.mxu0 0.0
  %905 = vmatprep.subr.mxu0 0.0
  %906 = vmatpush1.msra.mxu0 0.0
  %907 = vmatprep.subr.mxu0 0.0
  %908 = vmatpush1.msra.mxu0 0.0
  %909 = vmatprep.subr.mxu0 0.0
  %910 = vmatpush1.msra.mxu0 0.0
  %911 = vmatprep.subr.mxu0 0.0
  %912 = vmatpush1.msra.mxu0 0.0
  %913 = vmatprep.subr.mxu0 0.0
  %914 = vmatpush1.msra.mxu0 0.0
  %915 = vmatprep.subr.mxu0 0.0
  %916 = vmatpush1.msra.mxu0 0.0
  %917 = vmatprep.subr.mxu0 0.0
  %918 = vmatpush1.msra.mxu0 0.0
  %919 = vmatprep.subr.mxu0 0.0
  %920 = vmatpush1.msra.mxu0 0.0
  %921 = vmatprep.subr.mxu0 0.0
  %922 = vmatpush1.msra.mxu0 0.0
  %923 = vmatprep.mubr.f32.mxu0 0.0
  %v924 = vand.u32 %v31, 4294901760
  %925 = vmatmul.mubr.f32.gmra.mrb[0].mxu0 %v924
  %v926 = vpop.f32.mrb[0].mxu0
  %v927 = vadd.f32 %v823, %v926
  %v928 = vpop.f32.mrb[0].mxu0
  %v929 = vadd.f32 %v825, %v928
  %930 = vdwg.mxu0
  %v931 = vmax.f32 %v927, 0.0
  %v932 = vmax.f32 %v929, 0.0
  %v935 = vcombine.low %v931, %v932
  %937 = vst [vmem:[%s8] sm:$0xff] %v935
  %v938 = vld [vmem:[%s3] sm:$0xff]
  %v939 = vld [vmem:[%s4] sm:$0xff]
  %v940 = vld [vmem:[%s4 + $0x8] sm:$0xff]
  %v941 = vld [vmem:[%s4 + $0x10] sm:$0xff]
  %v942 = vld [vmem:[%s4 + $0x18] sm:$0xff]
  %v943 = vld [vmem:[%s4 + $0x20] sm:$0xff]
  %v944 = vld [vmem:[%s4 + $0x28] sm:$0xff]
  %v945 = vld [vmem:[%s4 + $0x30] sm:$0xff]
  %v946 = vld [vmem:[%s4 + $0x38] sm:$0xff]
  %v947 = vld [vmem:[%s4 + $0x40] sm:$0xff]
  %v948 = vld [vmem:[%s4 + $0x48] sm:$0xff]
  %v949 = vld [vmem:[%s4 + $0x50] sm:$0xff]
  %v950 = vld [vmem:[%s4 + $0x58] sm:$0xff]
  %v951 = vld [vmem:[%s4 + $0x60] sm:$0xff]
  %v952 = vld [vmem:[%s4 + $0x68] sm:$0xff]
  %v953 = vld [vmem:[%s4 + $0x70] sm:$0xff]
  %v954 = vld [vmem:[%s4 + $0x78] sm:$0xff]
  %v955 = vld [vmem:[%s5] sm:$0xf]
  %956 = vmatprep.subr.mxu0 0.0
  %v957 = vand.u32 %v939, 4294901760
  %958 = vmatpush1.msra.mxu0 %v957
  %959 = vmatprep.subr.mxu0 0.0
  %v960 = vand.u32 %v940, 4294901760
  %961 = vmatpush1.msra.mxu0 %v960
  %962 = vmatprep.subr.mxu0 0.0
  %v963 = vand.u32 %v941, 4294901760
  %964 = vmatpush1.msra.mxu0 %v963
  %965 = vmatprep.subr.mxu0 0.0
  %v966 = vand.u32 %v942, 4294901760
  %967 = vmatpush1.msra.mxu0 %v966
  %968 = vmatprep.subr.mxu0 0.0
  %v969 = vand.u32 %v943, 4294901760
  %970 = vmatpush1.msra.mxu0 %v969
  %971 = vmatprep.subr.mxu0 0.0
  %v972 = vand.u32 %v944, 4294901760
  %973 = vmatpush1.msra.mxu0 %v972
  %974 = vmatprep.subr.mxu0 0.0
  %v975 = vand.u32 %v945, 4294901760
  %976 = vmatpush1.msra.mxu0 %v975
  %977 = vmatprep.subr.mxu0 0.0
  %v978 = vand.u32 %v946, 4294901760
  %979 = vmatpush1.msra.mxu0 %v978
  %980 = vmatprep.subr.mxu0 0.0
  %v981 = vand.u32 %v947, 4294901760
  %982 = vmatpush1.msra.mxu0 %v981
  %983 = vmatprep.subr.mxu0 0.0
  %v984 = vand.u32 %v948, 4294901760
  %985 = vmatpush1.msra.mxu0 %v984
  %986 = vmatprep.subr.mxu0 0.0
  %v987 = vand.u32 %v949, 4294901760
  %988 = vmatpush1.msra.mxu0 %v987
  %989 = vmatprep.subr.mxu0 0.0
  %v990 = vand.u32 %v950, 4294901760
  %991 = vmatpush1.msra.mxu0 %v990
  %992 = vmatprep.subr.mxu0 0.0
  %v993 = vand.u32 %v951, 4294901760
  %994 = vmatpush1.msra.mxu0 %v993
  %995 = vmatprep.subr.mxu0 0.0
  %v996 = vand.u32 %v952, 4294901760
  %997 = vmatpush1.msra.mxu0 %v996
  %998 = vmatprep.subr.mxu0 0.0
  %v999 = vand.u32 %v953, 4294901760
  %1000 = vmatpush1.msra.mxu0 %v999
  %1001 = vmatprep.subr.mxu0 0.0
  %v1002 = vand.u32 %v954, 4294901760
  %1003 = vmatpush1.msra.mxu0 %v1002
  %1004 = vmatprep.subr.mxu0 0.0
  %1005 = vmatpush1.msra.mxu0 0.0
  %1006 = vmatprep.subr.mxu0 0.0
  %1007 = vmatpush1.msra.mxu0 0.0
  %1008 = vmatprep.subr.mxu0 0.0
  %1009 = vmatpush1.msra.mxu0 0.0
  %1010 = vmatprep.subr.mxu0 0.0
  %1011 = vmatpush1.msra.mxu0 0.0
  %1012 = vmatprep.subr.mxu0 0.0
  %1013 = vmatpush1.msra.mxu0 0.0
  %1014 = vmatprep.subr.mxu0 0.0
  %1015 = vmatpush1.msra.mxu0 0.0
  %1016 = vmatprep.subr.mxu0 0.0
  %1017 = vmatpush1.msra.mxu0 0.0
  %1018 = vmatprep.subr.mxu0 0.0
  %1019 = vmatpush1.msra.mxu0 0.0
  %1020 = vmatprep.subr.mxu0 0.0
  %1021 = vmatpush1.msra.mxu0 0.0
  %1022 = vmatprep.subr.mxu0 0.0
  %1023 = vmatpush1.msra.mxu0 0.0
  %1024 = vmatprep.subr.mxu0 0.0
  %1025 = vmatpush1.msra.mxu0 0.0
  %1026 = vmatprep.subr.mxu0 0.0
  %1027 = vmatpush1.msra.mxu0 0.0
  %1028 = vmatprep.subr.mxu0 0.0
  %1029 = vmatpush1.msra.mxu0 0.0
  %1030 = vmatprep.subr.mxu0 0.0
  %1031 = vmatpush1.msra.mxu0 0.0
  %1032 = vmatprep.subr.mxu0 0.0
  %1033 = vmatpush1.msra.mxu0 0.0
  %1034 = vmatprep.subr.mxu0 0.0
  %1035 = vmatpush1.msra.mxu0 0.0
  %1036 = vmatprep.mubr.f32.mxu0 0.0
  %v1037 = vand.u32 %v938, 4294901760
  %v1038 = vsub.f32 %v938, %v1037
  %v1039 = vand.u32 %v1038, 4294901760
  %v1040 = vsub.f32 %v1038, %v1039
  %v1041 = vand.u32 %v1040, 4294901760
  %1042 = vmatmul.mubr.f32.gmra.mrb[0].mxu0 %v1041
  %v1043 = vpop.f32.mrb[0].mxu0
  %v1044 = vadd.f32 0.0, %v1043
  %v1045 = vpop.f32.mrb[0].mxu0
  %1046 = vdwg.mxu0
  %1047 = vmatprep.subr.mxu0 0.0
  %v1048 = vand.u32 %v939, 4294901760
  %v1049 = vsub.f32 %v939, %v1048
  %v1050 = vand.u32 %v1049, 4294901760
  %v1051 = vsub.f32 %v1049, %v1050
  %v1052 = vand.u32 %v1051, 4294901760
  %1053 = vmatpush1.msra.mxu0 %v1052
  %1054 = vmatprep.subr.mxu0 0.0
  %v1055 = vand.u32 %v940, 4294901760
  %v1056 = vsub.f32 %v940, %v1055
  %v1057 = vand.u32 %v1056, 4294901760
  %v1058 = vsub.f32 %v1056, %v1057
  %v1059 = vand.u32 %v1058, 4294901760
  %1060 = vmatpush1.msra.mxu0 %v1059
  %1061 = vmatprep.subr.mxu0 0.0
  %v1062 = vand.u32 %v941, 4294901760
  %v1063 = vsub.f32 %v941, %v1062
  %v1064 = vand.u32 %v1063, 4294901760
  %v1065 = vsub.f32 %v1063, %v1064
  %v1066 = vand.u32 %v1065, 4294901760
  %1067 = vmatpush1.msra.mxu0 %v1066
  %1068 = vmatprep.subr.mxu0 0.0
  %v1069 = vand.u32 %v942, 4294901760
  %v1070 = vsub.f32 %v942, %v1069
  %v1071 = vand.u32 %v1070, 4294901760
  %v1072 = vsub.f32 %v1070, %v1071
  %v1073 = vand.u32 %v1072, 4294901760
  %1074 = vmatpush1.msra.mxu0 %v1073
  %1075 = vmatprep.subr.mxu0 0.0
  %v1076 = vand.u32 %v943, 4294901760
  %v1077 = vsub.f32 %v943, %v1076
  %v1078 = vand.u32 %v1077, 4294901760
  %v1079 = vsub.f32 %v1077, %v1078
  %v1080 = vand.u32 %v1079, 4294901760
  %1081 = vmatpush1.msra.mxu0 %v1080
  %1082 = vmatprep.subr.mxu0 0.0
  %v1083 = vand.u32 %v944, 4294901760
  %v1084 = vsub.f32 %v944, %v1083
  %v1085 = vand.u32 %v1084, 4294901760
  %v1086 = vsub.f32 %v1084, %v1085
  %v1087 = vand.u32 %v1086, 4294901760
  %1088 = vmatpush1.msra.mxu0 %v1087
  %1089 = vmatprep.subr.mxu0 0.0
  %v1090 = vand.u32 %v945, 4294901760
  %v1091 = vsub.f32 %v945, %v1090
  %v1092 = vand.u32 %v1091, 4294901760
  %v1093 = vsub.f32 %v1091, %v1092
  %v1094 = vand.u32 %v1093, 4294901760
  %1095 = vmatpush1.msra.mxu0 %v1094
  %1096 = vmatprep.subr.mxu0 0.0
  %v1097 = vand.u32 %v946, 4294901760
  %v1098 = vsub.f32 %v946, %v1097
  %v1099 = vand.u32 %v1098, 4294901760
  %v1100 = vsub.f32 %v1098, %v1099
  %v1101 = vand.u32 %v1100, 4294901760
  %1102 = vmatpush1.msra.mxu0 %v1101
  %1103 = vmatprep.subr.mxu0 0.0
  %v1104 = vand.u32 %v947, 4294901760
  %v1105 = vsub.f32 %v947, %v1104
  %v1106 = vand.u32 %v1105, 4294901760
  %v1107 = vsub.f32 %v1105, %v1106
  %v1108 = vand.u32 %v1107, 4294901760
  %1109 = vmatpush1.msra.mxu0 %v1108
  %1110 = vmatprep.subr.mxu0 0.0
  %v1111 = vand.u32 %v948, 4294901760
  %v1112 = vsub.f32 %v948, %v1111
  %v1113 = vand.u32 %v1112, 4294901760
  %v1114 = vsub.f32 %v1112, %v1113
  %v1115 = vand.u32 %v1114, 4294901760
  %1116 = vmatpush1.msra.mxu0 %v1115
  %1117 = vmatprep.subr.mxu0 0.0
  %v1118 = vand.u32 %v949, 4294901760
  %v1119 = vsub.f32 %v949, %v1118
  %v1120 = vand.u32 %v1119, 4294901760
  %v1121 = vsub.f32 %v1119, %v1120
  %v1122 = vand.u32 %v1121, 4294901760
  %1123 = vmatpush1.msra.mxu0 %v1122
  %1124 = vmatprep.subr.mxu0 0.0
  %v1125 = vand.u32 %v950, 4294901760
  %v1126 = vsub.f32 %v950, %v1125
  %v1127 = vand.u32 %v1126, 4294901760
  %v1128 = vsub.f32 %v1126, %v1127
  %v1129 = vand.u32 %v1128, 4294901760
  %1130 = vmatpush1.msra.mxu0 %v1129
  %1131 = vmatprep.subr.mxu0 0.0
  %v1132 = vand.u32 %v951, 4294901760
  %v1133 = vsub.f32 %v951, %v1132
  %v1134 = vand.u32 %v1133, 4294901760
  %v1135 = vsub.f32 %v1133, %v1134
  %v1136 = vand.u32 %v1135, 4294901760
  %1137 = vmatpush1.msra.mxu0 %v1136
  %1138 = vmatprep.subr.mxu0 0.0
  %v1139 = vand.u32 %v952, 4294901760
  %v1140 = vsub.f32 %v952, %v1139
  %v1141 = vand.u32 %v1140, 4294901760
  %v1142 = vsub.f32 %v1140, %v1141
  %v1143 = vand.u32 %v1142, 4294901760
  %1144 = vmatpush1.msra.mxu0 %v1143
  %1145 = vmatprep.subr.mxu0 0.0
  %v1146 = vand.u32 %v953, 4294901760
  %v1147 = vsub.f32 %v953, %v1146
  %v1148 = vand.u32 %v1147, 4294901760
  %v1149 = vsub.f32 %v1147, %v1148
  %v1150 = vand.u32 %v1149, 4294901760
  %1151 = vmatpush1.msra.mxu0 %v1150
  %1152 = vmatprep.subr.mxu0 0.0
  %v1153 = vand.u32 %v954, 4294901760
  %v1154 = vsub.f32 %v954, %v1153
  %v1155 = vand.u32 %v1154, 4294901760
  %v1156 = vsub.f32 %v1154, %v1155
  %v1157 = vand.u32 %v1156, 4294901760
  %1158 = vmatpush1.msra.mxu0 %v1157
  %1159 = vmatprep.subr.mxu0 0.0
  %1160 = vmatpush1.msra.mxu0 0.0
  %1161 = vmatprep.subr.mxu0 0.0
  %1162 = vmatpush1.msra.mxu0 0.0
  %1163 = vmatprep.subr.mxu0 0.0
  %1164 = vmatpush1.msra.mxu0 0.0
  %1165 = vmatprep.subr.mxu0 0.0
  %1166 = vmatpush1.msra.mxu0 0.0
  %1167 = vmatprep.subr.mxu0 0.0
  %1168 = vmatpush1.msra.mxu0 0.0
  %1169 = vmatprep.subr.mxu0 0.0
  %1170 = vmatpush1.msra.mxu0 0.0
  %1171 = vmatprep.subr.mxu0 0.0
  %1172 = vmatpush1.msra.mxu0 0.0
  %1173 = vmatprep.subr.mxu0 0.0
  %1174 = vmatpush1.msra.mxu0 0.0
  %1175 = vmatprep.subr.mxu0 0.0
  %1176 = vmatpush1.msra.mxu0 0.0
  %1177 = vmatprep.subr.mxu0 0.0
  %1178 = vmatpush1.msra.mxu0 0.0
  %1179 = vmatprep.subr.mxu0 0.0
  %1180 = vmatpush1.msra.mxu0 0.0
  %1181 = vmatprep.subr.mxu0 0.0
  %1182 = vmatpush1.msra.mxu0 0.0
  %1183 = vmatprep.subr.mxu0 0.0
  %1184 = vmatpush1.msra.mxu0 0.0
  %1185 = vmatprep.subr.mxu0 0.0
  %1186 = vmatpush1.msra.mxu0 0.0
  %1187 = vmatprep.subr.mxu0 0.0
  %1188 = vmatpush1.msra.mxu0 0.0
  %1189 = vmatprep.subr.mxu0 0.0
  %1190 = vmatpush1.msra.mxu0 0.0
  %1191 = vmatprep.mubr.f32.mxu0 0.0
  %v1192 = vand.u32 %v938, 4294901760
  %1193 = vmatmul.mubr.f32.gmra.mrb[0].mxu0 %v1192
  %v1194 = vpop.f32.mrb[0].mxu0
  %v1195 = vadd.f32 %v1044, %v1194
  %v1196 = vpop.f32.mrb[0].mxu0
  %1197 = vdwg.mxu0
  %1198 = vmatprep.subr.mxu0 0.0
  %v1199 = vand.u32 %v939, 4294901760
  %v1200 = vsub.f32 %v939, %v1199
  %1201 = vmatpush1.msra.mxu0 %v1200
  %1202 = vmatprep.subr.mxu0 0.0
  %v1203 = vand.u32 %v940, 4294901760
  %v1204 = vsub.f32 %v940, %v1203
  %1205 = vmatpush1.msra.mxu0 %v1204
  %1206 = vmatprep.subr.mxu0 0.0
  %v1207 = vand.u32 %v941, 4294901760
  %v1208 = vsub.f32 %v941, %v1207
  %1209 = vmatpush1.msra.mxu0 %v1208
  %1210 = vmatprep.subr.mxu0 0.0
  %v1211 = vand.u32 %v942, 4294901760
  %v1212 = vsub.f32 %v942, %v1211
  %1213 = vmatpush1.msra.mxu0 %v1212
  %1214 = vmatprep.subr.mxu0 0.0
  %v1215 = vand.u32 %v943, 4294901760
  %v1216 = vsub.f32 %v943, %v1215
  %1217 = vmatpush1.msra.mxu0 %v1216
  %1218 = vmatprep.subr.mxu0 0.0
  %v1219 = vand.u32 %v944, 4294901760
  %v1220 = vsub.f32 %v944, %v1219
  %1221 = vmatpush1.msra.mxu0 %v1220
  %1222 = vmatprep.subr.mxu0 0.0
  %v1223 = vand.u32 %v945, 4294901760
  %v1224 = vsub.f32 %v945, %v1223
  %1225 = vmatpush1.msra.mxu0 %v1224
  %1226 = vmatprep.subr.mxu0 0.0
  %v1227 = vand.u32 %v946, 4294901760
  %v1228 = vsub.f32 %v946, %v1227
  %1229 = vmatpush1.msra.mxu0 %v1228
  %1230 = vmatprep.subr.mxu0 0.0
  %v1231 = vand.u32 %v947, 4294901760
  %v1232 = vsub.f32 %v947, %v1231
  %1233 = vmatpush1.msra.mxu0 %v1232
  %1234 = vmatprep.subr.mxu0 0.0
  %v1235 = vand.u32 %v948, 4294901760
  %v1236 = vsub.f32 %v948, %v1235
  %1237 = vmatpush1.msra.mxu0 %v1236
  %1238 = vmatprep.subr.mxu0 0.0
  %v1239 = vand.u32 %v949, 4294901760
  %v1240 = vsub.f32 %v949, %v1239
  %1241 = vmatpush1.msra.mxu0 %v1240
  %1242 = vmatprep.subr.mxu0 0.0
  %v1243 = vand.u32 %v950, 4294901760
  %v1244 = vsub.f32 %v950, %v1243
  %1245 = vmatpush1.msra.mxu0 %v1244
  %1246 = vmatprep.subr.mxu0 0.0
  %v1247 = vand.u32 %v951, 4294901760
  %v1248 = vsub.f32 %v951, %v1247
  %1249 = vmatpush1.msra.mxu0 %v1248
  %1250 = vmatprep.subr.mxu0 0.0
  %v1251 = vand.u32 %v952, 4294901760
  %v1252 = vsub.f32 %v952, %v1251
  %1253 = vmatpush1.msra.mxu0 %v1252
  %1254 = vmatprep.subr.mxu0 0.0
  %v1255 = vand.u32 %v953, 4294901760
  %v1256 = vsub.f32 %v953, %v1255
  %1257 = vmatpush1.msra.mxu0 %v1256
  %1258 = vmatprep.subr.mxu0 0.0
  %v1259 = vand.u32 %v954, 4294901760
  %v1260 = vsub.f32 %v954, %v1259
  %1261 = vmatpush1.msra.mxu0 %v1260
  %1262 = vmatprep.subr.mxu0 0.0
  %1263 = vmatpush1.msra.mxu0 0.0
  %1264 = vmatprep.subr.mxu0 0.0
  %1265 = vmatpush1.msra.mxu0 0.0
  %1266 = vmatprep.subr.mxu0 0.0
  %1267 = vmatpush1.msra.mxu0 0.0
  %1268 = vmatprep.subr.mxu0 0.0
  %1269 = vmatpush1.msra.mxu0 0.0
  %1270 = vmatprep.subr.mxu0 0.0
  %1271 = vmatpush1.msra.mxu0 0.0
  %1272 = vmatprep.subr.mxu0 0.0
  %1273 = vmatpush1.msra.mxu0 0.0
  %1274 = vmatprep.subr.mxu0 0.0
  %1275 = vmatpush1.msra.mxu0 0.0
  %1276 = vmatprep.subr.mxu0 0.0
  %1277 = vmatpush1.msra.mxu0 0.0
  %1278 = vmatprep.subr.mxu0 0.0
  %1279 = vmatpush1.msra.mxu0 0.0
  %1280 = vmatprep.subr.mxu0 0.0
  %1281 = vmatpush1.msra.mxu0 0.0
  %1282 = vmatprep.subr.mxu0 0.0
  %1283 = vmatpush1.msra.mxu0 0.0
  %1284 = vmatprep.subr.mxu0 0.0
  %1285 = vmatpush1.msra.mxu0 0.0
  %1286 = vmatprep.subr.mxu0 0.0
  %1287 = vmatpush1.msra.mxu0 0.0
  %1288 = vmatprep.subr.mxu0 0.0
  %1289 = vmatpush1.msra.mxu0 0.0
  %1290 = vmatprep.subr.mxu0 0.0
  %1291 = vmatpush1.msra.mxu0 0.0
  %1292 = vmatprep.subr.mxu0 0.0
  %1293 = vmatpush1.msra.mxu0 0.0
  %1294 = vmatprep.mubr.f32.mxu0 0.0
  %v1295 = vand.u32 %v938, 4294901760
  %v1296 = vsub.f32 %v938, %v1295
  %1297 = vmatmul.mubr.f32.gmra.mrb[0].mxu0 %v1296
  %v1298 = vpop.f32.mrb[0].mxu0
  %v1299 = vadd.f32 %v1195, %v1298
  %v1300 = vpop.f32.mrb[0].mxu0
  %1301 = vdwg.mxu0
  %1302 = vmatprep.subr.mxu0 0.0
  %v1303 = vand.u32 %v939, 4294901760
  %1304 = vmatpush1.msra.mxu0 %v1303
  %1305 = vmatprep.subr.mxu0 0.0
  %v1306 = vand.u32 %v940, 4294901760
  %1307 = vmatpush1.msra.mxu0 %v1306
  %1308 = vmatprep.subr.mxu0 0.0
  %v1309 = vand.u32 %v941, 4294901760
  %1310 = vmatpush1.msra.mxu0 %v1309
  %1311 = vmatprep.subr.mxu0 0.0
  %v1312 = vand.u32 %v942, 4294901760
  %1313 = vmatpush1.msra.mxu0 %v1312
  %1314 = vmatprep.subr.mxu0 0.0
  %v1315 = vand.u32 %v943, 4294901760
  %1316 = vmatpush1.msra.mxu0 %v1315
  %1317 = vmatprep.subr.mxu0 0.0
  %v1318 = vand.u32 %v944, 4294901760
  %1319 = vmatpush1.msra.mxu0 %v1318
  %1320 = vmatprep.subr.mxu0 0.0
  %v1321 = vand.u32 %v945, 4294901760
  %1322 = vmatpush1.msra.mxu0 %v1321
  %1323 = vmatprep.subr.mxu0 0.0
  %v1324 = vand.u32 %v946, 4294901760
  %1325 = vmatpush1.msra.mxu0 %v1324
  %1326 = vmatprep.subr.mxu0 0.0
  %v1327 = vand.u32 %v947, 4294901760
  %1328 = vmatpush1.msra.mxu0 %v1327
  %1329 = vmatprep.subr.mxu0 0.0
  %v1330 = vand.u32 %v948, 4294901760
  %1331 = vmatpush1.msra.mxu0 %v1330
  %1332 = vmatprep.subr.mxu0 0.0
  %v1333 = vand.u32 %v949, 4294901760
  %1334 = vmatpush1.msra.mxu0 %v1333
  %1335 = vmatprep.subr.mxu0 0.0
  %v1336 = vand.u32 %v950, 4294901760
  %1337 = vmatpush1.msra.mxu0 %v1336
  %1338 = vmatprep.subr.mxu0 0.0
  %v1339 = vand.u32 %v951, 4294901760
  %1340 = vmatpush1.msra.mxu0 %v1339
  %1341 = vmatprep.subr.mxu0 0.0
  %v1342 = vand.u32 %v952, 4294901760
  %1343 = vmatpush1.msra.mxu0 %v1342
  %1344 = vmatprep.subr.mxu0 0.0
  %v1345 = vand.u32 %v953, 4294901760
  %1346 = vmatpush1.msra.mxu0 %v1345
  %1347 = vmatprep.subr.mxu0 0.0
  %v1348 = vand.u32 %v954, 4294901760
  %1349 = vmatpush1.msra.mxu0 %v1348
  %1350 = vmatprep.subr.mxu0 0.0
  %1351 = vmatpush1.msra.mxu0 0.0
  %1352 = vmatprep.subr.mxu0 0.0
  %1353 = vmatpush1.msra.mxu0 0.0
  %1354 = vmatprep.subr.mxu0 0.0
  %1355 = vmatpush1.msra.mxu0 0.0
  %1356 = vmatprep.subr.mxu0 0.0
  %1357 = vmatpush1.msra.mxu0 0.0
  %1358 = vmatprep.subr.mxu0 0.0
  %1359 = vmatpush1.msra.mxu0 0.0
  %1360 = vmatprep.subr.mxu0 0.0
  %1361 = vmatpush1.msra.mxu0 0.0
  %1362 = vmatprep.subr.mxu0 0.0
  %1363 = vmatpush1.msra.mxu0 0.0
  %1364 = vmatprep.subr.mxu0 0.0
  %1365 = vmatpush1.msra.mxu0 0.0
  %1366 = vmatprep.subr.mxu0 0.0
  %1367 = vmatpush1.msra.mxu0 0.0
  %1368 = vmatprep.subr.mxu0 0.0
  %1369 = vmatpush1.msra.mxu0 0.0
  %1370 = vmatprep.subr.mxu0 0.0
  %1371 = vmatpush1.msra.mxu0 0.0
  %1372 = vmatprep.subr.mxu0 0.0
  %1373 = vmatpush1.msra.mxu0 0.0
  %1374 = vmatprep.subr.mxu0 0.0
  %1375 = vmatpush1.msra.mxu0 0.0
  %1376 = vmatprep.subr.mxu0 0.0
  %1377 = vmatpush1.msra.mxu0 0.0
  %1378 = vmatprep.subr.mxu0 0.0
  %1379 = vmatpush1.msra.mxu0 0.0
  %1380 = vmatprep.subr.mxu0 0.0
  %1381 = vmatpush1.msra.mxu0 0.0
  %1382 = vmatprep.mubr.f32.mxu0 0.0
  %v1383 = vand.u32 %v938, 4294901760
  %v1384 = vsub.f32 %v938, %v1383
  %v1385 = vand.u32 %v1384, 4294901760
  %1386 = vmatmul.mubr.f32.gmra.mrb[0].mxu0 %v1385
  %v1387 = vpop.f32.mrb[0].mxu0
  %v1388 = vadd.f32 %v1299, %v1387
  %v1389 = vpop.f32.mrb[0].mxu0
  %1390 = vdwg.mxu0
  %1391 = vmatprep.subr.mxu0 0.0
  %v1392 = vand.u32 %v939, 4294901760
  %v1393 = vsub.f32 %v939, %v1392
  %v1394 = vand.u32 %v1393, 4294901760
  %1395 = vmatpush1.msra.mxu0 %v1394
  %1396 = vmatprep.subr.mxu0 0.0
  %v1397 = vand.u32 %v940, 4294901760
  %v1398 = vsub.f32 %v940, %v1397
  %v1399 = vand.u32 %v1398, 4294901760
  %1400 = vmatpush1.msra.mxu0 %v1399
  %1401 = vmatprep.subr.mxu0 0.0
  %v1402 = vand.u32 %v941, 4294901760
  %v1403 = vsub.f32 %v941, %v1402
  %v1404 = vand.u32 %v1403, 4294901760
  %1405 = vmatpush1.msra.mxu0 %v1404
  %1406 = vmatprep.subr.mxu0 0.0
  %v1407 = vand.u32 %v942, 4294901760
  %v1408 = vsub.f32 %v942, %v1407
  %v1409 = vand.u32 %v1408, 4294901760
  %1410 = vmatpush1.msra.mxu0 %v1409
  %1411 = vmatprep.subr.mxu0 0.0
  %v1412 = vand.u32 %v943, 4294901760
  %v1413 = vsub.f32 %v943, %v1412
  %v1414 = vand.u32 %v1413, 4294901760
  %1415 = vmatpush1.msra.mxu0 %v1414
  %1416 = vmatprep.subr.mxu0 0.0
  %v1417 = vand.u32 %v944, 4294901760
  %v1418 = vsub.f32 %v944, %v1417
  %v1419 = vand.u32 %v1418, 4294901760
  %1420 = vmatpush1.msra.mxu0 %v1419
  %1421 = vmatprep.subr.mxu0 0.0
  %v1422 = vand.u32 %v945, 4294901760
  %v1423 = vsub.f32 %v945, %v1422
  %v1424 = vand.u32 %v1423, 4294901760
  %1425 = vmatpush1.msra.mxu0 %v1424
  %1426 = vmatprep.subr.mxu0 0.0
  %v1427 = vand.u32 %v946, 4294901760
  %v1428 = vsub.f32 %v946, %v1427
  %v1429 = vand.u32 %v1428, 4294901760
  %1430 = vmatpush1.msra.mxu0 %v1429
  %1431 = vmatprep.subr.mxu0 0.0
  %v1432 = vand.u32 %v947, 4294901760
  %v1433 = vsub.f32 %v947, %v1432
  %v1434 = vand.u32 %v1433, 4294901760
  %1435 = vmatpush1.msra.mxu0 %v1434
  %1436 = vmatprep.subr.mxu0 0.0
  %v1437 = vand.u32 %v948, 4294901760
  %v1438 = vsub.f32 %v948, %v1437
  %v1439 = vand.u32 %v1438, 4294901760
  %1440 = vmatpush1.msra.mxu0 %v1439
  %1441 = vmatprep.subr.mxu0 0.0
  %v1442 = vand.u32 %v949, 4294901760
  %v1443 = vsub.f32 %v949, %v1442
  %v1444 = vand.u32 %v1443, 4294901760
  %1445 = vmatpush1.msra.mxu0 %v1444
  %1446 = vmatprep.subr.mxu0 0.0
  %v1447 = vand.u32 %v950, 4294901760
  %v1448 = vsub.f32 %v950, %v1447
  %v1449 = vand.u32 %v1448, 4294901760
  %1450 = vmatpush1.msra.mxu0 %v1449
  %1451 = vmatprep.subr.mxu0 0.0
  %v1452 = vand.u32 %v951, 4294901760
  %v1453 = vsub.f32 %v951, %v1452
  %v1454 = vand.u32 %v1453, 4294901760
  %1455 = vmatpush1.msra.mxu0 %v1454
  %1456 = vmatprep.subr.mxu0 0.0
  %v1457 = vand.u32 %v952, 4294901760
  %v1458 = vsub.f32 %v952, %v1457
  %v1459 = vand.u32 %v1458, 4294901760
  %1460 = vmatpush1.msra.mxu0 %v1459
  %1461 = vmatprep.subr.mxu0 0.0
  %v1462 = vand.u32 %v953, 4294901760
  %v1463 = vsub.f32 %v953, %v1462
  %v1464 = vand.u32 %v1463, 4294901760
  %1465 = vmatpush1.msra.mxu0 %v1464
  %1466 = vmatprep.subr.mxu0 0.0
  %v1467 = vand.u32 %v954, 4294901760
  %v1468 = vsub.f32 %v954, %v1467
  %v1469 = vand.u32 %v1468, 4294901760
  %1470 = vmatpush1.msra.mxu0 %v1469
  %1471 = vmatprep.subr.mxu0 0.0
  %1472 = vmatpush1.msra.mxu0 0.0
  %1473 = vmatprep.subr.mxu0 0.0
  %1474 = vmatpush1.msra.mxu0 0.0
  %1475 = vmatprep.subr.mxu0 0.0
  %1476 = vmatpush1.msra.mxu0 0.0
  %1477 = vmatprep.subr.mxu0 0.0
  %1478 = vmatpush1.msra.mxu0 0.0
  %1479 = vmatprep.subr.mxu0 0.0
  %1480 = vmatpush1.msra.mxu0 0.0
  %1481 = vmatprep.subr.mxu0 0.0
  %1482 = vmatpush1.msra.mxu0 0.0
  %1483 = vmatprep.subr.mxu0 0.0
  %1484 = vmatpush1.msra.mxu0 0.0
  %1485 = vmatprep.subr.mxu0 0.0
  %1486 = vmatpush1.msra.mxu0 0.0
  %1487 = vmatprep.subr.mxu0 0.0
  %1488 = vmatpush1.msra.mxu0 0.0
  %1489 = vmatprep.subr.mxu0 0.0
  %1490 = vmatpush1.msra.mxu0 0.0
  %1491 = vmatprep.subr.mxu0 0.0
  %1492 = vmatpush1.msra.mxu0 0.0
  %1493 = vmatprep.subr.mxu0 0.0
  %1494 = vmatpush1.msra.mxu0 0.0
  %1495 = vmatprep.subr.mxu0 0.0
  %1496 = vmatpush1.msra.mxu0 0.0
  %1497 = vmatprep.subr.mxu0 0.0
  %1498 = vmatpush1.msra.mxu0 0.0
  %1499 = vmatprep.subr.mxu0 0.0
  %1500 = vmatpush1.msra.mxu0 0.0
  %1501 = vmatprep.subr.mxu0 0.0
  %1502 = vmatpush1.msra.mxu0 0.0
  %1503 = vmatprep.mubr.f32.mxu0 0.0
  %v1504 = vand.u32 %v938, 4294901760
  %1505 = vmatmul.mubr.f32.gmra.mrb[0].mxu0 %v1504
  %v1506 = vpop.f32.mrb[0].mxu0
  %v1507 = vadd.f32 %v1388, %v1506
  %v1508 = vpop.f32.mrb[0].mxu0
  %1509 = vdwg.mxu0
  %1510 = vmatprep.subr.mxu0 0.0
  %v1511 = vand.u32 %v939, 4294901760
  %1512 = vmatpush1.msra.mxu0 %v1511
  %1513 = vmatprep.subr.mxu0 0.0
  %v1514 = vand.u32 %v940, 4294901760
  %1515 = vmatpush1.msra.mxu0 %v1514
  %1516 = vmatprep.subr.mxu0 0.0
  %v1517 = vand.u32 %v941, 4294901760
  %1518 = vmatpush1.msra.mxu0 %v1517
  %1519 = vmatprep.subr.mxu0 0.0
  %v1520 = vand.u32 %v942, 4294901760
  %1521 = vmatpush1.msra.mxu0 %v1520
  %1522 = vmatprep.subr.mxu0 0.0
  %v1523 = vand.u32 %v943, 4294901760
  %1524 = vmatpush1.msra.mxu0 %v1523
  %1525 = vmatprep.subr.mxu0 0.0
  %v1526 = vand.u32 %v944, 4294901760
  %1527 = vmatpush1.msra.mxu0 %v1526
  %1528 = vmatprep.subr.mxu0 0.0
  %v1529 = vand.u32 %v945, 4294901760
  %1530 = vmatpush1.msra.mxu0 %v1529
  %1531 = vmatprep.subr.mxu0 0.0
  %v1532 = vand.u32 %v946, 4294901760
  %1533 = vmatpush1.msra.mxu0 %v1532
  %1534 = vmatprep.subr.mxu0 0.0
  %v1535 = vand.u32 %v947, 4294901760
  %1536 = vmatpush1.msra.mxu0 %v1535
  %1537 = vmatprep.subr.mxu0 0.0
  %v1538 = vand.u32 %v948, 4294901760
  %1539 = vmatpush1.msra.mxu0 %v1538
  %1540 = vmatprep.subr.mxu0 0.0
  %v1541 = vand.u32 %v949, 4294901760
  %1542 = vmatpush1.msra.mxu0 %v1541
  %1543 = vmatprep.subr.mxu0 0.0
  %v1544 = vand.u32 %v950, 4294901760
  %1545 = vmatpush1.msra.mxu0 %v1544
  %1546 = vmatprep.subr.mxu0 0.0
  %v1547 = vand.u32 %v951, 4294901760
  %1548 = vmatpush1.msra.mxu0 %v1547
  %1549 = vmatprep.subr.mxu0 0.0
  %v1550 = vand.u32 %v952, 4294901760
  %1551 = vmatpush1.msra.mxu0 %v1550
  %1552 = vmatprep.subr.mxu0 0.0
  %v1553 = vand.u32 %v953, 4294901760
  %1554 = vmatpush1.msra.mxu0 %v1553
  %1555 = vmatprep.subr.mxu0 0.0
  %v1556 = vand.u32 %v954, 4294901760
  %1557 = vmatpush1.msra.mxu0 %v1556
  %1558 = vmatprep.subr.mxu0 0.0
  %1559 = vmatpush1.msra.mxu0 0.0
  %1560 = vmatprep.subr.mxu0 0.0
  %1561 = vmatpush1.msra.mxu0 0.0
  %1562 = vmatprep.subr.mxu0 0.0
  %1563 = vmatpush1.msra.mxu0 0.0
  %1564 = vmatprep.subr.mxu0 0.0
  %1565 = vmatpush1.msra.mxu0 0.0
  %1566 = vmatprep.subr.mxu0 0.0
  %1567 = vmatpush1.msra.mxu0 0.0
  %1568 = vmatprep.subr.mxu0 0.0
  %1569 = vmatpush1.msra.mxu0 0.0
  %1570 = vmatprep.subr.mxu0 0.0
  %1571 = vmatpush1.msra.mxu0 0.0
  %1572 = vmatprep.subr.mxu0 0.0
  %1573 = vmatpush1.msra.mxu0 0.0
  %1574 = vmatprep.subr.mxu0 0.0
  %1575 = vmatpush1.msra.mxu0 0.0
  %1576 = vmatprep.subr.mxu0 0.0
  %1577 = vmatpush1.msra.mxu0 0.0
  %1578 = vmatprep.subr.mxu0 0.0
  %1579 = vmatpush1.msra.mxu0 0.0
  %1580 = vmatprep.subr.mxu0 0.0
  %1581 = vmatpush1.msra.mxu0 0.0
  %1582 = vmatprep.subr.mxu0 0.0
  %1583 = vmatpush1.msra.mxu0 0.0
  %1584 = vmatprep.subr.mxu0 0.0
  %1585 = vmatpush1.msra.mxu0 0.0
  %1586 = vmatprep.subr.mxu0 0.0
  %1587 = vmatpush1.msra.mxu0 0.0
  %1588 = vmatprep.subr.mxu0 0.0
  %1589 = vmatpush1.msra.mxu0 0.0
  %1590 = vmatprep.mubr.f32.mxu0 0.0
  %v1591 = vand.u32 %v938, 4294901760
  %1592 = vmatmul.mubr.f32.gmra.mrb[0].mxu0 %v1591
  %v1593 = vpop.f32.mrb[0].mxu0
  %v1594 = vadd.f32 %v1507, %v1593
  %v1595 = vpop.f32.mrb[0].mxu0
  %1596 = vdwg.mxu0
  %v1597 = vmul.f32 %v1594, 0.03125
  %vm1598 = vcmask 31744
  %v1600 = vsel %vm1598, %v1597, 0
  %vm1602 = vcmask 1043456
  %v1604 = vsel %vm1602, %v955, 0
  %1606 = vmatprep.subr.mxu0 0.0
  %v1607 = vand.u32 %v1604, 4294901760
  %1608 = vmatpush1.msra.mxu0 %v1607
  %1609 = vmatprep.subr.mxu0 0.0
  %1610 = vmatpush1.msra.mxu0 0.0
  %1611 = vmatprep.subr.mxu0 0.0
  %1612 = vmatpush1.msra.mxu0 0.0
  %1613 = vmatprep.subr.mxu0 0.0
  %1614 = vmatpush1.msra.mxu0 0.0
  %1615 = vmatprep.subr.mxu0 0.0
  %1616 = vmatpush1.msra.mxu0 0.0
  %1617 = vmatprep.subr.mxu0 0.0
  %1618 = vmatpush1.msra.mxu0 0.0
  %1619 = vmatprep.subr.mxu0 0.0
  %1620 = vmatpush1.msra.mxu0 0.0
  %1621 = vmatprep.subr.mxu0 0.0
  %1622 = vmatpush1.msra.mxu0 0.0
  %1623 = vmatprep.subr.mxu0 0.0
  %1624 = vmatpush1.msra.mxu0 0.0
  %1625 = vmatprep.subr.mxu0 0.0
  %1626 = vmatpush1.msra.mxu0 0.0
  %1627 = vmatprep.subr.mxu0 0.0
  %1628 = vmatpush1.msra.mxu0 0.0
  %1629 = vmatprep.subr.mxu0 0.0
  %1630 = vmatpush1.msra.mxu0 0.0
  %1631 = vmatprep.subr.mxu0 0.0
  %1632 = vmatpush1.msra.mxu0 0.0
  %1633 = vmatprep.subr.mxu0 0.0
  %1634 = vmatpush1.msra.mxu0 0.0
  %1635 = vmatprep.subr.mxu0 0.0
  %1636 = vmatpush1.msra.mxu0 0.0
  %1637 = vmatprep.subr.mxu0 0.0
  %1638 = vmatpush1.msra.mxu0 0.0
  %1639 = vmatprep.subr.mxu0 0.0
  %1640 = vmatpush1.msra.mxu0 0.0
  %1641 = vmatprep.subr.mxu0 0.0
  %1642 = vmatpush1.msra.mxu0 0.0
  %1643 = vmatprep.subr.mxu0 0.0
  %1644 = vmatpush1.msra.mxu0 0.0
  %1645 = vmatprep.subr.mxu0 0.0
  %1646 = vmatpush1.msra.mxu0 0.0
  %1647 = vmatprep.subr.mxu0 0.0
  %1648 = vmatpush1.msra.mxu0 0.0
  %1649 = vmatprep.subr.mxu0 0.0
  %1650 = vmatpush1.msra.mxu0 0.0
  %1651 = vmatprep.subr.mxu0 0.0
  %1652 = vmatpush1.msra.mxu0 0.0
  %1653 = vmatprep.subr.mxu0 0.0
  %1654 = vmatpush1.msra.mxu0 0.0
  %1655 = vmatprep.subr.mxu0 0.0
  %1656 = vmatpush1.msra.mxu0 0.0
  %1657 = vmatprep.subr.mxu0 0.0
  %1658 = vmatpush1.msra.mxu0 0.0
  %1659 = vmatprep.subr.mxu0 0.0
  %1660 = vmatpush1.msra.mxu0 0.0
  %1661 = vmatprep.subr.mxu0 0.0
  %1662 = vmatpush1.msra.mxu0 0.0
  %1663 = vmatprep.subr.mxu0 0.0
  %1664 = vmatpush1.msra.mxu0 0.0
  %1665 = vmatprep.subr.mxu0 0.0
  %1666 = vmatpush1.msra.mxu0 0.0
  %1667 = vmatprep.subr.mxu0 0.0
  %1668 = vmatpush1.msra.mxu0 0.0
  %1669 = vmatprep.subr.mxu0 0.0
  %1670 = vmatpush1.msra.mxu0 0.0
  %1671 = vmatprep.mubr.f32.mxu0 0.0
  %v1672 = vand.u32 %v1600, 4294901760
  %v1673 = vsub.f32 %v1600, %v1672
  %v1674 = vand.u32 %v1673, 4294901760
  %v1675 = vsub.f32 %v1673, %v1674
  %v1676 = vand.u32 %v1675, 4294901760
  %1677 = vmatmul.mubr.f32.gmra.mrb[0].mxu0 %v1676
  %v1678 = vpop.f32.mrb[0].mxu0
  %v1679 = vadd.f32 0.0, %v1678
  %v1680 = vpop.f32.mrb[0].mxu0
  %1681 = vdwg.mxu0
  %1682 = vmatprep.subr.mxu0 0.0
  %v1683 = vand.u32 %v1604, 4294901760
  %v1684 = vsub.f32 %v1604, %v1683
  %v1685 = vand.u32 %v1684, 4294901760
  %v1686 = vsub.f32 %v1684, %v1685
  %v1687 = vand.u32 %v1686, 4294901760
  %1688 = vmatpush1.msra.mxu0 %v1687
  %1689 = vmatprep.subr.mxu0 0.0
  %1690 = vmatpush1.msra.mxu0 0.0
  %1691 = vmatprep.subr.mxu0 0.0
  %1692 = vmatpush1.msra.mxu0 0.0
  %1693 = vmatprep.subr.mxu0 0.0
  %1694 = vmatpush1.msra.mxu0 0.0
  %1695 = vmatprep.subr.mxu0 0.0
  %1696 = vmatpush1.msra.mxu0 0.0
  %1697 = vmatprep.subr.mxu0 0.0
  %1698 = vmatpush1.msra.mxu0 0.0
  %1699 = vmatprep.subr.mxu0 0.0
  %1700 = vmatpush1.msra.mxu0 0.0
  %1701 = vmatprep.subr.mxu0 0.0
  %1702 = vmatpush1.msra.mxu0 0.0
  %1703 = vmatprep.subr.mxu0 0.0
  %1704 = vmatpush1.msra.mxu0 0.0
  %1705 = vmatprep.subr.mxu0 0.0
  %1706 = vmatpush1.msra.mxu0 0.0
  %1707 = vmatprep.subr.mxu0 0.0
  %1708 = vmatpush1.msra.mxu0 0.0
  %1709 = vmatprep.subr.mxu0 0.0
  %1710 = vmatpush1.msra.mxu0 0.0
  %1711 = vmatprep.subr.mxu0 0.0
  %1712 = vmatpush1.msra.mxu0 0.0
  %1713 = vmatprep.subr.mxu0 0.0
  %1714 = vmatpush1.msra.mxu0 0.0
  %1715 = vmatprep.subr.mxu0 0.0
  %1716 = vmatpush1.msra.mxu0 0.0
  %1717 = vmatprep.subr.mxu0 0.0
  %1718 = vmatpush1.msra.mxu0 0.0
  %1719 = vmatprep.subr.mxu0 0.0
  %1720 = vmatpush1.msra.mxu0 0.0
  %1721 = vmatprep.subr.mxu0 0.0
  %1722 = vmatpush1.msra.mxu0 0.0
  %1723 = vmatprep.subr.mxu0 0.0
  %1724 = vmatpush1.msra.mxu0 0.0
  %1725 = vmatprep.subr.mxu0 0.0
  %1726 = vmatpush1.msra.mxu0 0.0
  %1727 = vmatprep.subr.mxu0 0.0
  %1728 = vmatpush1.msra.mxu0 0.0
  %1729 = vmatprep.subr.mxu0 0.0
  %1730 = vmatpush1.msra.mxu0 0.0
  %1731 = vmatprep.subr.mxu0 0.0
  %1732 = vmatpush1.msra.mxu0 0.0
  %1733 = vmatprep.subr.mxu0 0.0
  %1734 = vmatpush1.msra.mxu0 0.0
  %1735 = vmatprep.subr.mxu0 0.0
  %1736 = vmatpush1.msra.mxu0 0.0
  %1737 = vmatprep.subr.mxu0 0.0
  %1738 = vmatpush1.msra.mxu0 0.0
  %1739 = vmatprep.subr.mxu0 0.0
  %1740 = vmatpush1.msra.mxu0 0.0
  %1741 = vmatprep.subr.mxu0 0.0
  %1742 = vmatpush1.msra.mxu0 0.0
  %1743 = vmatprep.subr.mxu0 0.0
  %1744 = vmatpush1.msra.mxu0 0.0
  %1745 = vmatprep.subr.mxu0 0.0
  %1746 = vmatpush1.msra.mxu0 0.0
  %1747 = vmatprep.subr.mxu0 0.0
  %1748 = vmatpush1.msra.mxu0 0.0
  %1749 = vmatprep.subr.mxu0 0.0
  %1750 = vmatpush1.msra.mxu0 0.0
  %1751 = vmatprep.mubr.f32.mxu0 0.0
  %v1752 = vand.u32 %v1600, 4294901760
  %1753 = vmatmul.mubr.f32.gmra.mrb[0].mxu0 %v1752
  %v1754 = vpop.f32.mrb[0].mxu0
  %v1755 = vadd.f32 %v1679, %v1754
  %v1756 = vpop.f32.mrb[0].mxu0
  %1757 = vdwg.mxu0
  %1758 = vmatprep.subr.mxu0 0.0
  %v1759 = vand.u32 %v1604, 4294901760
  %v1760 = vsub.f32 %v1604, %v1759
  %1761 = vmatpush1.msra.mxu0 %v1760
  %1762 = vmatprep.subr.mxu0 0.0
  %1763 = vmatpush1.msra.mxu0 0.0
  %1764 = vmatprep.subr.mxu0 0.0
  %1765 = vmatpush1.msra.mxu0 0.0
  %1766 = vmatprep.subr.mxu0 0.0
  %1767 = vmatpush1.msra.mxu0 0.0
  %1768 = vmatprep.subr.mxu0 0.0
  %1769 = vmatpush1.msra.mxu0 0.0
  %1770 = vmatprep.subr.mxu0 0.0
  %1771 = vmatpush1.msra.mxu0 0.0
  %1772 = vmatprep.subr.mxu0 0.0
  %1773 = vmatpush1.msra.mxu0 0.0
  %1774 = vmatprep.subr.mxu0 0.0
  %1775 = vmatpush1.msra.mxu0 0.0
  %1776 = vmatprep.subr.mxu0 0.0
  %1777 = vmatpush1.msra.mxu0 0.0
  %1778 = vmatprep.subr.mxu0 0.0
  %1779 = vmatpush1.msra.mxu0 0.0
  %1780 = vmatprep.subr.mxu0 0.0
  %1781 = vmatpush1.msra.mxu0 0.0
  %1782 = vmatprep.subr.mxu0 0.0
  %1783 = vmatpush1.msra.mxu0 0.0
  %1784 = vmatprep.subr.mxu0 0.0
  %1785 = vmatpush1.msra.mxu0 0.0
  %1786 = vmatprep.subr.mxu0 0.0
  %1787 = vmatpush1.msra.mxu0 0.0
  %1788 = vmatprep.subr.mxu0 0.0
  %1789 = vmatpush1.msra.mxu0 0.0
  %1790 = vmatprep.subr.mxu0 0.0
  %1791 = vmatpush1.msra.mxu0 0.0
  %1792 = vmatprep.subr.mxu0 0.0
  %1793 = vmatpush1.msra.mxu0 0.0
  %1794 = vmatprep.subr.mxu0 0.0
  %1795 = vmatpush1.msra.mxu0 0.0
  %1796 = vmatprep.subr.mxu0 0.0
  %1797 = vmatpush1.msra.mxu0 0.0
  %1798 = vmatprep.subr.mxu0 0.0
  %1799 = vmatpush1.msra.mxu0 0.0
  %1800 = vmatprep.subr.mxu0 0.0
  %1801 = vmatpush1.msra.mxu0 0.0
  %1802 = vmatprep.subr.mxu0 0.0
  %1803 = vmatpush1.msra.mxu0 0.0
  %1804 = vmatprep.subr.mxu0 0.0
  %1805 = vmatpush1.msra.mxu0 0.0
  %1806 = vmatprep.subr.mxu0 0.0
  %1807 = vmatpush1.msra.mxu0 0.0
  %1808 = vmatprep.subr.mxu0 0.0
  %1809 = vmatpush1.msra.mxu0 0.0
  %1810 = vmatprep.subr.mxu0 0.0
  %1811 = vmatpush1.msra.mxu0 0.0
  %1812 = vmatprep.subr.mxu0 0.0
  %1813 = vmatpush1.msra.mxu0 0.0
  %1814 = vmatprep.subr.mxu0 0.0
  %1815 = vmatpush1.msra.mxu0 0.0
  %1816 = vmatprep.subr.mxu0 0.0
  %1817 = vmatpush1.msra.mxu0 0.0
  %1818 = vmatprep.subr.mxu0 0.0
  %1819 = vmatpush1.msra.mxu0 0.0
  %1820 = vmatprep.subr.mxu0 0.0
  %1821 = vmatpush1.msra.mxu0 0.0
  %1822 = vmatprep.subr.mxu0 0.0
  %1823 = vmatpush1.msra.mxu0 0.0
  %1824 = vmatprep.mubr.f32.mxu0 0.0
  %v1825 = vand.u32 %v1600, 4294901760
  %v1826 = vsub.f32 %v1600, %v1825
  %1827 = vmatmul.mubr.f32.gmra.mrb[0].mxu0 %v1826
  %v1828 = vpop.f32.mrb[0].mxu0
  %v1829 = vadd.f32 %v1755, %v1828
  %v1830 = vpop.f32.mrb[0].mxu0
  %1831 = vdwg.mxu0
  %1832 = vmatprep.subr.mxu0 0.0
  %v1833 = vand.u32 %v1604, 4294901760
  %1834 = vmatpush1.msra.mxu0 %v1833
  %1835 = vmatprep.subr.mxu0 0.0
  %1836 = vmatpush1.msra.mxu0 0.0
  %1837 = vmatprep.subr.mxu0 0.0
  %1838 = vmatpush1.msra.mxu0 0.0
  %1839 = vmatprep.subr.mxu0 0.0
  %1840 = vmatpush1.msra.mxu0 0.0
  %1841 = vmatprep.subr.mxu0 0.0
  %1842 = vmatpush1.msra.mxu0 0.0
  %1843 = vmatprep.subr.mxu0 0.0
  %1844 = vmatpush1.msra.mxu0 0.0
  %1845 = vmatprep.subr.mxu0 0.0
  %1846 = vmatpush1.msra.mxu0 0.0
  %1847 = vmatprep.subr.mxu0 0.0
  %1848 = vmatpush1.msra.mxu0 0.0
  %1849 = vmatprep.subr.mxu0 0.0
  %1850 = vmatpush1.msra.mxu0 0.0
  %1851 = vmatprep.subr.mxu0 0.0
  %1852 = vmatpush1.msra.mxu0 0.0
  %1853 = vmatprep.subr.mxu0 0.0
  %1854 = vmatpush1.msra.mxu0 0.0
  %1855 = vmatprep.subr.mxu0 0.0
  %1856 = vmatpush1.msra.mxu0 0.0
  %1857 = vmatprep.subr.mxu0 0.0
  %1858 = vmatpush1.msra.mxu0 0.0
  %1859 = vmatprep.subr.mxu0 0.0
  %1860 = vmatpush1.msra.mxu0 0.0
  %1861 = vmatprep.subr.mxu0 0.0
  %1862 = vmatpush1.msra.mxu0 0.0
  %1863 = vmatprep.subr.mxu0 0.0
  %1864 = vmatpush1.msra.mxu0 0.0
  %1865 = vmatprep.subr.mxu0 0.0
  %1866 = vmatpush1.msra.mxu0 0.0
  %1867 = vmatprep.subr.mxu0 0.0
  %1868 = vmatpush1.msra.mxu0 0.0
  %1869 = vmatprep.subr.mxu0 0.0
  %1870 = vmatpush1.msra.mxu0 0.0
  %1871 = vmatprep.subr.mxu0 0.0
  %1872 = vmatpush1.msra.mxu0 0.0
  %1873 = vmatprep.subr.mxu0 0.0
  %1874 = vmatpush1.msra.mxu0 0.0
  %1875 = vmatprep.subr.mxu0 0.0
  %1876 = vmatpush1.msra.mxu0 0.0
  %1877 = vmatprep.subr.mxu0 0.0
  %1878 = vmatpush1.msra.mxu0 0.0
  %1879 = vmatprep.subr.mxu0 0.0
  %1880 = vmatpush1.msra.mxu0 0.0
  %1881 = vmatprep.subr.mxu0 0.0
  %1882 = vmatpush1.msra.mxu0 0.0
  %1883 = vmatprep.subr.mxu0 0.0
  %1884 = vmatpush1.msra.mxu0 0.0
  %1885 = vmatprep.subr.mxu0 0.0
  %1886 = vmatpush1.msra.mxu0 0.0
  %1887 = vmatprep.subr.mxu0 0.0
  %1888 = vmatpush1.msra.mxu0 0.0
  %1889 = vmatprep.subr.mxu0 0.0
  %1890 = vmatpush1.msra.mxu0 0.0
  %1891 = vmatprep.subr.mxu0 0.0
  %1892 = vmatpush1.msra.mxu0 0.0
  %1893 = vmatprep.subr.mxu0 0.0
  %1894 = vmatpush1.msra.mxu0 0.0
  %1895 = vmatprep.subr.mxu0 0.0
  %1896 = vmatpush1.msra.mxu0 0.0
  %1897 = vmatprep.mubr.f32.mxu0 0.0
  %v1898 = vand.u32 %v1600, 4294901760
  %v1899 = vsub.f32 %v1600, %v1898
  %v1900 = vand.u32 %v1899, 4294901760
  %1901 = vmatmul.mubr.f32.gmra.mrb[0].mxu0 %v1900
  %v1902 = vpop.f32.mrb[0].mxu0
  %v1903 = vadd.f32 %v1829, %v1902
  %v1904 = vpop.f32.mrb[0].mxu0
  %1905 = vdwg.mxu0
  %1906 = vmatprep.subr.mxu0 0.0
  %v1907 = vand.u32 %v1604, 4294901760
  %v1908 = vsub.f32 %v1604, %v1907
  %v1909 = vand.u32 %v1908, 4294901760
  %1910 = vmatpush1.msra.mxu0 %v1909
  %1911 = vmatprep.subr.mxu0 0.0
  %1912 = vmatpush1.msra.mxu0 0.0
  %1913 = vmatprep.subr.mxu0 0.0
  %1914 = vmatpush1.msra.mxu0 0.0
  %1915 = vmatprep.subr.mxu0 0.0
  %1916 = vmatpush1.msra.mxu0 0.0
  %1917 = vmatprep.subr.mxu0 0.0
  %1918 = vmatpush1.msra.mxu0 0.0
  %1919 = vmatprep.subr.mxu0 0.0
  %1920 = vmatpush1.msra.mxu0 0.0
  %1921 = vmatprep.subr.mxu0 0.0
  %1922 = vmatpush1.msra.mxu0 0.0
  %1923 = vmatprep.subr.mxu0 0.0
  %1924 = vmatpush1.msra.mxu0 0.0
  %1925 = vmatprep.subr.mxu0 0.0
  %1926 = vmatpush1.msra.mxu0 0.0
  %1927 = vmatprep.subr.mxu0 0.0
  %1928 = vmatpush1.msra.mxu0 0.0
  %1929 = vmatprep.subr.mxu0 0.0
  %1930 = vmatpush1.msra.mxu0 0.0
  %1931 = vmatprep.subr.mxu0 0.0
  %1932 = vmatpush1.msra.mxu0 0.0
  %1933 = vmatprep.subr.mxu0 0.0
  %1934 = vmatpush1.msra.mxu0 0.0
  %1935 = vmatprep.subr.mxu0 0.0
  %1936 = vmatpush1.msra.mxu0 0.0
  %1937 = vmatprep.subr.mxu0 0.0
  %1938 = vmatpush1.msra.mxu0 0.0
  %1939 = vmatprep.subr.mxu0 0.0
  %1940 = vmatpush1.msra.mxu0 0.0
  %1941 = vmatprep.subr.mxu0 0.0
  %1942 = vmatpush1.msra.mxu0 0.0
  %1943 = vmatprep.subr.mxu0 0.0
  %1944 = vmatpush1.msra.mxu0 0.0
  %1945 = vmatprep.subr.mxu0 0.0
  %1946 = vmatpush1.msra.mxu0 0.0
  %1947 = vmatprep.subr.mxu0 0.0
  %1948 = vmatpush1.msra.mxu0 0.0
  %1949 = vmatprep.subr.mxu0 0.0
  %1950 = vmatpush1.msra.mxu0 0.0
  %1951 = vmatprep.subr.mxu0 0.0
  %1952 = vmatpush1.msra.mxu0 0.0
  %1953 = vmatprep.subr.mxu0 0.0
  %1954 = vmatpush1.msra.mxu0 0.0
  %1955 = vmatprep.subr.mxu0 0.0
  %1956 = vmatpush1.msra.mxu0 0.0
  %1957 = vmatprep.subr.mxu0 0.0
  %1958 = vmatpush1.msra.mxu0 0.0
  %1959 = vmatprep.subr.mxu0 0.0
  %1960 = vmatpush1.msra.mxu0 0.0
  %1961 = vmatprep.subr.mxu0 0.0
  %1962 = vmatpush1.msra.mxu0 0.0
  %1963 = vmatprep.subr.mxu0 0.0
  %1964 = vmatpush1.msra.mxu0 0.0
  %1965 = vmatprep.subr.mxu0 0.0
  %1966 = vmatpush1.msra.mxu0 0.0
  %1967 = vmatprep.subr.mxu0 0.0
  %1968 = vmatpush1.msra.mxu0 0.0
  %1969 = vmatprep.subr.mxu0 0.0
  %1970 = vmatpush1.msra.mxu0 0.0
  %1971 = vmatprep.subr.mxu0 0.0
  %1972 = vmatpush1.msra.mxu0 0.0
  %1973 = vmatprep.mubr.f32.mxu0 0.0
  %v1974 = vand.u32 %v1600, 4294901760
  %1975 = vmatmul.mubr.f32.gmra.mrb[0].mxu0 %v1974
  %v1976 = vpop.f32.mrb[0].mxu0
  %v1977 = vadd.f32 %v1903, %v1976
  %v1978 = vpop.f32.mrb[0].mxu0
  %1979 = vdwg.mxu0
  %1980 = vmatprep.subr.mxu0 0.0
  %v1981 = vand.u32 %v1604, 4294901760
  %1982 = vmatpush1.msra.mxu0 %v1981
  %1983 = vmatprep.subr.mxu0 0.0
  %1984 = vmatpush1.msra.mxu0 0.0
  %1985 = vmatprep.subr.mxu0 0.0
  %1986 = vmatpush1.msra.mxu0 0.0
  %1987 = vmatprep.subr.mxu0 0.0
  %1988 = vmatpush1.msra.mxu0 0.0
  %1989 = vmatprep.subr.mxu0 0.0
  %1990 = vmatpush1.msra.mxu0 0.0
  %1991 = vmatprep.subr.mxu0 0.0
  %1992 = vmatpush1.msra.mxu0 0.0
  %1993 = vmatprep.subr.mxu0 0.0
  %1994 = vmatpush1.msra.mxu0 0.0
  %1995 = vmatprep.subr.mxu0 0.0
  %1996 = vmatpush1.msra.mxu0 0.0
  %1997 = vmatprep.subr.mxu0 0.0
  %1998 = vmatpush1.msra.mxu0 0.0
  %1999 = vmatprep.subr.mxu0 0.0
  %2000 = vmatpush1.msra.mxu0 0.0
  %2001 = vmatprep.subr.mxu0 0.0
  %2002 = vmatpush1.msra.mxu0 0.0
  %2003 = vmatprep.subr.mxu0 0.0
  %2004 = vmatpush1.msra.mxu0 0.0
  %2005 = vmatprep.subr.mxu0 0.0
  %2006 = vmatpush1.msra.mxu0 0.0
  %2007 = vmatprep.subr.mxu0 0.0
  %2008 = vmatpush1.msra.mxu0 0.0
  %2009 = vmatprep.subr.mxu0 0.0
  %2010 = vmatpush1.msra.mxu0 0.0
  %2011 = vmatprep.subr.mxu0 0.0
  %2012 = vmatpush1.msra.mxu0 0.0
  %2013 = vmatprep.subr.mxu0 0.0
  %2014 = vmatpush1.msra.mxu0 0.0
  %2015 = vmatprep.subr.mxu0 0.0
  %2016 = vmatpush1.msra.mxu0 0.0
  %2017 = vmatprep.subr.mxu0 0.0
  %2018 = vmatpush1.msra.mxu0 0.0
  %2019 = vmatprep.subr.mxu0 0.0
  %2020 = vmatpush1.msra.mxu0 0.0
  %2021 = vmatprep.subr.mxu0 0.0
  %2022 = vmatpush1.msra.mxu0 0.0
  %2023 = vmatprep.subr.mxu0 0.0
  %2024 = vmatpush1.msra.mxu0 0.0
  %2025 = vmatprep.subr.mxu0 0.0
  %2026 = vmatpush1.msra.mxu0 0.0
  %2027 = vmatprep.subr.mxu0 0.0
  %2028 = vmatpush1.msra.mxu0 0.0
  %2029 = vmatprep.subr.mxu0 0.0
  %2030 = vmatpush1.msra.mxu0 0.0
  %2031 = vmatprep.subr.mxu0 0.0
  %2032 = vmatpush1.msra.mxu0 0.0
  %2033 = vmatprep.subr.mxu0 0.0
  %2034 = vmatpush1.msra.mxu0 0.0
  %2035 = vmatprep.subr.mxu0 0.0
  %2036 = vmatpush1.msra.mxu0 0.0
  %2037 = vmatprep.subr.mxu0 0.0
  %2038 = vmatpush1.msra.mxu0 0.0
  %2039 = vmatprep.subr.mxu0 0.0
  %2040 = vmatpush1.msra.mxu0 0.0
  %2041 = vmatprep.subr.mxu0 0.0
  %2042 = vmatpush1.msra.mxu0 0.0
  %2043 = vmatprep.subr.mxu0 0.0
  %2044 = vmatpush1.msra.mxu0 0.0
  %2045 = vmatprep.mubr.f32.mxu0 0.0
  %v2046 = vand.u32 %v1600, 4294901760
  %2047 = vmatmul.mubr.f32.gmra.mrb[0].mxu0 %v2046
  %v2048 = vpop.f32.mrb[0].mxu0
  %v2049 = vadd.f32 %v1977, %v2048
  %v2050 = vpop.f32.mrb[0].mxu0
  %2051 = vdwg.mxu0
  %v2052 = vsub.f32 %v938, %v2049
  %v2053 = vmul.f32 %v2052, %v2052
  %2054 = vmatprep.subr.mxu0 0.0
  %v2055 = vand.u32 %v939, 4294901760
  %2056 = vmatpush1.msra.mxu0 %v2055
  %2057 = vmatprep.subr.mxu0 0.0
  %v2058 = vand.u32 %v940, 4294901760
  %2059 = vmatpush1.msra.mxu0 %v2058
  %2060 = vmatprep.subr.mxu0 0.0
  %v2061 = vand.u32 %v941, 4294901760
  %2062 = vmatpush1.msra.mxu0 %v2061
  %2063 = vmatprep.subr.mxu0 0.0
  %v2064 = vand.u32 %v942, 4294901760
  %2065 = vmatpush1.msra.mxu0 %v2064
  %2066 = vmatprep.subr.mxu0 0.0
  %v2067 = vand.u32 %v943, 4294901760
  %2068 = vmatpush1.msra.mxu0 %v2067
  %2069 = vmatprep.subr.mxu0 0.0
  %v2070 = vand.u32 %v944, 4294901760
  %2071 = vmatpush1.msra.mxu0 %v2070
  %2072 = vmatprep.subr.mxu0 0.0
  %v2073 = vand.u32 %v945, 4294901760
  %2074 = vmatpush1.msra.mxu0 %v2073
  %2075 = vmatprep.subr.mxu0 0.0
  %v2076 = vand.u32 %v946, 4294901760
  %2077 = vmatpush1.msra.mxu0 %v2076
  %2078 = vmatprep.subr.mxu0 0.0
  %v2079 = vand.u32 %v947, 4294901760
  %2080 = vmatpush1.msra.mxu0 %v2079
  %2081 = vmatprep.subr.mxu0 0.0
  %v2082 = vand.u32 %v948, 4294901760
  %2083 = vmatpush1.msra.mxu0 %v2082
  %2084 = vmatprep.subr.mxu0 0.0
  %v2085 = vand.u32 %v949, 4294901760
  %2086 = vmatpush1.msra.mxu0 %v2085
  %2087 = vmatprep.subr.mxu0 0.0
  %v2088 = vand.u32 %v950, 4294901760
  %2089 = vmatpush1.msra.mxu0 %v2088
  %2090 = vmatprep.subr.mxu0 0.0
  %v2091 = vand.u32 %v951, 4294901760
  %2092 = vmatpush1.msra.mxu0 %v2091
  %2093 = vmatprep.subr.mxu0 0.0
  %v2094 = vand.u32 %v952, 4294901760
  %2095 = vmatpush1.msra.mxu0 %v2094
  %2096 = vmatprep.subr.mxu0 0.0
  %v2097 = vand.u32 %v953, 4294901760
  %2098 = vmatpush1.msra.mxu0 %v2097
  %2099 = vmatprep.subr.mxu0 0.0
  %v2100 = vand.u32 %v954, 4294901760
  %2101 = vmatpush1.msra.mxu0 %v2100
  %2102 = vmatprep.subr.mxu0 0.0
  %2103 = vmatpush1.msra.mxu0 0.0
  %2104 = vmatprep.subr.mxu0 0.0
  %2105 = vmatpush1.msra.mxu0 0.0
  %2106 = vmatprep.subr.mxu0 0.0
  %2107 = vmatpush1.msra.mxu0 0.0
  %2108 = vmatprep.subr.mxu0 0.0
  %2109 = vmatpush1.msra.mxu0 0.0
  %2110 = vmatprep.subr.mxu0 0.0
  %2111 = vmatpush1.msra.mxu0 0.0
  %2112 = vmatprep.subr.mxu0 0.0
  %2113 = vmatpush1.msra.mxu0 0.0
  %2114 = vmatprep.subr.mxu0 0.0
  %2115 = vmatpush1.msra.mxu0 0.0
  %2116 = vmatprep.subr.mxu0 0.0
  %2117 = vmatpush1.msra.mxu0 0.0
  %2118 = vmatprep.subr.mxu0 0.0
  %2119 = vmatpush1.msra.mxu0 0.0
  %2120 = vmatprep.subr.mxu0 0.0
  %2121 = vmatpush1.msra.mxu0 0.0
  %2122 = vmatprep.subr.mxu0 0.0
  %2123 = vmatpush1.msra.mxu0 0.0
  %2124 = vmatprep.subr.mxu0 0.0
  %2125 = vmatpush1.msra.mxu0 0.0
  %2126 = vmatprep.subr.mxu0 0.0
  %2127 = vmatpush1.msra.mxu0 0.0
  %2128 = vmatprep.subr.mxu0 0.0
  %2129 = vmatpush1.msra.mxu0 0.0
  %2130 = vmatprep.subr.mxu0 0.0
  %2131 = vmatpush1.msra.mxu0 0.0
  %2132 = vmatprep.subr.mxu0 0.0
  %2133 = vmatpush1.msra.mxu0 0.0
  %2134 = vmatprep.mubr.f32.mxu0 0.0
  %v2135 = vand.u32 %v2053, 4294901760
  %v2136 = vsub.f32 %v2053, %v2135
  %v2137 = vand.u32 %v2136, 4294901760
  %v2138 = vsub.f32 %v2136, %v2137
  %v2139 = vand.u32 %v2138, 4294901760
  %2140 = vmatmul.mubr.f32.gmra.mrb[0].mxu0 %v2139
  %v2141 = vpop.f32.mrb[0].mxu0
  %v2142 = vadd.f32 0.0, %v2141
  %v2143 = vpop.f32.mrb[0].mxu0
  %2144 = vdwg.mxu0
  %2145 = vmatprep.subr.mxu0 0.0
  %v2146 = vand.u32 %v939, 4294901760
  %v2147 = vsub.f32 %v939, %v2146
  %v2148 = vand.u32 %v2147, 4294901760
  %v2149 = vsub.f32 %v2147, %v2148
  %v2150 = vand.u32 %v2149, 4294901760
  %2151 = vmatpush1.msra.mxu0 %v2150
  %2152 = vmatprep.subr.mxu0 0.0
  %v2153 = vand.u32 %v940, 4294901760
  %v2154 = vsub.f32 %v940, %v2153
  %v2155 = vand.u32 %v2154, 4294901760
  %v2156 = vsub.f32 %v2154, %v2155
  %v2157 = vand.u32 %v2156, 4294901760
  %2158 = vmatpush1.msra.mxu0 %v2157
  %2159 = vmatprep.subr.mxu0 0.0
  %v2160 = vand.u32 %v941, 4294901760
  %v2161 = vsub.f32 %v941, %v2160
  %v2162 = vand.u32 %v2161, 4294901760
  %v2163 = vsub.f32 %v2161, %v2162
  %v2164 = vand.u32 %v2163, 4294901760
  %2165 = vmatpush1.msra.mxu0 %v2164
  %2166 = vmatprep.subr.mxu0 0.0
  %v2167 = vand.u32 %v942, 4294901760
  %v2168 = vsub.f32 %v942, %v2167
  %v2169 = vand.u32 %v2168, 4294901760
  %v2170 = vsub.f32 %v2168, %v2169
  %v2171 = vand.u32 %v2170, 4294901760
  %2172 = vmatpush1.msra.mxu0 %v2171
  %2173 = vmatprep.subr.mxu0 0.0
  %v2174 = vand.u32 %v943, 4294901760
  %v2175 = vsub.f32 %v943, %v2174
  %v2176 = vand.u32 %v2175, 4294901760
  %v2177 = vsub.f32 %v2175, %v2176
  %v2178 = vand.u32 %v2177, 4294901760
  %2179 = vmatpush1.msra.mxu0 %v2178
  %2180 = vmatprep.subr.mxu0 0.0
  %v2181 = vand.u32 %v944, 4294901760
  %v2182 = vsub.f32 %v944, %v2181
  %v2183 = vand.u32 %v2182, 4294901760
  %v2184 = vsub.f32 %v2182, %v2183
  %v2185 = vand.u32 %v2184, 4294901760
  %2186 = vmatpush1.msra.mxu0 %v2185
  %2187 = vmatprep.subr.mxu0 0.0
  %v2188 = vand.u32 %v945, 4294901760
  %v2189 = vsub.f32 %v945, %v2188
  %v2190 = vand.u32 %v2189, 4294901760
  %v2191 = vsub.f32 %v2189, %v2190
  %v2192 = vand.u32 %v2191, 4294901760
  %2193 = vmatpush1.msra.mxu0 %v2192
  %2194 = vmatprep.subr.mxu0 0.0
  %v2195 = vand.u32 %v946, 4294901760
  %v2196 = vsub.f32 %v946, %v2195
  %v2197 = vand.u32 %v2196, 4294901760
  %v2198 = vsub.f32 %v2196, %v2197
  %v2199 = vand.u32 %v2198, 4294901760
  %2200 = vmatpush1.msra.mxu0 %v2199
  %2201 = vmatprep.subr.mxu0 0.0
  %v2202 = vand.u32 %v947, 4294901760
  %v2203 = vsub.f32 %v947, %v2202
  %v2204 = vand.u32 %v2203, 4294901760
  %v2205 = vsub.f32 %v2203, %v2204
  %v2206 = vand.u32 %v2205, 4294901760
  %2207 = vmatpush1.msra.mxu0 %v2206
  %2208 = vmatprep.subr.mxu0 0.0
  %v2209 = vand.u32 %v948, 4294901760
  %v2210 = vsub.f32 %v948, %v2209
  %v2211 = vand.u32 %v2210, 4294901760
  %v2212 = vsub.f32 %v2210, %v2211
  %v2213 = vand.u32 %v2212, 4294901760
  %2214 = vmatpush1.msra.mxu0 %v2213
  %2215 = vmatprep.subr.mxu0 0.0
  %v2216 = vand.u32 %v949, 4294901760
  %v2217 = vsub.f32 %v949, %v2216
  %v2218 = vand.u32 %v2217, 4294901760
  %v2219 = vsub.f32 %v2217, %v2218
  %v2220 = vand.u32 %v2219, 4294901760
  %2221 = vmatpush1.msra.mxu0 %v2220
  %2222 = vmatprep.subr.mxu0 0.0
  %v2223 = vand.u32 %v950, 4294901760
  %v2224 = vsub.f32 %v950, %v2223
  %v2225 = vand.u32 %v2224, 4294901760
  %v2226 = vsub.f32 %v2224, %v2225
  %v2227 = vand.u32 %v2226, 4294901760
  %2228 = vmatpush1.msra.mxu0 %v2227
  %2229 = vmatprep.subr.mxu0 0.0
  %v2230 = vand.u32 %v951, 4294901760
  %v2231 = vsub.f32 %v951, %v2230
  %v2232 = vand.u32 %v2231, 4294901760
  %v2233 = vsub.f32 %v2231, %v2232
  %v2234 = vand.u32 %v2233, 4294901760
  %2235 = vmatpush1.msra.mxu0 %v2234
  %2236 = vmatprep.subr.mxu0 0.0
  %v2237 = vand.u32 %v952, 4294901760
  %v2238 = vsub.f32 %v952, %v2237
  %v2239 = vand.u32 %v2238, 4294901760
  %v2240 = vsub.f32 %v2238, %v2239
  %v2241 = vand.u32 %v2240, 4294901760
  %2242 = vmatpush1.msra.mxu0 %v2241
  %2243 = vmatprep.subr.mxu0 0.0
  %v2244 = vand.u32 %v953, 4294901760
  %v2245 = vsub.f32 %v953, %v2244
  %v2246 = vand.u32 %v2245, 4294901760
  %v2247 = vsub.f32 %v2245, %v2246
  %v2248 = vand.u32 %v2247, 4294901760
  %2249 = vmatpush1.msra.mxu0 %v2248
  %2250 = vmatprep.subr.mxu0 0.0
  %v2251 = vand.u32 %v954, 4294901760
  %v2252 = vsub.f32 %v954, %v2251
  %v2253 = vand.u32 %v2252, 4294901760
  %v2254 = vsub.f32 %v2252, %v2253
  %v2255 = vand.u32 %v2254, 4294901760
  %2256 = vmatpush1.msra.mxu0 %v2255
  %2257 = vmatprep.subr.mxu0 0.0
  %2258 = vmatpush1.msra.mxu0 0.0
  %2259 = vmatprep.subr.mxu0 0.0
  %2260 = vmatpush1.msra.mxu0 0.0
  %2261 = vmatprep.subr.mxu0 0.0
  %2262 = vmatpush1.msra.mxu0 0.0
  %2263 = vmatprep.subr.mxu0 0.0
  %2264 = vmatpush1.msra.mxu0 0.0
  %2265 = vmatprep.subr.mxu0 0.0
  %2266 = vmatpush1.msra.mxu0 0.0
  %2267 = vmatprep.subr.mxu0 0.0
  %2268 = vmatpush1.msra.mxu0 0.0
  %2269 = vmatprep.subr.mxu0 0.0
  %2270 = vmatpush1.msra.mxu0 0.0
  %2271 = vmatprep.subr.mxu0 0.0
  %2272 = vmatpush1.msra.mxu0 0.0
  %2273 = vmatprep.subr.mxu0 0.0
  %2274 = vmatpush1.msra.mxu0 0.0
  %2275 = vmatprep.subr.mxu0 0.0
  %2276 = vmatpush1.msra.mxu0 0.0
  %2277 = vmatprep.subr.mxu0 0.0
  %2278 = vmatpush1.msra.mxu0 0.0
  %2279 = vmatprep.subr.mxu0 0.0
  %2280 = vmatpush1.msra.mxu0 0.0
  %2281 = vmatprep.subr.mxu0 0.0
  %2282 = vmatpush1.msra.mxu0 0.0
  %2283 = vmatprep.subr.mxu0 0.0
  %2284 = vmatpush1.msra.mxu0 0.0
  %2285 = vmatprep.subr.mxu0 0.0
  %2286 = vmatpush1.msra.mxu0 0.0
  %2287 = vmatprep.subr.mxu0 0.0
  %2288 = vmatpush1.msra.mxu0 0.0
  %2289 = vmatprep.mubr.f32.mxu0 0.0
  %v2290 = vand.u32 %v2053, 4294901760
  %2291 = vmatmul.mubr.f32.gmra.mrb[0].mxu0 %v2290
  %v2292 = vpop.f32.mrb[0].mxu0
  %v2293 = vadd.f32 %v2142, %v2292
  %v2294 = vpop.f32.mrb[0].mxu0
  %2295 = vdwg.mxu0
  %2296 = vmatprep.subr.mxu0 0.0
  %v2297 = vand.u32 %v939, 4294901760
  %v2298 = vsub.f32 %v939, %v2297
  %2299 = vmatpush1.msra.mxu0 %v2298
  %2300 = vmatprep.subr.mxu0 0.0
  %v2301 = vand.u32 %v940, 4294901760
  %v2302 = vsub.f32 %v940, %v2301
  %2303 = vmatpush1.msra.mxu0 %v2302
  %2304 = vmatprep.subr.mxu0 0.0
  %v2305 = vand.u32 %v941, 4294901760
  %v2306 = vsub.f32 %v941, %v2305
  %2307 = vmatpush1.msra.mxu0 %v2306
  %2308 = vmatprep.subr.mxu0 0.0
  %v2309 = vand.u32 %v942, 4294901760
  %v2310 = vsub.f32 %v942, %v2309
  %2311 = vmatpush1.msra.mxu0 %v2310
  %2312 = vmatprep.subr.mxu0 0.0
  %v2313 = vand.u32 %v943, 4294901760
  %v2314 = vsub.f32 %v943, %v2313
  %2315 = vmatpush1.msra.mxu0 %v2314
  %2316 = vmatprep.subr.mxu0 0.0
  %v2317 = vand.u32 %v944, 4294901760
  %v2318 = vsub.f32 %v944, %v2317
  %2319 = vmatpush1.msra.mxu0 %v2318
  %2320 = vmatprep.subr.mxu0 0.0
  %v2321 = vand.u32 %v945, 4294901760
  %v2322 = vsub.f32 %v945, %v2321
  %2323 = vmatpush1.msra.mxu0 %v2322
  %2324 = vmatprep.subr.mxu0 0.0
  %v2325 = vand.u32 %v946, 4294901760
  %v2326 = vsub.f32 %v946, %v2325
  %2327 = vmatpush1.msra.mxu0 %v2326
  %2328 = vmatprep.subr.mxu0 0.0
  %v2329 = vand.u32 %v947, 4294901760
  %v2330 = vsub.f32 %v947, %v2329
  %2331 = vmatpush1.msra.mxu0 %v2330
  %2332 = vmatprep.subr.mxu0 0.0
  %v2333 = vand.u32 %v948, 4294901760
  %v2334 = vsub.f32 %v948, %v2333
  %2335 = vmatpush1.msra.mxu0 %v2334
  %2336 = vmatprep.subr.mxu0 0.0
  %v2337 = vand.u32 %v949, 4294901760
  %v2338 = vsub.f32 %v949, %v2337
  %2339 = vmatpush1.msra.mxu0 %v2338
  %2340 = vmatprep.subr.mxu0 0.0
  %v2341 = vand.u32 %v950, 4294901760
  %v2342 = vsub.f32 %v950, %v2341
  %2343 = vmatpush1.msra.mxu0 %v2342
  %2344 = vmatprep.subr.mxu0 0.0
  %v2345 = vand.u32 %v951, 4294901760
  %v2346 = vsub.f32 %v951, %v2345
  %2347 = vmatpush1.msra.mxu0 %v2346
  %2348 = vmatprep.subr.mxu0 0.0
  %v2349 = vand.u32 %v952, 4294901760
  %v2350 = vsub.f32 %v952, %v2349
  %2351 = vmatpush1.msra.mxu0 %v2350
  %2352 = vmatprep.subr.mxu0 0.0
  %v2353 = vand.u32 %v953, 4294901760
  %v2354 = vsub.f32 %v953, %v2353
  %2355 = vmatpush1.msra.mxu0 %v2354
  %2356 = vmatprep.subr.mxu0 0.0
  %v2357 = vand.u32 %v954, 4294901760
  %v2358 = vsub.f32 %v954, %v2357
  %2359 = vmatpush1.msra.mxu0 %v2358
  %2360 = vmatprep.subr.mxu0 0.0
  %2361 = vmatpush1.msra.mxu0 0.0
  %2362 = vmatprep.subr.mxu0 0.0
  %2363 = vmatpush1.msra.mxu0 0.0
  %2364 = vmatprep.subr.mxu0 0.0
  %2365 = vmatpush1.msra.mxu0 0.0
  %2366 = vmatprep.subr.mxu0 0.0
  %2367 = vmatpush1.msra.mxu0 0.0
  %2368 = vmatprep.subr.mxu0 0.0
  %2369 = vmatpush1.msra.mxu0 0.0
  %2370 = vmatprep.subr.mxu0 0.0
  %2371 = vmatpush1.msra.mxu0 0.0
  %2372 = vmatprep.subr.mxu0 0.0
  %2373 = vmatpush1.msra.mxu0 0.0
  %2374 = vmatprep.subr.mxu0 0.0
  %2375 = vmatpush1.msra.mxu0 0.0
  %2376 = vmatprep.subr.mxu0 0.0
  %2377 = vmatpush1.msra.mxu0 0.0
  %2378 = vmatprep.subr.mxu0 0.0
  %2379 = vmatpush1.msra.mxu0 0.0
  %2380 = vmatprep.subr.mxu0 0.0
  %2381 = vmatpush1.msra.mxu0 0.0
  %2382 = vmatprep.subr.mxu0 0.0
  %2383 = vmatpush1.msra.mxu0 0.0
  %2384 = vmatprep.subr.mxu0 0.0
  %2385 = vmatpush1.msra.mxu0 0.0
  %2386 = vmatprep.subr.mxu0 0.0
  %2387 = vmatpush1.msra.mxu0 0.0
  %2388 = vmatprep.subr.mxu0 0.0
  %2389 = vmatpush1.msra.mxu0 0.0
  %2390 = vmatprep.subr.mxu0 0.0
  %2391 = vmatpush1.msra.mxu0 0.0
  %2392 = vmatprep.mubr.f32.mxu0 0.0
  %v2393 = vand.u32 %v2053, 4294901760
  %v2394 = vsub.f32 %v2053, %v2393
  %2395 = vmatmul.mubr.f32.gmra.mrb[0].mxu0 %v2394
  %v2396 = vpop.f32.mrb[0].mxu0
  %v2397 = vadd.f32 %v2293, %v2396
  %v2398 = vpop.f32.mrb[0].mxu0
  %2399 = vdwg.mxu0
  %2400 = vmatprep.subr.mxu0 0.0
  %v2401 = vand.u32 %v939, 4294901760
  %2402 = vmatpush1.msra.mxu0 %v2401
  %2403 = vmatprep.subr.mxu0 0.0
  %v2404 = vand.u32 %v940, 4294901760
  %2405 = vmatpush1.msra.mxu0 %v2404
  %2406 = vmatprep.subr.mxu0 0.0
  %v2407 = vand.u32 %v941, 4294901760
  %2408 = vmatpush1.msra.mxu0 %v2407
  %2409 = vmatprep.subr.mxu0 0.0
  %v2410 = vand.u32 %v942, 4294901760
  %2411 = vmatpush1.msra.mxu0 %v2410
  %2412 = vmatprep.subr.mxu0 0.0
  %v2413 = vand.u32 %v943, 4294901760
  %2414 = vmatpush1.msra.mxu0 %v2413
  %2415 = vmatprep.subr.mxu0 0.0
  %v2416 = vand.u32 %v944, 4294901760
  %2417 = vmatpush1.msra.mxu0 %v2416
  %2418 = vmatprep.subr.mxu0 0.0
  %v2419 = vand.u32 %v945, 4294901760
  %2420 = vmatpush1.msra.mxu0 %v2419
  %2421 = vmatprep.subr.mxu0 0.0
  %v2422 = vand.u32 %v946, 4294901760
  %2423 = vmatpush1.msra.mxu0 %v2422
  %2424 = vmatprep.subr.mxu0 0.0
  %v2425 = vand.u32 %v947, 4294901760
  %2426 = vmatpush1.msra.mxu0 %v2425
  %2427 = vmatprep.subr.mxu0 0.0
  %v2428 = vand.u32 %v948, 4294901760
  %2429 = vmatpush1.msra.mxu0 %v2428
  %2430 = vmatprep.subr.mxu0 0.0
  %v2431 = vand.u32 %v949, 4294901760
  %2432 = vmatpush1.msra.mxu0 %v2431
  %2433 = vmatprep.subr.mxu0 0.0
  %v2434 = vand.u32 %v950, 4294901760
  %2435 = vmatpush1.msra.mxu0 %v2434
  %2436 = vmatprep.subr.mxu0 0.0
  %v2437 = vand.u32 %v951, 4294901760
  %2438 = vmatpush1.msra.mxu0 %v2437
  %2439 = vmatprep.subr.mxu0 0.0
  %v2440 = vand.u32 %v952, 4294901760
  %2441 = vmatpush1.msra.mxu0 %v2440
  %2442 = vmatprep.subr.mxu0 0.0
  %v2443 = vand.u32 %v953, 4294901760
  %2444 = vmatpush1.msra.mxu0 %v2443
  %2445 = vmatprep.subr.mxu0 0.0
  %v2446 = vand.u32 %v954, 4294901760
  %2447 = vmatpush1.msra.mxu0 %v2446
  %2448 = vmatprep.subr.mxu0 0.0
  %2449 = vmatpush1.msra.mxu0 0.0
  %2450 = vmatprep.subr.mxu0 0.0
  %2451 = vmatpush1.msra.mxu0 0.0
  %2452 = vmatprep.subr.mxu0 0.0
  %2453 = vmatpush1.msra.mxu0 0.0
  %2454 = vmatprep.subr.mxu0 0.0
  %2455 = vmatpush1.msra.mxu0 0.0
  %2456 = vmatprep.subr.mxu0 0.0
  %2457 = vmatpush1.msra.mxu0 0.0
  %2458 = vmatprep.subr.mxu0 0.0
  %2459 = vmatpush1.msra.mxu0 0.0
  %2460 = vmatprep.subr.mxu0 0.0
  %2461 = vmatpush1.msra.mxu0 0.0
  %2462 = vmatprep.subr.mxu0 0.0
  %2463 = vmatpush1.msra.mxu0 0.0
  %2464 = vmatprep.subr.mxu0 0.0
  %2465 = vmatpush1.msra.mxu0 0.0
  %2466 = vmatprep.subr.mxu0 0.0
  %2467 = vmatpush1.msra.mxu0 0.0
  %2468 = vmatprep.subr.mxu0 0.0
  %2469 = vmatpush1.msra.mxu0 0.0
  %2470 = vmatprep.subr.mxu0 0.0
  %2471 = vmatpush1.msra.mxu0 0.0
  %2472 = vmatprep.subr.mxu0 0.0
  %2473 = vmatpush1.msra.mxu0 0.0
  %2474 = vmatprep.subr.mxu0 0.0
  %2475 = vmatpush1.msra.mxu0 0.0
  %2476 = vmatprep.subr.mxu0 0.0
  %2477 = vmatpush1.msra.mxu0 0.0
  %2478 = vmatprep.subr.mxu0 0.0
  %2479 = vmatpush1.msra.mxu0 0.0
  %2480 = vmatprep.mubr.f32.mxu0 0.0
  %v2481 = vand.u32 %v2053, 4294901760
  %v2482 = vsub.f32 %v2053, %v2481
  %v2483 = vand.u32 %v2482, 4294901760
  %2484 = vmatmul.mubr.f32.gmra.mrb[0].mxu0 %v2483
  %v2485 = vpop.f32.mrb[0].mxu0
  %v2486 = vadd.f32 %v2397, %v2485
  %v2487 = vpop.f32.mrb[0].mxu0
  %2488 = vdwg.mxu0
  %2489 = vmatprep.subr.mxu0 0.0
  %v2490 = vand.u32 %v939, 4294901760
  %v2491 = vsub.f32 %v939, %v2490
  %v2492 = vand.u32 %v2491, 4294901760
  %2493 = vmatpush1.msra.mxu0 %v2492
  %2494 = vmatprep.subr.mxu0 0.0
  %v2495 = vand.u32 %v940, 4294901760
  %v2496 = vsub.f32 %v940, %v2495
  %v2497 = vand.u32 %v2496, 4294901760
  %2498 = vmatpush1.msra.mxu0 %v2497
  %2499 = vmatprep.subr.mxu0 0.0
  %v2500 = vand.u32 %v941, 4294901760
  %v2501 = vsub.f32 %v941, %v2500
  %v2502 = vand.u32 %v2501, 4294901760
  %2503 = vmatpush1.msra.mxu0 %v2502
  %2504 = vmatprep.subr.mxu0 0.0
  %v2505 = vand.u32 %v942, 4294901760
  %v2506 = vsub.f32 %v942, %v2505
  %v2507 = vand.u32 %v2506, 4294901760
  %2508 = vmatpush1.msra.mxu0 %v2507
  %2509 = vmatprep.subr.mxu0 0.0
  %v2510 = vand.u32 %v943, 4294901760
  %v2511 = vsub.f32 %v943, %v2510
  %v2512 = vand.u32 %v2511, 4294901760
  %2513 = vmatpush1.msra.mxu0 %v2512
  %2514 = vmatprep.subr.mxu0 0.0
  %v2515 = vand.u32 %v944, 4294901760
  %v2516 = vsub.f32 %v944, %v2515
  %v2517 = vand.u32 %v2516, 4294901760
  %2518 = vmatpush1.msra.mxu0 %v2517
  %2519 = vmatprep.subr.mxu0 0.0
  %v2520 = vand.u32 %v945, 4294901760
  %v2521 = vsub.f32 %v945, %v2520
  %v2522 = vand.u32 %v2521, 4294901760
  %2523 = vmatpush1.msra.mxu0 %v2522
  %2524 = vmatprep.subr.mxu0 0.0
  %v2525 = vand.u32 %v946, 4294901760
  %v2526 = vsub.f32 %v946, %v2525
  %v2527 = vand.u32 %v2526, 4294901760
  %2528 = vmatpush1.msra.mxu0 %v2527
  %2529 = vmatprep.subr.mxu0 0.0
  %v2530 = vand.u32 %v947, 4294901760
  %v2531 = vsub.f32 %v947, %v2530
  %v2532 = vand.u32 %v2531, 4294901760
  %2533 = vmatpush1.msra.mxu0 %v2532
  %2534 = vmatprep.subr.mxu0 0.0
  %v2535 = vand.u32 %v948, 4294901760
  %v2536 = vsub.f32 %v948, %v2535
  %v2537 = vand.u32 %v2536, 4294901760
  %2538 = vmatpush1.msra.mxu0 %v2537
  %2539 = vmatprep.subr.mxu0 0.0
  %v2540 = vand.u32 %v949, 4294901760
  %v2541 = vsub.f32 %v949, %v2540
  %v2542 = vand.u32 %v2541, 4294901760
  %2543 = vmatpush1.msra.mxu0 %v2542
  %2544 = vmatprep.subr.mxu0 0.0
  %v2545 = vand.u32 %v950, 4294901760
  %v2546 = vsub.f32 %v950, %v2545
  %v2547 = vand.u32 %v2546, 4294901760
  %2548 = vmatpush1.msra.mxu0 %v2547
  %2549 = vmatprep.subr.mxu0 0.0
  %v2550 = vand.u32 %v951, 4294901760
  %v2551 = vsub.f32 %v951, %v2550
  %v2552 = vand.u32 %v2551, 4294901760
  %2553 = vmatpush1.msra.mxu0 %v2552
  %2554 = vmatprep.subr.mxu0 0.0
  %v2555 = vand.u32 %v952, 4294901760
  %v2556 = vsub.f32 %v952, %v2555
  %v2557 = vand.u32 %v2556, 4294901760
  %2558 = vmatpush1.msra.mxu0 %v2557
  %2559 = vmatprep.subr.mxu0 0.0
  %v2560 = vand.u32 %v953, 4294901760
  %v2561 = vsub.f32 %v953, %v2560
  %v2562 = vand.u32 %v2561, 4294901760
  %2563 = vmatpush1.msra.mxu0 %v2562
  %2564 = vmatprep.subr.mxu0 0.0
  %v2565 = vand.u32 %v954, 4294901760
  %v2566 = vsub.f32 %v954, %v2565
  %v2567 = vand.u32 %v2566, 4294901760
  %2568 = vmatpush1.msra.mxu0 %v2567
  %2569 = vmatprep.subr.mxu0 0.0
  %2570 = vmatpush1.msra.mxu0 0.0
  %2571 = vmatprep.subr.mxu0 0.0
  %2572 = vmatpush1.msra.mxu0 0.0
  %2573 = vmatprep.subr.mxu0 0.0
  %2574 = vmatpush1.msra.mxu0 0.0
  %2575 = vmatprep.subr.mxu0 0.0
  %2576 = vmatpush1.msra.mxu0 0.0
  %2577 = vmatprep.subr.mxu0 0.0
  %2578 = vmatpush1.msra.mxu0 0.0
  %2579 = vmatprep.subr.mxu0 0.0
  %2580 = vmatpush1.msra.mxu0 0.0
  %2581 = vmatprep.subr.mxu0 0.0
  %2582 = vmatpush1.msra.mxu0 0.0
  %2583 = vmatprep.subr.mxu0 0.0
  %2584 = vmatpush1.msra.mxu0 0.0
  %2585 = vmatprep.subr.mxu0 0.0
  %2586 = vmatpush1.msra.mxu0 0.0
  %2587 = vmatprep.subr.mxu0 0.0
  %2588 = vmatpush1.msra.mxu0 0.0
  %2589 = vmatprep.subr.mxu0 0.0
  %2590 = vmatpush1.msra.mxu0 0.0
  %2591 = vmatprep.subr.mxu0 0.0
  %2592 = vmatpush1.msra.mxu0 0.0
  %2593 = vmatprep.subr.mxu0 0.0
  %2594 = vmatpush1.msra.mxu0 0.0
  %2595 = vmatprep.subr.mxu0 0.0
  %2596 = vmatpush1.msra.mxu0 0.0
  %2597 = vmatprep.subr.mxu0 0.0
  %2598 = vmatpush1.msra.mxu0 0.0
  %2599 = vmatprep.subr.mxu0 0.0
  %2600 = vmatpush1.msra.mxu0 0.0
  %2601 = vmatprep.mubr.f32.mxu0 0.0
  %v2602 = vand.u32 %v2053, 4294901760
  %2603 = vmatmul.mubr.f32.gmra.mrb[0].mxu0 %v2602
  %v2604 = vpop.f32.mrb[0].mxu0
  %v2605 = vadd.f32 %v2486, %v2604
  %v2606 = vpop.f32.mrb[0].mxu0
  %2607 = vdwg.mxu0
  %2608 = vmatprep.subr.mxu0 0.0
  %v2609 = vand.u32 %v939, 4294901760
  %2610 = vmatpush1.msra.mxu0 %v2609
  %2611 = vmatprep.subr.mxu0 0.0
  %v2612 = vand.u32 %v940, 4294901760
  %2613 = vmatpush1.msra.mxu0 %v2612
  %2614 = vmatprep.subr.mxu0 0.0
  %v2615 = vand.u32 %v941, 4294901760
  %2616 = vmatpush1.msra.mxu0 %v2615
  %2617 = vmatprep.subr.mxu0 0.0
  %v2618 = vand.u32 %v942, 4294901760
  %2619 = vmatpush1.msra.mxu0 %v2618
  %2620 = vmatprep.subr.mxu0 0.0
  %v2621 = vand.u32 %v943, 4294901760
  %2622 = vmatpush1.msra.mxu0 %v2621
  %2623 = vmatprep.subr.mxu0 0.0
  %v2624 = vand.u32 %v944, 4294901760
  %2625 = vmatpush1.msra.mxu0 %v2624
  %2626 = vmatprep.subr.mxu0 0.0
  %v2627 = vand.u32 %v945, 4294901760
  %2628 = vmatpush1.msra.mxu0 %v2627
  %2629 = vmatprep.subr.mxu0 0.0
  %v2630 = vand.u32 %v946, 4294901760
  %2631 = vmatpush1.msra.mxu0 %v2630
  %2632 = vmatprep.subr.mxu0 0.0
  %v2633 = vand.u32 %v947, 4294901760
  %2634 = vmatpush1.msra.mxu0 %v2633
  %2635 = vmatprep.subr.mxu0 0.0
  %v2636 = vand.u32 %v948, 4294901760
  %2637 = vmatpush1.msra.mxu0 %v2636
  %2638 = vmatprep.subr.mxu0 0.0
  %v2639 = vand.u32 %v949, 4294901760
  %2640 = vmatpush1.msra.mxu0 %v2639
  %2641 = vmatprep.subr.mxu0 0.0
  %v2642 = vand.u32 %v950, 4294901760
  %2643 = vmatpush1.msra.mxu0 %v2642
  %2644 = vmatprep.subr.mxu0 0.0
  %v2645 = vand.u32 %v951, 4294901760
  %2646 = vmatpush1.msra.mxu0 %v2645
  %2647 = vmatprep.subr.mxu0 0.0
  %v2648 = vand.u32 %v952, 4294901760
  %2649 = vmatpush1.msra.mxu0 %v2648
  %2650 = vmatprep.subr.mxu0 0.0
  %v2651 = vand.u32 %v953, 4294901760
  %2652 = vmatpush1.msra.mxu0 %v2651
  %2653 = vmatprep.subr.mxu0 0.0
  %v2654 = vand.u32 %v954, 4294901760
  %2655 = vmatpush1.msra.mxu0 %v2654
  %2656 = vmatprep.subr.mxu0 0.0
  %2657 = vmatpush1.msra.mxu0 0.0
  %2658 = vmatprep.subr.mxu0 0.0
  %2659 = vmatpush1.msra.mxu0 0.0
  %2660 = vmatprep.subr.mxu0 0.0
  %2661 = vmatpush1.msra.mxu0 0.0
  %2662 = vmatprep.subr.mxu0 0.0
  %2663 = vmatpush1.msra.mxu0 0.0
  %2664 = vmatprep.subr.mxu0 0.0
  %2665 = vmatpush1.msra.mxu0 0.0
  %2666 = vmatprep.subr.mxu0 0.0
  %2667 = vmatpush1.msra.mxu0 0.0
  %2668 = vmatprep.subr.mxu0 0.0
  %2669 = vmatpush1.msra.mxu0 0.0
  %2670 = vmatprep.subr.mxu0 0.0
  %2671 = vmatpush1.msra.mxu0 0.0
  %2672 = vmatprep.subr.mxu0 0.0
  %2673 = vmatpush1.msra.mxu0 0.0
  %2674 = vmatprep.subr.mxu0 0.0
  %2675 = vmatpush1.msra.mxu0 0.0
  %2676 = vmatprep.subr.mxu0 0.0
  %2677 = vmatpush1.msra.mxu0 0.0
  %2678 = vmatprep.subr.mxu0 0.0
  %2679 = vmatpush1.msra.mxu0 0.0
  %2680 = vmatprep.subr.mxu0 0.0
  %2681 = vmatpush1.msra.mxu0 0.0
  %2682 = vmatprep.subr.mxu0 0.0
  %2683 = vmatpush1.msra.mxu0 0.0
  %2684 = vmatprep.subr.mxu0 0.0
  %2685 = vmatpush1.msra.mxu0 0.0
  %2686 = vmatprep.subr.mxu0 0.0
  %2687 = vmatpush1.msra.mxu0 0.0
  %2688 = vmatprep.mubr.f32.mxu0 0.0
  %v2689 = vand.u32 %v2053, 4294901760
  %2690 = vmatmul.mubr.f32.gmra.mrb[0].mxu0 %v2689
  %v2691 = vpop.f32.mrb[0].mxu0
  %v2692 = vadd.f32 %v2605, %v2691
  %v2693 = vpop.f32.mrb[0].mxu0
  %2694 = vdwg.mxu0
  %v2695 = vmul.f32 %v2692, 0.03125
  %v2696 = vadd.f32 %v2695, 1e-05
  %v2697 = vrsqrt.pop %v2696
  %v2699 = vsel %vm1598, %v2697, 0
  %2701 = vmatprep.subr.mxu0 0.0
  %v2702 = vand.u32 %v1604, 4294901760
  %2703 = vmatpush1.msra.mxu0 %v2702
  %2704 = vmatprep.subr.mxu0 0.0
  %2705 = vmatpush1.msra.mxu0 0.0
  %2706 = vmatprep.subr.mxu0 0.0
  %2707 = vmatpush1.msra.mxu0 0.0
  %2708 = vmatprep.subr.mxu0 0.0
  %2709 = vmatpush1.msra.mxu0 0.0
  %2710 = vmatprep.subr.mxu0 0.0
  %2711 = vmatpush1.msra.mxu0 0.0
  %2712 = vmatprep.subr.mxu0 0.0
  %2713 = vmatpush1.msra.mxu0 0.0
  %2714 = vmatprep.subr.mxu0 0.0
  %2715 = vmatpush1.msra.mxu0 0.0
  %2716 = vmatprep.subr.mxu0 0.0
  %2717 = vmatpush1.msra.mxu0 0.0
  %2718 = vmatprep.subr.mxu0 0.0
  %2719 = vmatpush1.msra.mxu0 0.0
  %2720 = vmatprep.subr.mxu0 0.0
  %2721 = vmatpush1.msra.mxu0 0.0
  %2722 = vmatprep.subr.mxu0 0.0
  %2723 = vmatpush1.msra.mxu0 0.0
  %2724 = vmatprep.subr.mxu0 0.0
  %2725 = vmatpush1.msra.mxu0 0.0
  %2726 = vmatprep.subr.mxu0 0.0
  %2727 = vmatpush1.msra.mxu0 0.0
  %2728 = vmatprep.subr.mxu0 0.0
  %2729 = vmatpush1.msra.mxu0 0.0
  %2730 = vmatprep.subr.mxu0 0.0
  %2731 = vmatpush1.msra.mxu0 0.0
  %2732 = vmatprep.subr.mxu0 0.0
  %2733 = vmatpush1.msra.mxu0 0.0
  %2734 = vmatprep.subr.mxu0 0.0
  %2735 = vmatpush1.msra.mxu0 0.0
  %2736 = vmatprep.subr.mxu0 0.0
  %2737 = vmatpush1.msra.mxu0 0.0
  %2738 = vmatprep.subr.mxu0 0.0
  %2739 = vmatpush1.msra.mxu0 0.0
  %2740 = vmatprep.subr.mxu0 0.0
  %2741 = vmatpush1.msra.mxu0 0.0
  %2742 = vmatprep.subr.mxu0 0.0
  %2743 = vmatpush1.msra.mxu0 0.0
  %2744 = vmatprep.subr.mxu0 0.0
  %2745 = vmatpush1.msra.mxu0 0.0
  %2746 = vmatprep.subr.mxu0 0.0
  %2747 = vmatpush1.msra.mxu0 0.0
  %2748 = vmatprep.subr.mxu0 0.0
  %2749 = vmatpush1.msra.mxu0 0.0
  %2750 = vmatprep.subr.mxu0 0.0
  %2751 = vmatpush1.msra.mxu0 0.0
  %2752 = vmatprep.subr.mxu0 0.0
  %2753 = vmatpush1.msra.mxu0 0.0
  %2754 = vmatprep.subr.mxu0 0.0
  %2755 = vmatpush1.msra.mxu0 0.0
  %2756 = vmatprep.subr.mxu0 0.0
  %2757 = vmatpush1.msra.mxu0 0.0
  %2758 = vmatprep.subr.mxu0 0.0
  %2759 = vmatpush1.msra.mxu0 0.0
  %2760 = vmatprep.subr.mxu0 0.0
  %2761 = vmatpush1.msra.mxu0 0.0
  %2762 = vmatprep.subr.mxu0 0.0
  %2763 = vmatpush1.msra.mxu0 0.0
  %2764 = vmatprep.subr.mxu0 0.0
  %2765 = vmatpush1.msra.mxu0 0.0
  %2766 = vmatprep.mubr.f32.mxu0 0.0
  %v2767 = vand.u32 %v2699, 4294901760
  %v2768 = vsub.f32 %v2699, %v2767
  %v2769 = vand.u32 %v2768, 4294901760
  %v2770 = vsub.f32 %v2768, %v2769
  %v2771 = vand.u32 %v2770, 4294901760
  %2772 = vmatmul.mubr.f32.gmra.mrb[0].mxu0 %v2771
  %v2773 = vpop.f32.mrb[0].mxu0
  %v2774 = vadd.f32 0.0, %v2773
  %v2775 = vpop.f32.mrb[0].mxu0
  %2776 = vdwg.mxu0
  %2777 = vmatprep.subr.mxu0 0.0
  %v2778 = vand.u32 %v1604, 4294901760
  %v2779 = vsub.f32 %v1604, %v2778
  %v2780 = vand.u32 %v2779, 4294901760
  %v2781 = vsub.f32 %v2779, %v2780
  %v2782 = vand.u32 %v2781, 4294901760
  %2783 = vmatpush1.msra.mxu0 %v2782
  %2784 = vmatprep.subr.mxu0 0.0
  %2785 = vmatpush1.msra.mxu0 0.0
  %2786 = vmatprep.subr.mxu0 0.0
  %2787 = vmatpush1.msra.mxu0 0.0
  %2788 = vmatprep.subr.mxu0 0.0
  %2789 = vmatpush1.msra.mxu0 0.0
  %2790 = vmatprep.subr.mxu0 0.0
  %2791 = vmatpush1.msra.mxu0 0.0
  %2792 = vmatprep.subr.mxu0 0.0
  %2793 = vmatpush1.msra.mxu0 0.0
  %2794 = vmatprep.subr.mxu0 0.0
  %2795 = vmatpush1.msra.mxu0 0.0
  %2796 = vmatprep.subr.mxu0 0.0
  %2797 = vmatpush1.msra.mxu0 0.0
  %2798 = vmatprep.subr.mxu0 0.0
  %2799 = vmatpush1.msra.mxu0 0.0
  %2800 = vmatprep.subr.mxu0 0.0
  %2801 = vmatpush1.msra.mxu0 0.0
  %2802 = vmatprep.subr.mxu0 0.0
  %2803 = vmatpush1.msra.mxu0 0.0
  %2804 = vmatprep.subr.mxu0 0.0
  %2805 = vmatpush1.msra.mxu0 0.0
  %2806 = vmatprep.subr.mxu0 0.0
  %2807 = vmatpush1.msra.mxu0 0.0
  %2808 = vmatprep.subr.mxu0 0.0
  %2809 = vmatpush1.msra.mxu0 0.0
  %2810 = vmatprep.subr.mxu0 0.0
  %2811 = vmatpush1.msra.mxu0 0.0
  %2812 = vmatprep.subr.mxu0 0.0
  %2813 = vmatpush1.msra.mxu0 0.0
  %2814 = vmatprep.subr.mxu0 0.0
  %2815 = vmatpush1.msra.mxu0 0.0
  %2816 = vmatprep.subr.mxu0 0.0
  %2817 = vmatpush1.msra.mxu0 0.0
  %2818 = vmatprep.subr.mxu0 0.0
  %2819 = vmatpush1.msra.mxu0 0.0
  %2820 = vmatprep.subr.mxu0 0.0
  %2821 = vmatpush1.msra.mxu0 0.0
  %2822 = vmatprep.subr.mxu0 0.0
  %2823 = vmatpush1.msra.mxu0 0.0
  %2824 = vmatprep.subr.mxu0 0.0
  %2825 = vmatpush1.msra.mxu0 0.0
  %2826 = vmatprep.subr.mxu0 0.0
  %2827 = vmatpush1.msra.mxu0 0.0
  %2828 = vmatprep.subr.mxu0 0.0
  %2829 = vmatpush1.msra.mxu0 0.0
  %2830 = vmatprep.subr.mxu0 0.0
  %2831 = vmatpush1.msra.mxu0 0.0
  %2832 = vmatprep.subr.mxu0 0.0
  %2833 = vmatpush1.msra.mxu0 0.0
  %2834 = vmatprep.subr.mxu0 0.0
  %2835 = vmatpush1.msra.mxu0 0.0
  %2836 = vmatprep.subr.mxu0 0.0
  %2837 = vmatpush1.msra.mxu0 0.0
  %2838 = vmatprep.subr.mxu0 0.0
  %2839 = vmatpush1.msra.mxu0 0.0
  %2840 = vmatprep.subr.mxu0 0.0
  %2841 = vmatpush1.msra.mxu0 0.0
  %2842 = vmatprep.subr.mxu0 0.0
  %2843 = vmatpush1.msra.mxu0 0.0
  %2844 = vmatprep.subr.mxu0 0.0
  %2845 = vmatpush1.msra.mxu0 0.0
  %2846 = vmatprep.mubr.f32.mxu0 0.0
  %v2847 = vand.u32 %v2699, 4294901760
  %2848 = vmatmul.mubr.f32.gmra.mrb[0].mxu0 %v2847
  %v2849 = vpop.f32.mrb[0].mxu0
  %v2850 = vadd.f32 %v2774, %v2849
  %v2851 = vpop.f32.mrb[0].mxu0
  %2852 = vdwg.mxu0
  %2853 = vmatprep.subr.mxu0 0.0
  %v2854 = vand.u32 %v1604, 4294901760
  %v2855 = vsub.f32 %v1604, %v2854
  %2856 = vmatpush1.msra.mxu0 %v2855
  %2857 = vmatprep.subr.mxu0 0.0
  %2858 = vmatpush1.msra.mxu0 0.0
  %2859 = vmatprep.subr.mxu0 0.0
  %2860 = vmatpush1.msra.mxu0 0.0
  %2861 = vmatprep.subr.mxu0 0.0
  %2862 = vmatpush1.msra.mxu0 0.0
  %2863 = vmatprep.subr.mxu0 0.0
  %2864 = vmatpush1.msra.mxu0 0.0
  %2865 = vmatprep.subr.mxu0 0.0
  %2866 = vmatpush1.msra.mxu0 0.0
  %2867 = vmatprep.subr.mxu0 0.0
  %2868 = vmatpush1.msra.mxu0 0.0
  %2869 = vmatprep.subr.mxu0 0.0
  %2870 = vmatpush1.msra.mxu0 0.0
  %2871 = vmatprep.subr.mxu0 0.0
  %2872 = vmatpush1.msra.mxu0 0.0
  %2873 = vmatprep.subr.mxu0 0.0
  %2874 = vmatpush1.msra.mxu0 0.0
  %2875 = vmatprep.subr.mxu0 0.0
  %2876 = vmatpush1.msra.mxu0 0.0
  %2877 = vmatprep.subr.mxu0 0.0
  %2878 = vmatpush1.msra.mxu0 0.0
  %2879 = vmatprep.subr.mxu0 0.0
  %2880 = vmatpush1.msra.mxu0 0.0
  %2881 = vmatprep.subr.mxu0 0.0
  %2882 = vmatpush1.msra.mxu0 0.0
  %2883 = vmatprep.subr.mxu0 0.0
  %2884 = vmatpush1.msra.mxu0 0.0
  %2885 = vmatprep.subr.mxu0 0.0
  %2886 = vmatpush1.msra.mxu0 0.0
  %2887 = vmatprep.subr.mxu0 0.0
  %2888 = vmatpush1.msra.mxu0 0.0
  %2889 = vmatprep.subr.mxu0 0.0
  %2890 = vmatpush1.msra.mxu0 0.0
  %2891 = vmatprep.subr.mxu0 0.0
  %2892 = vmatpush1.msra.mxu0 0.0
  %2893 = vmatprep.subr.mxu0 0.0
  %2894 = vmatpush1.msra.mxu0 0.0
  %2895 = vmatprep.subr.mxu0 0.0
  %2896 = vmatpush1.msra.mxu0 0.0
  %2897 = vmatprep.subr.mxu0 0.0
  %2898 = vmatpush1.msra.mxu0 0.0
  %2899 = vmatprep.subr.mxu0 0.0
  %2900 = vmatpush1.msra.mxu0 0.0
  %2901 = vmatprep.subr.mxu0 0.0
  %2902 = vmatpush1.msra.mxu0 0.0
  %2903 = vmatprep.subr.mxu0 0.0
  %2904 = vmatpush1.msra.mxu0 0.0
  %2905 = vmatprep.subr.mxu0 0.0
  %2906 = vmatpush1.msra.mxu0 0.0
  %2907 = vmatprep.subr.mxu0 0.0
  %2908 = vmatpush1.msra.mxu0 0.0
  %2909 = vmatprep.subr.mxu0 0.0
  %2910 = vmatpush1.msra.mxu0 0.0
  %2911 = vmatprep.subr.mxu0 0.0
  %2912 = vmatpush1.msra.mxu0 0.0
  %2913 = vmatprep.subr.mxu0 0.0
  %2914 = vmatpush1.msra.mxu0 0.0
  %2915 = vmatprep.subr.mxu0 0.0
  %2916 = vmatpush1.msra.mxu0 0.0
  %2917 = vmatprep.subr.mxu0 0.0
  %2918 = vmatpush1.msra.mxu0 0.0
  %2919 = vmatprep.mubr.f32.mxu0 0.0
  %v2920 = vand.u32 %v2699, 4294901760
  %v2921 = vsub.f32 %v2699, %v2920
  %2922 = vmatmul.mubr.f32.gmra.mrb[0].mxu0 %v2921
  %v2923 = vpop.f32.mrb[0].mxu0
  %v2924 = vadd.f32 %v2850, %v2923
  %v2925 = vpop.f32.mrb[0].mxu0
  %2926 = vdwg.mxu0
  %2927 = vmatprep.subr.mxu0 0.0
  %v2928 = vand.u32 %v1604, 4294901760
  %2929 = vmatpush1.msra.mxu0 %v2928
  %2930 = vmatprep.subr.mxu0 0.0
  %2931 = vmatpush1.msra.mxu0 0.0
  %2932 = vmatprep.subr.mxu0 0.0
  %2933 = vmatpush1.msra.mxu0 0.0
  %2934 = vmatprep.subr.mxu0 0.0
  %2935 = vmatpush1.msra.mxu0 0.0
  %2936 = vmatprep.subr.mxu0 0.0
  %2937 = vmatpush1.msra.mxu0 0.0
  %2938 = vmatprep.subr.mxu0 0.0
  %2939 = vmatpush1.msra.mxu0 0.0
  %2940 = vmatprep.subr.mxu0 0.0
  %2941 = vmatpush1.msra.mxu0 0.0
  %2942 = vmatprep.subr.mxu0 0.0
  %2943 = vmatpush1.msra.mxu0 0.0
  %2944 = vmatprep.subr.mxu0 0.0
  %2945 = vmatpush1.msra.mxu0 0.0
  %2946 = vmatprep.subr.mxu0 0.0
  %2947 = vmatpush1.msra.mxu0 0.0
  %2948 = vmatprep.subr.mxu0 0.0
  %2949 = vmatpush1.msra.mxu0 0.0
  %2950 = vmatprep.subr.mxu0 0.0
  %2951 = vmatpush1.msra.mxu0 0.0
  %2952 = vmatprep.subr.mxu0 0.0
  %2953 = vmatpush1.msra.mxu0 0.0
  %2954 = vmatprep.subr.mxu0 0.0
  %2955 = vmatpush1.msra.mxu0 0.0
  %2956 = vmatprep.subr.mxu0 0.0
  %2957 = vmatpush1.msra.mxu0 0.0
  %2958 = vmatprep.subr.mxu0 0.0
  %2959 = vmatpush1.msra.mxu0 0.0
  %2960 = vmatprep.subr.mxu0 0.0
  %2961 = vmatpush1.msra.mxu0 0.0
  %2962 = vmatprep.subr.mxu0 0.0
  %2963 = vmatpush1.msra.mxu0 0.0
  %2964 = vmatprep.subr.mxu0 0.0
  %2965 = vmatpush1.msra.mxu0 0.0
  %2966 = vmatprep.subr.mxu0 0.0
  %2967 = vmatpush1.msra.mxu0 0.0
  %2968 = vmatprep.subr.mxu0 0.0
  %2969 = vmatpush1.msra.mxu0 0.0
  %2970 = vmatprep.subr.mxu0 0.0
  %2971 = vmatpush1.msra.mxu0 0.0
  %2972 = vmatprep.subr.mxu0 0.0
  %2973 = vmatpush1.msra.mxu0 0.0
  %2974 = vmatprep.subr.mxu0 0.0
  %2975 = vmatpush1.msra.mxu0 0.0
  %2976 = vmatprep.subr.mxu0 0.0
  %2977 = vmatpush1.msra.mxu0 0.0
  %2978 = vmatprep.subr.mxu0 0.0
  %2979 = vmatpush1.msra.mxu0 0.0
  %2980 = vmatprep.subr.mxu0 0.0
  %2981 = vmatpush1.msra.mxu0 0.0
  %2982 = vmatprep.subr.mxu0 0.0
  %2983 = vmatpush1.msra.mxu0 0.0
  %2984 = vmatprep.subr.mxu0 0.0
  %2985 = vmatpush1.msra.mxu0 0.0
  %2986 = vmatprep.subr.mxu0 0.0
  %2987 = vmatpush1.msra.mxu0 0.0
  %2988 = vmatprep.subr.mxu0 0.0
  %2989 = vmatpush1.msra.mxu0 0.0
  %2990 = vmatprep.subr.mxu0 0.0
  %2991 = vmatpush1.msra.mxu0 0.0
  %2992 = vmatprep.mubr.f32.mxu0 0.0
  %v2993 = vand.u32 %v2699, 4294901760
  %v2994 = vsub.f32 %v2699, %v2993
  %v2995 = vand.u32 %v2994, 4294901760
  %2996 = vmatmul.mubr.f32.gmra.mrb[0].mxu0 %v2995
  %v2997 = vpop.f32.mrb[0].mxu0
  %v2998 = vadd.f32 %v2924, %v2997
  %v2999 = vpop.f32.mrb[0].mxu0
  %3000 = vdwg.mxu0
  %3001 = vmatprep.subr.mxu0 0.0
  %v3002 = vand.u32 %v1604, 4294901760
  %v3003 = vsub.f32 %v1604, %v3002
  %v3004 = vand.u32 %v3003, 4294901760
  %3005 = vmatpush1.msra.mxu0 %v3004
  %3006 = vmatprep.subr.mxu0 0.0
  %3007 = vmatpush1.msra.mxu0 0.0
  %3008 = vmatprep.subr.mxu0 0.0
  %3009 = vmatpush1.msra.mxu0 0.0
  %3010 = vmatprep.subr.mxu0 0.0
  %3011 = vmatpush1.msra.mxu0 0.0
  %3012 = vmatprep.subr.mxu0 0.0
  %3013 = vmatpush1.msra.mxu0 0.0
  %3014 = vmatprep.subr.mxu0 0.0
  %3015 = vmatpush1.msra.mxu0 0.0
  %3016 = vmatprep.subr.mxu0 0.0
  %3017 = vmatpush1.msra.mxu0 0.0
  %3018 = vmatprep.subr.mxu0 0.0
  %3019 = vmatpush1.msra.mxu0 0.0
  %3020 = vmatprep.subr.mxu0 0.0
  %3021 = vmatpush1.msra.mxu0 0.0
  %3022 = vmatprep.subr.mxu0 0.0
  %3023 = vmatpush1.msra.mxu0 0.0
  %3024 = vmatprep.subr.mxu0 0.0
  %3025 = vmatpush1.msra.mxu0 0.0
  %3026 = vmatprep.subr.mxu0 0.0
  %3027 = vmatpush1.msra.mxu0 0.0
  %3028 = vmatprep.subr.mxu0 0.0
  %3029 = vmatpush1.msra.mxu0 0.0
  %3030 = vmatprep.subr.mxu0 0.0
  %3031 = vmatpush1.msra.mxu0 0.0
  %3032 = vmatprep.subr.mxu0 0.0
  %3033 = vmatpush1.msra.mxu0 0.0
  %3034 = vmatprep.subr.mxu0 0.0
  %3035 = vmatpush1.msra.mxu0 0.0
  %3036 = vmatprep.subr.mxu0 0.0
  %3037 = vmatpush1.msra.mxu0 0.0
  %3038 = vmatprep.subr.mxu0 0.0
  %3039 = vmatpush1.msra.mxu0 0.0
  %3040 = vmatprep.subr.mxu0 0.0
  %3041 = vmatpush1.msra.mxu0 0.0
  %3042 = vmatprep.subr.mxu0 0.0
  %3043 = vmatpush1.msra.mxu0 0.0
  %3044 = vmatprep.subr.mxu0 0.0
  %3045 = vmatpush1.msra.mxu0 0.0
  %3046 = vmatprep.subr.mxu0 0.0
  %3047 = vmatpush1.msra.mxu0 0.0
  %3048 = vmatprep.subr.mxu0 0.0
  %3049 = vmatpush1.msra.mxu0 0.0
  %3050 = vmatprep.subr.mxu0 0.0
  %3051 = vmatpush1.msra.mxu0 0.0
  %3052 = vmatprep.subr.mxu0 0.0
  %3053 = vmatpush1.msra.mxu0 0.0
  %3054 = vmatprep.subr.mxu0 0.0
  %3055 = vmatpush1.msra.mxu0 0.0
  %3056 = vmatprep.subr.mxu0 0.0
  %3057 = vmatpush1.msra.mxu0 0.0
  %3058 = vmatprep.subr.mxu0 0.0
  %3059 = vmatpush1.msra.mxu0 0.0
  %3060 = vmatprep.subr.mxu0 0.0
  %3061 = vmatpush1.msra.mxu0 0.0
  %3062 = vmatprep.subr.mxu0 0.0
  %3063 = vmatpush1.msra.mxu0 0.0
  %3064 = vmatprep.subr.mxu0 0.0
  %3065 = vmatpush1.msra.mxu0 0.0
  %3066 = vmatprep.subr.mxu0 0.0
  %3067 = vmatpush1.msra.mxu0 0.0
  %3068 = vmatprep.mubr.f32.mxu0 0.0
  %v3069 = vand.u32 %v2699, 4294901760
  %3070 = vmatmul.mubr.f32.gmra.mrb[0].mxu0 %v3069
  %v3071 = vpop.f32.mrb[0].mxu0
  %v3072 = vadd.f32 %v2998, %v3071
  %v3073 = vpop.f32.mrb[0].mxu0
  %3074 = vdwg.mxu0
  %3075 = vmatprep.subr.mxu0 0.0
  %v3076 = vand.u32 %v1604, 4294901760
  %3077 = vmatpush1.msra.mxu0 %v3076
  %3078 = vmatprep.subr.mxu0 0.0
  %3079 = vmatpush1.msra.mxu0 0.0
  %3080 = vmatprep.subr.mxu0 0.0
  %3081 = vmatpush1.msra.mxu0 0.0
  %3082 = vmatprep.subr.mxu0 0.0
  %3083 = vmatpush1.msra.mxu0 0.0
  %3084 = vmatprep.subr.mxu0 0.0
  %3085 = vmatpush1.msra.mxu0 0.0
  %3086 = vmatprep.subr.mxu0 0.0
  %3087 = vmatpush1.msra.mxu0 0.0
  %3088 = vmatprep.subr.mxu0 0.0
  %3089 = vmatpush1.msra.mxu0 0.0
  %3090 = vmatprep.subr.mxu0 0.0
  %3091 = vmatpush1.msra.mxu0 0.0
  %3092 = vmatprep.subr.mxu0 0.0
  %3093 = vmatpush1.msra.mxu0 0.0
  %3094 = vmatprep.subr.mxu0 0.0
  %3095 = vmatpush1.msra.mxu0 0.0
  %3096 = vmatprep.subr.mxu0 0.0
  %3097 = vmatpush1.msra.mxu0 0.0
  %3098 = vmatprep.subr.mxu0 0.0
  %3099 = vmatpush1.msra.mxu0 0.0
  %3100 = vmatprep.subr.mxu0 0.0
  %3101 = vmatpush1.msra.mxu0 0.0
  %3102 = vmatprep.subr.mxu0 0.0
  %3103 = vmatpush1.msra.mxu0 0.0
  %3104 = vmatprep.subr.mxu0 0.0
  %3105 = vmatpush1.msra.mxu0 0.0
  %3106 = vmatprep.subr.mxu0 0.0
  %3107 = vmatpush1.msra.mxu0 0.0
  %3108 = vmatprep.subr.mxu0 0.0
  %3109 = vmatpush1.msra.mxu0 0.0
  %3110 = vmatprep.subr.mxu0 0.0
  %3111 = vmatpush1.msra.mxu0 0.0
  %3112 = vmatprep.subr.mxu0 0.0
  %3113 = vmatpush1.msra.mxu0 0.0
  %3114 = vmatprep.subr.mxu0 0.0
  %3115 = vmatpush1.msra.mxu0 0.0
  %3116 = vmatprep.subr.mxu0 0.0
  %3117 = vmatpush1.msra.mxu0 0.0
  %3118 = vmatprep.subr.mxu0 0.0
  %3119 = vmatpush1.msra.mxu0 0.0
  %3120 = vmatprep.subr.mxu0 0.0
  %3121 = vmatpush1.msra.mxu0 0.0
  %3122 = vmatprep.subr.mxu0 0.0
  %3123 = vmatpush1.msra.mxu0 0.0
  %3124 = vmatprep.subr.mxu0 0.0
  %3125 = vmatpush1.msra.mxu0 0.0
  %3126 = vmatprep.subr.mxu0 0.0
  %3127 = vmatpush1.msra.mxu0 0.0
  %3128 = vmatprep.subr.mxu0 0.0
  %3129 = vmatpush1.msra.mxu0 0.0
  %3130 = vmatprep.subr.mxu0 0.0
  %3131 = vmatpush1.msra.mxu0 0.0
  %3132 = vmatprep.subr.mxu0 0.0
  %3133 = vmatpush1.msra.mxu0 0.0
  %3134 = vmatprep.subr.mxu0 0.0
  %3135 = vmatpush1.msra.mxu0 0.0
  %3136 = vmatprep.subr.mxu0 0.0
  %3137 = vmatpush1.msra.mxu0 0.0
  %3138 = vmatprep.subr.mxu0 0.0
  %3139 = vmatpush1.msra.mxu0 0.0
  %3140 = vmatprep.mubr.f32.mxu0 0.0
  %v3141 = vand.u32 %v2699, 4294901760
  %3142 = vmatmul.mubr.f32.gmra.mrb[0].mxu0 %v3141
  %v3143 = vpop.f32.mrb[0].mxu0
  %v3144 = vadd.f32 %v3072, %v3143
  %v3145 = vpop.f32.mrb[0].mxu0
  %3146 = vdwg.mxu0
  %v3147 = vld [vmem:[%s6] sm:$0x1]
  %v3149 = vlaneseq
  %v3150 = vshrl.u32 %v3149, 7
  %v3151 = vsub.s32 0, %v3150
  %v3152 = vrot.slane %v3147, %v3151
  %v3154 = vmul.f32 %v3144, %v3152
  %v3155 = vmul.f32 %v2052, %v3154
  %v3156 = vld [vmem:[%s7] sm:$0x1]
  %v3158 = vlaneseq
  %v3159 = vshrl.u32 %v3158, 7
  %v3160 = vsub.s32 0, %v3159
  %v3161 = vrot.slane %v3156, %v3160
  %v3163 = vadd.f32 %v3155, %v3161
  %3164 = vst [vmem:[%s9] sm:$0xff] %v3163
  // Predicated region
  $region34: #{fused_parallel_pipelines.1} parent=0 // pred_check
    _
  $region35: #{fused_parallel_pipelines.1} parent=0 // pred_check_branch
    %3166 = sbr.rel (0) target = $region37
  $region36: #{fused_parallel_pipelines.1} parent=0 // pred_region
    _
  $region37: #{fused_parallel_pipelines.1} parent=0 // pred_fallthru
    _
  // Predicated region
  $region38: #{fused_parallel_pipelines.1} parent=0 // pred_check
    _
  $region39: #{fused_parallel_pipelines.1} parent=0 // pred_check_branch
    %3168 = sbr.rel (0) target = $region41
  $region40: #{fused_parallel_pipelines.1} parent=0 // pred_region
    _
  $region41: #{fused_parallel_pipelines.1} parent=0 // pred_fallthru
    _
  // Predicated region
  $region42: #{fused_parallel_pipelines.1} parent=0 // pred_check
    _
  $region43: #{fused_parallel_pipelines.1} parent=0 // pred_check_branch
    %3170 = sbr.rel (0) target = $region45
  $region44: #{fused_parallel_pipelines.1} parent=0 // pred_region
    _
  $region45: #{fused_parallel_pipelines.1} parent=0 // pred_fallthru
    _
  // Predicated region
  $region46: #{fused_parallel_pipelines.1} parent=0 // pred_check
    _
  $region47: #{fused_parallel_pipelines.1} parent=0 // pred_check_branch
    %3172 = sbr.rel (0) target = $region49
  $region48: #{fused_parallel_pipelines.1} parent=0 // pred_region
    _
  $region49: #{fused_parallel_pipelines.1} parent=0 // pred_fallthru
    _

</llo_original>
